<compile_context>
chip_gen: v5e
topology: v5e:2x2
jax: 0.10.0
libtpu: 0.0.40
codegen_flags: <defaults>
</compile_context>

<pallas_src>
import functools

import jax
import jax.numpy as jnp
from jax import lax
from jax.experimental import pallas as pl
from jax.experimental.pallas import tpu as pltpu

HIDDEN = 256
GATE_SCRATCH_BYTES = 8 << 20      # budget for the f32 gate-block scratch
MAX_BATCH_BLOCK = 128


def _round_up(a, m):
    return ((a + m - 1) // m) * m


def _sigmoid(z):
    # One EUP push (tanh) instead of exp + reciprocal.
    return 0.5 * jnp.tanh(0.5 * z) + 0.5


def lstm_chunk_kernel(x_ref, wih_ref, whh_ref, bias_ref, h_out_ref,
                      g_scr, h_scr, c_scr, *,
                      chunk, batch_blk, hidden, tail, unroll):
    """Grid = (batch_blocks, time_chunks); one grid step = `chunk` timesteps.

    x_ref     : (Tc*Bb, D)   bf16 raw input chunk (time-major, batch-minor)
    wih_ref   : (D, 4H)      bf16 W_ih^T (VMEM resident)
    whh_ref   : (H, 4H)      bf16 W_hh^T (VMEM resident)
    bias_ref  : (1, 4H)      f32  b_ih + b_hh
    h_out_ref : (Bb, H)      f32  h at the last real timestep (written once)
    g_scr     : (Tc*Bb, 4H)  f32  gate-block scratch
    h_scr/c_scr : (Bb, H)    f32  carried LSTM state (persist across chunks)
    """
    H = hidden
    Bb = batch_blk
    t_idx = pl.program_id(1)
    n_t = pl.num_programs(1)

    @pl.when(t_idx == 0)
    def _():
        h_scr[...] = jnp.zeros_like(h_scr)
        c_scr[...] = jnp.zeros_like(c_scr)

    # ---- fused input projection: one (Tc*Bb, D) x (D, 4H) MXU matmul ------
    g_scr[...] = jnp.dot(x_ref[...], wih_ref[...],
                         preferred_element_type=jnp.float32) + bias_ref[...]

    def step(i, carry):
        h, c = carry
        row = pl.multiple_of(i * Bb, Bb)
        # Recurrent projection: bf16 MXU inputs, f32 accumulate.
        gates = g_scr[pl.ds(row, Bb), :] + jnp.dot(
            h.astype(jnp.bfloat16), whh_ref[...],
            preferred_element_type=jnp.float32)
        # PyTorch gate order: i, f, g, o
        i_g = _sigmoid(gates[:, 0 * H:1 * H])
        f_g = _sigmoid(gates[:, 1 * H:2 * H])
        g_g = jnp.tanh(gates[:, 2 * H:3 * H])
        o_g = _sigmoid(gates[:, 3 * H:4 * H])
        c = f_g * c + i_g * g_g
        h = o_g * jnp.tanh(c)
        return h, c

    def run(n_steps):
        h, c = lax.fori_loop(0, n_steps, step, (h_scr[...], c_scr[...]),
                             unroll=min(unroll, n_steps))
        h_scr[...] = h
        c_scr[...] = c

    if tail == chunk:
        # No time padding: single unmasked code path.
        run(chunk)

        @pl.when(t_idx == n_t - 1)
        def _():
            h_out_ref[...] = h_scr[...]          # lane-dense (Bb, 256) store
    else:
        # Padded time axis: the last chunk simply runs fewer (real) steps;
        # padded timesteps are never executed (no per-step mask anywhere).
        @pl.when(t_idx < n_t - 1)
        def _():
            run(chunk)

        @pl.when(t_idx == n_t - 1)
        def _():
            run(tail)
            h_out_ref[...] = h_scr[...]


def lstm_forward(x, params, *, time_chunk=64, unroll=8):
    """x: (B, T, D) float32, batch_first (same as the PyTorch module)."""
    B, T, D = x.shape
    H = HIDDEN

    # ---- batch blocking / padding (sublane tile = 8) -----------------------
    Bb = min(_round_up(B, 8), MAX_BATCH_BLOCK)
    B_pad = _round_up(B, Bb)
    nb = B_pad // Bb

    # ---- time chunking sized against VMEM (f32 gate scratch budget) --------
    tc_cap = max(1, GATE_SCRATCH_BYTES // (Bb * 4 * H * 4))
    Tc = max(1, min(time_chunk, T, tc_cap))
    n_chunks = pl.cdiv(T, Tc)
    T_pad = n_chunks * Tc
    tail = T - (n_chunks - 1) * Tc                  # real steps in last chunk

    # ---- re-lay-out x once (small, D-wide tensor): ------------------------
    # (B, T, D) -> pad -> (nb, Bb, T_pad, D) -> (nb, T_pad, Bb, D)
    #           -> (nb, T_pad*Bb, D)  so each kernel block is a rectangle.
    xb = x.astype(jnp.bfloat16)
    if B_pad != B:
        xb = jnp.pad(xb, ((0, B_pad - B), (0, 0), (0, 0)))
    if T_pad != T:
        xb = jnp.pad(xb, ((0, 0), (0, T_pad - T), (0, 0)))
    xb = (xb.reshape(nb, Bb, T_pad, D)
            .transpose(0, 2, 1, 3)
            .reshape(nb, T_pad * Bb, D))

    wih_t = params["weight_ih"].T.astype(jnp.bfloat16)            # (D, 4H)
    whh_t = params["weight_hh"].T.astype(jnp.bfloat16)            # (H, 4H)
    bias = (params["bias_ih"] + params["bias_hh"]).astype(jnp.float32)
    bias = bias.reshape(1, 4 * H)

    kernel = functools.partial(lstm_chunk_kernel,
                               chunk=Tc, batch_blk=Bb, hidden=H,
                               tail=tail, unroll=unroll)

    h_last = pl.pallas_call(
        kernel,
        out_shape=jax.ShapeDtypeStruct((B_pad, H), jnp.float32),
        grid_spec=pltpu.PrefetchScalarGridSpec(
            num_scalar_prefetch=0,
            grid=(nb, n_chunks),
            in_specs=[
                pl.BlockSpec((None, Tc * Bb, D), lambda b, c: (b, c, 0)),  # x
                pl.BlockSpec((D, 4 * H), lambda b, c: (0, 0)),      # W_ih^T
                pl.BlockSpec((H, 4 * H), lambda b, c: (0, 0)),      # W_hh^T
                pl.BlockSpec((1, 4 * H), lambda b, c: (0, 0)),      # bias
            ],
            out_specs=pl.BlockSpec((Bb, H), lambda b, c: (b, 0)),   # h_last
            scratch_shapes=[
                pltpu.VMEM((Tc * Bb, 4 * H), jnp.float32),          # gates
                pltpu.VMEM((Bb, H), jnp.float32),                   # h state
                pltpu.VMEM((Bb, H), jnp.float32),                   # c state
            ],
        ),
        compiler_params=pltpu.CompilerParams(
            dimension_semantics=("parallel", "arbitrary")),
    )(xb, wih_t, whh_t, bias)

    # ---- final Linear(256 -> 1) in plain JAX (lane-dense kernel output) ----
    h_last = h_last[:B]
    return h_last @ params["fc_weight"].T + params["fc_bias"]


def lstm_ref(x, params):
    """Pure-JAX f32 reference mirroring torch.nn.LSTM + Linear semantics."""
    B, T, D = x.shape
    H = HIDDEN
    wih, whh = params["weight_ih"], params["weight_hh"]
    b = params["bias_ih"] + params["bias_hh"]

    def step(carry, x_t):
        h, c = carry
        g = x_t @ wih.T + h @ whh.T + b
        i = jax.nn.sigmoid(g[:, 0 * H:1 * H])
        f = jax.nn.sigmoid(g[:, 1 * H:2 * H])
        gg = jnp.tanh(g[:, 2 * H:3 * H])
        o = jax.nn.sigmoid(g[:, 3 * H:4 * H])
        c = f * c + i * gg
        h = o * jnp.tanh(c)
        return (h, c), None

    h0 = jnp.zeros((B, H), jnp.float32)
    c0 = jnp.zeros((B, H), jnp.float32)
    (h_last, _), _ = jax.lax.scan(step, (h0, c0), jnp.transpose(x, (1, 0, 2)))
    return h_last @ params["fc_weight"].T + params["fc_bias"]


def init_params(key, input_dim):
    """Deterministic init matching PyTorch's shapes (uniform +-1/sqrt(H))."""
    H = HIDDEN
    k = 1.0 / jnp.sqrt(jnp.float32(H))
    ks = jax.random.split(key, 6)
    u = lambda kk, shape: jax.random.uniform(kk, shape, jnp.float32, -k, k)
    return {
        "weight_ih": u(ks[0], (4 * H, input_dim)),
        "weight_hh": u(ks[1], (4 * H, H)),
        "bias_ih":   u(ks[2], (4 * H,)),
        "bias_hh":   u(ks[3], (4 * H,)),
        "fc_weight": u(ks[4], (1, H)),
        "fc_bias":   u(ks[5], (1,)),
    }


if __name__ == "__main__":
    B, T, D = 2, 8, 32
    key = jax.random.PRNGKey(0)
    kx, kp = jax.random.split(key)
    x = jax.random.normal(kx, (B, T, D), jnp.float32)
    params = init_params(kp, D)

    out = jax.block_until_ready(lstm_forward(x, params))
    ref = jax.block_until_ready(lstm_ref(x, params))

    assert out.shape == (B, 1), out.shape
    # bf16 MXU inputs (f32 accumulate) vs. f32 reference -> small drift.
    assert jnp.allclose(out, ref, atol=2e-2, rtol=2e-2), (out, ref)
    print("KERNEL_OK")
</pallas_src>

<mosaic_0001>
module attributes {stable_mosaic.version = 11 : i64} {
  func.func @lstm_chunk_kernel(%arg0: i32, %arg1: i32, %arg2: memref<1x64x32xbf16, #tpu.memory_space<vmem>>, %arg3: memref<32x1024xbf16, #tpu.memory_space<vmem>>, %arg4: memref<256x1024xbf16, #tpu.memory_space<vmem>>, %arg5: memref<1x1024xf32, #tpu.memory_space<vmem>>, %arg6: memref<8x256xf32, #tpu.memory_space<vmem>>, %arg7: memref<64x1024xf32, #tpu.memory_space<vmem>>, %arg8: memref<8x256xf32, #tpu.memory_space<vmem>>, %arg9: memref<8x256xf32, #tpu.memory_space<vmem>>) attributes {dimension_semantics = [#tpu.dimension_semantics<parallel>, #tpu.dimension_semantics<arbitrary>], iteration_bounds = array<i64: 1, 1>, scalar_prefetch = 0 : i64, scratch_operands = 3 : i64, tpu.core_type = #tpu.core_type<tc>, window_params = [{transform_indices = @transform_0, window_bounds = array<i64: 1, 64, 32>}, {pipeline_mode = #tpu.pipeline_mode<synchronous>, transform_indices = @transform_1, window_bounds = array<i64: 32, 1024>}, {pipeline_mode = #tpu.pipeline_mode<synchronous>, transform_indices = @transform_2, window_bounds = array<i64: 256, 1024>}, {pipeline_mode = #tpu.pipeline_mode<synchronous>, transform_indices = @transform_3, window_bounds = array<i64: 1, 1024>}, {transform_indices = @transform_4, window_bounds = array<i64: 8, 256>}]} {
    %c0_i32 = arith.constant 0 : i32
    %0 = arith.cmpi eq, %arg1, %c0_i32 : i32
    %1 = arith.extui %0 : i1 to i32
    %c0_i32_0 = arith.constant 0 : i32
    %2 = arith.cmpi ne, %1, %c0_i32_0 : i32
    scf.if %2 {
      %cst_132 = arith.constant 0.000000e+00 : f32
      %330 = vector.broadcast %cst_132 : f32 to vector<8x256xf32>
      %c0_133 = arith.constant 0 : index
      %c0_134 = arith.constant 0 : index
      %331 = vector.load %arg8[%c0_133, %c0_134] : memref<8x256xf32, #tpu.memory_space<vmem>>, vector<8x256xf32>
      tpu.vector_store %arg8[%c0_133, %c0_134], %330 {strides = array<i32>} : memref<8x256xf32, #tpu.memory_space<vmem>>, vector<8x256xf32>,
      %cst_135 = arith.constant 0.000000e+00 : f32
      %332 = vector.broadcast %cst_135 : f32 to vector<8x256xf32>
      %c0_136 = arith.constant 0 : index
      %c0_137 = arith.constant 0 : index
      %333 = vector.load %arg9[%c0_136, %c0_137] : memref<8x256xf32, #tpu.memory_space<vmem>>, vector<8x256xf32>
      tpu.vector_store %arg9[%c0_136, %c0_137], %332 {strides = array<i32>} : memref<8x256xf32, #tpu.memory_space<vmem>>, vector<8x256xf32>,
    } else {
    }
    %c0 = arith.constant 0 : index
    %c0_1 = arith.constant 0 : index
    %c0_2 = arith.constant 0 : index
    %3 = vector.load %arg2[%c0, %c0_1, %c0_2] : memref<1x64x32xbf16, #tpu.memory_space<vmem>>, vector<1x64x32xbf16>
    %4 = vector.shape_cast %3 : vector<1x64x32xbf16> to vector<64x32xbf16>
    %c0_3 = arith.constant 0 : index
    %c0_4 = arith.constant 0 : index
    %5 = vector.load %arg3[%c0_3, %c0_4] : memref<32x1024xbf16, #tpu.memory_space<vmem>>, vector<32x1024xbf16>
    %cst = arith.constant dense<0.000000e+00> : vector<64x1024xf32>
    %6 = tpu.matmul %4, %5, %cst {dimension_numbers = #tpu.dot_dimension_numbers<[1], [0], [0], [1], [0, 0, 1, 1], [], []>} : vector<64x32xbf16>, vector<32x1024xbf16>, vector<64x1024xf32> -> vector<64x1024xf32>
    %c0_5 = arith.constant 0 : index
    %c0_6 = arith.constant 0 : index
    %7 = vector.load %arg5[%c0_5, %c0_6] : memref<1x1024xf32, #tpu.memory_space<vmem>>, vector<1x1024xf32>
    %8 = vector.broadcast %7 : vector<1x1024xf32> to vector<64x1024xf32>
    %9 = arith.addf %6, %8 : vector<64x1024xf32>
    %c0_7 = arith.constant 0 : index
    %c0_8 = arith.constant 0 : index
    %10 = vector.load %arg7[%c0_7, %c0_8] : memref<64x1024xf32, #tpu.memory_space<vmem>>, vector<64x1024xf32>
    tpu.vector_store %arg7[%c0_7, %c0_8], %9 {strides = array<i32>} : memref<64x1024xf32, #tpu.memory_space<vmem>>, vector<64x1024xf32>,
    %c0_9 = arith.constant 0 : index
    %c0_10 = arith.constant 0 : index
    %11 = vector.load %arg8[%c0_9, %c0_10] : memref<8x256xf32, #tpu.memory_space<vmem>>, vector<8x256xf32>
    %c0_11 = arith.constant 0 : index
    %c0_12 = arith.constant 0 : index
    %12 = vector.load %arg9[%c0_11, %c0_12] : memref<8x256xf32, #tpu.memory_space<vmem>>, vector<8x256xf32>
    %c0_i32_13 = arith.constant 0 : i32
    %c8_i32 = arith.constant 8 : i32
    %13 = arith.muli %c0_i32_13, %c8_i32 : i32
    %14 = tpu.assume_multiple %13, 8 : i32
    %15 = arith.index_cast %14 : i32 to index
    %c0_14 = arith.constant 0 : index
    %16 = vector.load %arg7[%15, %c0_14] : memref<64x1024xf32, #tpu.memory_space<vmem>>, vector<8x1024xf32>
    %17 = arith.truncf %11 : vector<8x256xf32> to vector<8x256xbf16>
    %c0_15 = arith.constant 0 : index
    %c0_16 = arith.constant 0 : index
    %18 = vector.load %arg4[%c0_15, %c0_16] : memref<256x1024xbf16, #tpu.memory_space<vmem>>, vector<256x1024xbf16>
    %cst_17 = arith.constant dense<0.000000e+00> : vector<8x1024xf32>
    %19 = tpu.matmul %17, %18, %cst_17 {dimension_numbers = #tpu.dot_dimension_numbers<[1], [0], [0], [1], [0, 0, 1, 1], [], []>} : vector<8x256xbf16>, vector<256x1024xbf16>, vector<8x1024xf32> -> vector<8x1024xf32>
    %20 = arith.addf %16, %19 : vector<8x1024xf32>
    %21 = vector.extract_strided_slice %20 {offsets = [0, 0], sizes = [8, 256], strides = [1, 1]} : vector<8x1024xf32> to vector<8x256xf32>
    %cst_18 = arith.constant 5.000000e-01 : f32
    %22 = vector.broadcast %cst_18 : f32 to vector<8x256xf32>
    %23 = arith.mulf %22, %21 : vector<8x256xf32>
    %24 = math.tanh %23 : vector<8x256xf32>
    %cst_19 = arith.constant 5.000000e-01 : f32
    %25 = vector.broadcast %cst_19 : f32 to vector<8x256xf32>
    %26 = arith.mulf %25, %24 : vector<8x256xf32>
    %cst_20 = arith.constant 5.000000e-01 : f32
    %27 = vector.broadcast %cst_20 : f32 to vector<8x256xf32>
    %28 = arith.addf %26, %27 : vector<8x256xf32>
    %29 = vector.extract_strided_slice %20 {offsets = [0, 256], sizes = [8, 256], strides = [1, 1]} : vector<8x1024xf32> to vector<8x256xf32>
    %cst_21 = arith.constant 5.000000e-01 : f32
    %30 = vector.broadcast %cst_21 : f32 to vector<8x256xf32>
    %31 = arith.mulf %30, %29 : vector<8x256xf32>
    %32 = math.tanh %31 : vector<8x256xf32>
    %cst_22 = arith.constant 5.000000e-01 : f32
    %33 = vector.broadcast %cst_22 : f32 to vector<8x256xf32>
    %34 = arith.mulf %33, %32 : vector<8x256xf32>
    %cst_23 = arith.constant 5.000000e-01 : f32
    %35 = vector.broadcast %cst_23 : f32 to vector<8x256xf32>
    %36 = arith.addf %34, %35 : vector<8x256xf32>
    %37 = vector.extract_strided_slice %20 {offsets = [0, 512], sizes = [8, 256], strides = [1, 1]} : vector<8x1024xf32> to vector<8x256xf32>
    %38 = math.tanh %37 : vector<8x256xf32>
    %39 = vector.extract_strided_slice %20 {offsets = [0, 768], sizes = [8, 256], strides = [1, 1]} : vector<8x1024xf32> to vector<8x256xf32>
    %cst_24 = arith.constant 5.000000e-01 : f32
    %40 = vector.broadcast %cst_24 : f32 to vector<8x256xf32>
    %41 = arith.mulf %40, %39 : vector<8x256xf32>
    %42 = math.tanh %41 : vector<8x256xf32>
    %cst_25 = arith.constant 5.000000e-01 : f32
    %43 = vector.broadcast %cst_25 : f32 to vector<8x256xf32>
    %44 = arith.mulf %43, %42 : vector<8x256xf32>
    %cst_26 = arith.constant 5.000000e-01 : f32
    %45 = vector.broadcast %cst_26 : f32 to vector<8x256xf32>
    %46 = arith.addf %44, %45 : vector<8x256xf32>
    %47 = arith.mulf %36, %12 : vector<8x256xf32>
    %48 = arith.mulf %28, %38 : vector<8x256xf32>
    %49 = arith.addf %47, %48 : vector<8x256xf32>
    %50 = math.tanh %49 : vector<8x256xf32>
    %51 = arith.mulf %46, %50 : vector<8x256xf32>
    %c1_i32 = arith.constant 1 : i32
    %c8_i32_27 = arith.constant 8 : i32
    %52 = arith.muli %c1_i32, %c8_i32_27 : i32
    %53 = tpu.assume_multiple %52, 8 : i32
    %54 = arith.index_cast %53 : i32 to index
    %c0_28 = arith.constant 0 : index
    %55 = vector.load %arg7[%54, %c0_28] : memref<64x1024xf32, #tpu.memory_space<vmem>>, vector<8x1024xf32>
    %56 = arith.truncf %51 : vector<8x256xf32> to vector<8x256xbf16>
    %c0_29 = arith.constant 0 : index
    %c0_30 = arith.constant 0 : index
    %57 = vector.load %arg4[%c0_29, %c0_30] : memref<256x1024xbf16, #tpu.memory_space<vmem>>, vector<256x1024xbf16>
    %cst_31 = arith.constant dense<0.000000e+00> : vector<8x1024xf32>
    %58 = tpu.matmul %56, %57, %cst_31 {dimension_numbers = #tpu.dot_dimension_numbers<[1], [0], [0], [1], [0, 0, 1, 1], [], []>} : vector<8x256xbf16>, vector<256x1024xbf16>, vector<8x1024xf32> -> vector<8x1024xf32>
    %59 = arith.addf %55, %58 : vector<8x1024xf32>
    %60 = vector.extract_strided_slice %59 {offsets = [0, 0], sizes = [8, 256], strides = [1, 1]} : vector<8x1024xf32> to vector<8x256xf32>
    %cst_32 = arith.constant 5.000000e-01 : f32
    %61 = vector.broadcast %cst_32 : f32 to vector<8x256xf32>
    %62 = arith.mulf %61, %60 : vector<8x256xf32>
    %63 = math.tanh %62 : vector<8x256xf32>
    %cst_33 = arith.constant 5.000000e-01 : f32
    %64 = vector.broadcast %cst_33 : f32 to vector<8x256xf32>
    %65 = arith.mulf %64, %63 : vector<8x256xf32>
    %cst_34 = arith.constant 5.000000e-01 : f32
    %66 = vector.broadcast %cst_34 : f32 to vector<8x256xf32>
    %67 = arith.addf %65, %66 : vector<8x256xf32>
    %68 = vector.extract_strided_slice %59 {offsets = [0, 256], sizes = [8, 256], strides = [1, 1]} : vector<8x1024xf32> to vector<8x256xf32>
    %cst_35 = arith.constant 5.000000e-01 : f32
    %69 = vector.broadcast %cst_35 : f32 to vector<8x256xf32>
    %70 = arith.mulf %69, %68 : vector<8x256xf32>
    %71 = math.tanh %70 : vector<8x256xf32>
    %cst_36 = arith.constant 5.000000e-01 : f32
    %72 = vector.broadcast %cst_36 : f32 to vector<8x256xf32>
    %73 = arith.mulf %72, %71 : vector<8x256xf32>
    %cst_37 = arith.constant 5.000000e-01 : f32
    %74 = vector.broadcast %cst_37 : f32 to vector<8x256xf32>
    %75 = arith.addf %73, %74 : vector<8x256xf32>
    %76 = vector.extract_strided_slice %59 {offsets = [0, 512], sizes = [8, 256], strides = [1, 1]} : vector<8x1024xf32> to vector<8x256xf32>
    %77 = math.tanh %76 : vector<8x256xf32>
    %78 = vector.extract_strided_slice %59 {offsets = [0, 768], sizes = [8, 256], strides = [1, 1]} : vector<8x1024xf32> to vector<8x256xf32>
    %cst_38 = arith.constant 5.000000e-01 : f32
    %79 = vector.broadcast %cst_38 : f32 to vector<8x256xf32>
    %80 = arith.mulf %79, %78 : vector<8x256xf32>
    %81 = math.tanh %80 : vector<8x256xf32>
    %cst_39 = arith.constant 5.000000e-01 : f32
    %82 = vector.broadcast %cst_39 : f32 to vector<8x256xf32>
    %83 = arith.mulf %82, %81 : vector<8x256xf32>
    %cst_40 = arith.constant 5.000000e-01 : f32
    %84 = vector.broadcast %cst_40 : f32 to vector<8x256xf32>
    %85 = arith.addf %83, %84 : vector<8x256xf32>
    %86 = arith.mulf %75, %49 : vector<8x256xf32>
    %87 = arith.mulf %67, %77 : vector<8x256xf32>
    %88 = arith.addf %86, %87 : vector<8x256xf32>
    %89 = math.tanh %88 : vector<8x256xf32>
    %90 = arith.mulf %85, %89 : vector<8x256xf32>
    %c2_i32 = arith.constant 2 : i32
    %c8_i32_41 = arith.constant 8 : i32
    %91 = arith.muli %c2_i32, %c8_i32_41 : i32
    %92 = tpu.assume_multiple %91, 8 : i32
    %93 = arith.index_cast %92 : i32 to index
    %c0_42 = arith.constant 0 : index
    %94 = vector.load %arg7[%93, %c0_42] : memref<64x1024xf32, #tpu.memory_space<vmem>>, vector<8x1024xf32>
    %95 = arith.truncf %90 : vector<8x256xf32> to vector<8x256xbf16>
    %c0_43 = arith.constant 0 : index
    %c0_44 = arith.constant 0 : index
    %96 = vector.load %arg4[%c0_43, %c0_44] : memref<256x1024xbf16, #tpu.memory_space<vmem>>, vector<256x1024xbf16>
    %cst_45 = arith.constant dense<0.000000e+00> : vector<8x1024xf32>
    %97 = tpu.matmul %95, %96, %cst_45 {dimension_numbers = #tpu.dot_dimension_numbers<[1], [0], [0], [1], [0, 0, 1, 1], [], []>} : vector<8x256xbf16>, vector<256x1024xbf16>, vector<8x1024xf32> -> vector<8x1024xf32>
    %98 = arith.addf %94, %97 : vector<8x1024xf32>
    %99 = vector.extract_strided_slice %98 {offsets = [0, 0], sizes = [8, 256], strides = [1, 1]} : vector<8x1024xf32> to vector<8x256xf32>
    %cst_46 = arith.constant 5.000000e-01 : f32
    %100 = vector.broadcast %cst_46 : f32 to vector<8x256xf32>
    %101 = arith.mulf %100, %99 : vector<8x256xf32>
    %102 = math.tanh %101 : vector<8x256xf32>
    %cst_47 = arith.constant 5.000000e-01 : f32
    %103 = vector.broadcast %cst_47 : f32 to vector<8x256xf32>
    %104 = arith.mulf %103, %102 : vector<8x256xf32>
    %cst_48 = arith.constant 5.000000e-01 : f32
    %105 = vector.broadcast %cst_48 : f32 to vector<8x256xf32>
    %106 = arith.addf %104, %105 : vector<8x256xf32>
    %107 = vector.extract_strided_slice %98 {offsets = [0, 256], sizes = [8, 256], strides = [1, 1]} : vector<8x1024xf32> to vector<8x256xf32>
    %cst_49 = arith.constant 5.000000e-01 : f32
    %108 = vector.broadcast %cst_49 : f32 to vector<8x256xf32>
    %109 = arith.mulf %108, %107 : vector<8x256xf32>
    %110 = math.tanh %109 : vector<8x256xf32>
    %cst_50 = arith.constant 5.000000e-01 : f32
    %111 = vector.broadcast %cst_50 : f32 to vector<8x256xf32>
    %112 = arith.mulf %111, %110 : vector<8x256xf32>
    %cst_51 = arith.constant 5.000000e-01 : f32
    %113 = vector.broadcast %cst_51 : f32 to vector<8x256xf32>
    %114 = arith.addf %112, %113 : vector<8x256xf32>
    %115 = vector.extract_strided_slice %98 {offsets = [0, 512], sizes = [8, 256], strides = [1, 1]} : vector<8x1024xf32> to vector<8x256xf32>
    %116 = math.tanh %115 : vector<8x256xf32>
    %117 = vector.extract_strided_slice %98 {offsets = [0, 768], sizes = [8, 256], strides = [1, 1]} : vector<8x1024xf32> to vector<8x256xf32>
    %cst_52 = arith.constant 5.000000e-01 : f32
    %118 = vector.broadcast %cst_52 : f32 to vector<8x256xf32>
    %119 = arith.mulf %118, %117 : vector<8x256xf32>
    %120 = math.tanh %119 : vector<8x256xf32>
    %cst_53 = arith.constant 5.000000e-01 : f32
    %121 = vector.broadcast %cst_53 : f32 to vector<8x256xf32>
    %122 = arith.mulf %121, %120 : vector<8x256xf32>
    %cst_54 = arith.constant 5.000000e-01 : f32
    %123 = vector.broadcast %cst_54 : f32 to vector<8x256xf32>
    %124 = arith.addf %122, %123 : vector<8x256xf32>
    %125 = arith.mulf %114, %88 : vector<8x256xf32>
    %126 = arith.mulf %106, %116 : vector<8x256xf32>
    %127 = arith.addf %125, %126 : vector<8x256xf32>
    %128 = math.tanh %127 : vector<8x256xf32>
    %129 = arith.mulf %124, %128 : vector<8x256xf32>
    %c3_i32 = arith.constant 3 : i32
    %c8_i32_55 = arith.constant 8 : i32
    %130 = arith.muli %c3_i32, %c8_i32_55 : i32
    %131 = tpu.assume_multiple %130, 8 : i32
    %132 = arith.index_cast %131 : i32 to index
    %c0_56 = arith.constant 0 : index
    %133 = vector.load %arg7[%132, %c0_56] : memref<64x1024xf32, #tpu.memory_space<vmem>>, vector<8x1024xf32>
    %134 = arith.truncf %129 : vector<8x256xf32> to vector<8x256xbf16>
    %c0_57 = arith.constant 0 : index
    %c0_58 = arith.constant 0 : index
    %135 = vector.load %arg4[%c0_57, %c0_58] : memref<256x1024xbf16, #tpu.memory_space<vmem>>, vector<256x1024xbf16>
    %cst_59 = arith.constant dense<0.000000e+00> : vector<8x1024xf32>
    %136 = tpu.matmul %134, %135, %cst_59 {dimension_numbers = #tpu.dot_dimension_numbers<[1], [0], [0], [1], [0, 0, 1, 1], [], []>} : vector<8x256xbf16>, vector<256x1024xbf16>, vector<8x1024xf32> -> vector<8x1024xf32>
    %137 = arith.addf %133, %136 : vector<8x1024xf32>
    %138 = vector.extract_strided_slice %137 {offsets = [0, 0], sizes = [8, 256], strides = [1, 1]} : vector<8x1024xf32> to vector<8x256xf32>
    %cst_60 = arith.constant 5.000000e-01 : f32
    %139 = vector.broadcast %cst_60 : f32 to vector<8x256xf32>
    %140 = arith.mulf %139, %138 : vector<8x256xf32>
    %141 = math.tanh %140 : vector<8x256xf32>
    %cst_61 = arith.constant 5.000000e-01 : f32
    %142 = vector.broadcast %cst_61 : f32 to vector<8x256xf32>
    %143 = arith.mulf %142, %141 : vector<8x256xf32>
    %cst_62 = arith.constant 5.000000e-01 : f32
    %144 = vector.broadcast %cst_62 : f32 to vector<8x256xf32>
    %145 = arith.addf %143, %144 : vector<8x256xf32>
    %146 = vector.extract_strided_slice %137 {offsets = [0, 256], sizes = [8, 256], strides = [1, 1]} : vector<8x1024xf32> to vector<8x256xf32>
    %cst_63 = arith.constant 5.000000e-01 : f32
    %147 = vector.broadcast %cst_63 : f32 to vector<8x256xf32>
    %148 = arith.mulf %147, %146 : vector<8x256xf32>
    %149 = math.tanh %148 : vector<8x256xf32>
    %cst_64 = arith.constant 5.000000e-01 : f32
    %150 = vector.broadcast %cst_64 : f32 to vector<8x256xf32>
    %151 = arith.mulf %150, %149 : vector<8x256xf32>
    %cst_65 = arith.constant 5.000000e-01 : f32
    %152 = vector.broadcast %cst_65 : f32 to vector<8x256xf32>
    %153 = arith.addf %151, %152 : vector<8x256xf32>
    %154 = vector.extract_strided_slice %137 {offsets = [0, 512], sizes = [8, 256], strides = [1, 1]} : vector<8x1024xf32> to vector<8x256xf32>
    %155 = math.tanh %154 : vector<8x256xf32>
    %156 = vector.extract_strided_slice %137 {offsets = [0, 768], sizes = [8, 256], strides = [1, 1]} : vector<8x1024xf32> to vector<8x256xf32>
    %cst_66 = arith.constant 5.000000e-01 : f32
    %157 = vector.broadcast %cst_66 : f32 to vector<8x256xf32>
    %158 = arith.mulf %157, %156 : vector<8x256xf32>
    %159 = math.tanh %158 : vector<8x256xf32>
    %cst_67 = arith.constant 5.000000e-01 : f32
    %160 = vector.broadcast %cst_67 : f32 to vector<8x256xf32>
    %161 = arith.mulf %160, %159 : vector<8x256xf32>
    %cst_68 = arith.constant 5.000000e-01 : f32
    %162 = vector.broadcast %cst_68 : f32 to vector<8x256xf32>
    %163 = arith.addf %161, %162 : vector<8x256xf32>
    %164 = arith.mulf %153, %127 : vector<8x256xf32>
    %165 = arith.mulf %145, %155 : vector<8x256xf32>
    %166 = arith.addf %164, %165 : vector<8x256xf32>
    %167 = math.tanh %166 : vector<8x256xf32>
    %168 = arith.mulf %163, %167 : vector<8x256xf32>
    %c4_i32 = arith.constant 4 : i32
    %c8_i32_69 = arith.constant 8 : i32
    %169 = arith.muli %c4_i32, %c8_i32_69 : i32
    %170 = tpu.assume_multiple %169, 8 : i32
    %171 = arith.index_cast %170 : i32 to index
    %c0_70 = arith.constant 0 : index
    %172 = vector.load %arg7[%171, %c0_70] : memref<64x1024xf32, #tpu.memory_space<vmem>>, vector<8x1024xf32>
    %173 = arith.truncf %168 : vector<8x256xf32> to vector<8x256xbf16>
    %c0_71 = arith.constant 0 : index
    %c0_72 = arith.constant 0 : index
    %174 = vector.load %arg4[%c0_71, %c0_72] : memref<256x1024xbf16, #tpu.memory_space<vmem>>, vector<256x1024xbf16>
    %cst_73 = arith.constant dense<0.000000e+00> : vector<8x1024xf32>
    %175 = tpu.matmul %173, %174, %cst_73 {dimension_numbers = #tpu.dot_dimension_numbers<[1], [0], [0], [1], [0, 0, 1, 1], [], []>} : vector<8x256xbf16>, vector<256x1024xbf16>, vector<8x1024xf32> -> vector<8x1024xf32>
    %176 = arith.addf %172, %175 : vector<8x1024xf32>
    %177 = vector.extract_strided_slice %176 {offsets = [0, 0], sizes = [8, 256], strides = [1, 1]} : vector<8x1024xf32> to vector<8x256xf32>
    %cst_74 = arith.constant 5.000000e-01 : f32
    %178 = vector.broadcast %cst_74 : f32 to vector<8x256xf32>
    %179 = arith.mulf %178, %177 : vector<8x256xf32>
    %180 = math.tanh %179 : vector<8x256xf32>
    %cst_75 = arith.constant 5.000000e-01 : f32
    %181 = vector.broadcast %cst_75 : f32 to vector<8x256xf32>
    %182 = arith.mulf %181, %180 : vector<8x256xf32>
    %cst_76 = arith.constant 5.000000e-01 : f32
    %183 = vector.broadcast %cst_76 : f32 to vector<8x256xf32>
    %184 = arith.addf %182, %183 : vector<8x256xf32>
    %185 = vector.extract_strided_slice %176 {offsets = [0, 256], sizes = [8, 256], strides = [1, 1]} : vector<8x1024xf32> to vector<8x256xf32>
    %cst_77 = arith.constant 5.000000e-01 : f32
    %186 = vector.broadcast %cst_77 : f32 to vector<8x256xf32>
    %187 = arith.mulf %186, %185 : vector<8x256xf32>
    %188 = math.tanh %187 : vector<8x256xf32>
    %cst_78 = arith.constant 5.000000e-01 : f32
    %189 = vector.broadcast %cst_78 : f32 to vector<8x256xf32>
    %190 = arith.mulf %189, %188 : vector<8x256xf32>
    %cst_79 = arith.constant 5.000000e-01 : f32
    %191 = vector.broadcast %cst_79 : f32 to vector<8x256xf32>
    %192 = arith.addf %190, %191 : vector<8x256xf32>
    %193 = vector.extract_strided_slice %176 {offsets = [0, 512], sizes = [8, 256], strides = [1, 1]} : vector<8x1024xf32> to vector<8x256xf32>
    %194 = math.tanh %193 : vector<8x256xf32>
    %195 = vector.extract_strided_slice %176 {offsets = [0, 768], sizes = [8, 256], strides = [1, 1]} : vector<8x1024xf32> to vector<8x256xf32>
    %cst_80 = arith.constant 5.000000e-01 : f32
    %196 = vector.broadcast %cst_80 : f32 to vector<8x256xf32>
    %197 = arith.mulf %196, %195 : vector<8x256xf32>
    %198 = math.tanh %197 : vector<8x256xf32>
    %cst_81 = arith.constant 5.000000e-01 : f32
    %199 = vector.broadcast %cst_81 : f32 to vector<8x256xf32>
    %200 = arith.mulf %199, %198 : vector<8x256xf32>
    %cst_82 = arith.constant 5.000000e-01 : f32
    %201 = vector.broadcast %cst_82 : f32 to vector<8x256xf32>
    %202 = arith.addf %200, %201 : vector<8x256xf32>
    %203 = arith.mulf %192, %166 : vector<8x256xf32>
    %204 = arith.mulf %184, %194 : vector<8x256xf32>
    %205 = arith.addf %203, %204 : vector<8x256xf32>
    %206 = math.tanh %205 : vector<8x256xf32>
    %207 = arith.mulf %202, %206 : vector<8x256xf32>
    %c5_i32 = arith.constant 5 : i32
    %c8_i32_83 = arith.constant 8 : i32
    %208 = arith.muli %c5_i32, %c8_i32_83 : i32
    %209 = tpu.assume_multiple %208, 8 : i32
    %210 = arith.index_cast %209 : i32 to index
    %c0_84 = arith.constant 0 : index
    %211 = vector.load %arg7[%210, %c0_84] : memref<64x1024xf32, #tpu.memory_space<vmem>>, vector<8x1024xf32>
    %212 = arith.truncf %207 : vector<8x256xf32> to vector<8x256xbf16>
    %c0_85 = arith.constant 0 : index
    %c0_86 = arith.constant 0 : index
    %213 = vector.load %arg4[%c0_85, %c0_86] : memref<256x1024xbf16, #tpu.memory_space<vmem>>, vector<256x1024xbf16>
    %cst_87 = arith.constant dense<0.000000e+00> : vector<8x1024xf32>
    %214 = tpu.matmul %212, %213, %cst_87 {dimension_numbers = #tpu.dot_dimension_numbers<[1], [0], [0], [1], [0, 0, 1, 1], [], []>} : vector<8x256xbf16>, vector<256x1024xbf16>, vector<8x1024xf32> -> vector<8x1024xf32>
    %215 = arith.addf %211, %214 : vector<8x1024xf32>
    %216 = vector.extract_strided_slice %215 {offsets = [0, 0], sizes = [8, 256], strides = [1, 1]} : vector<8x1024xf32> to vector<8x256xf32>
    %cst_88 = arith.constant 5.000000e-01 : f32
    %217 = vector.broadcast %cst_88 : f32 to vector<8x256xf32>
    %218 = arith.mulf %217, %216 : vector<8x256xf32>
    %219 = math.tanh %218 : vector<8x256xf32>
    %cst_89 = arith.constant 5.000000e-01 : f32
    %220 = vector.broadcast %cst_89 : f32 to vector<8x256xf32>
    %221 = arith.mulf %220, %219 : vector<8x256xf32>
    %cst_90 = arith.constant 5.000000e-01 : f32
    %222 = vector.broadcast %cst_90 : f32 to vector<8x256xf32>
    %223 = arith.addf %221, %222 : vector<8x256xf32>
    %224 = vector.extract_strided_slice %215 {offsets = [0, 256], sizes = [8, 256], strides = [1, 1]} : vector<8x1024xf32> to vector<8x256xf32>
    %cst_91 = arith.constant 5.000000e-01 : f32
    %225 = vector.broadcast %cst_91 : f32 to vector<8x256xf32>
    %226 = arith.mulf %225, %224 : vector<8x256xf32>
    %227 = math.tanh %226 : vector<8x256xf32>
    %cst_92 = arith.constant 5.000000e-01 : f32
    %228 = vector.broadcast %cst_92 : f32 to vector<8x256xf32>
    %229 = arith.mulf %228, %227 : vector<8x256xf32>
    %cst_93 = arith.constant 5.000000e-01 : f32
    %230 = vector.broadcast %cst_93 : f32 to vector<8x256xf32>
    %231 = arith.addf %229, %230 : vector<8x256xf32>
    %232 = vector.extract_strided_slice %215 {offsets = [0, 512], sizes = [8, 256], strides = [1, 1]} : vector<8x1024xf32> to vector<8x256xf32>
    %233 = math.tanh %232 : vector<8x256xf32>
    %234 = vector.extract_strided_slice %215 {offsets = [0, 768], sizes = [8, 256], strides = [1, 1]} : vector<8x1024xf32> to vector<8x256xf32>
    %cst_94 = arith.constant 5.000000e-01 : f32
    %235 = vector.broadcast %cst_94 : f32 to vector<8x256xf32>
    %236 = arith.mulf %235, %234 : vector<8x256xf32>
    %237 = math.tanh %236 : vector<8x256xf32>
    %cst_95 = arith.constant 5.000000e-01 : f32
    %238 = vector.broadcast %cst_95 : f32 to vector<8x256xf32>
    %239 = arith.mulf %238, %237 : vector<8x256xf32>
    %cst_96 = arith.constant 5.000000e-01 : f32
    %240 = vector.broadcast %cst_96 : f32 to vector<8x256xf32>
    %241 = arith.addf %239, %240 : vector<8x256xf32>
    %242 = arith.mulf %231, %205 : vector<8x256xf32>
    %243 = arith.mulf %223, %233 : vector<8x256xf32>
    %244 = arith.addf %242, %243 : vector<8x256xf32>
    %245 = math.tanh %244 : vector<8x256xf32>
    %246 = arith.mulf %241, %245 : vector<8x256xf32>
    %c6_i32 = arith.constant 6 : i32
    %c8_i32_97 = arith.constant 8 : i32
    %247 = arith.muli %c6_i32, %c8_i32_97 : i32
    %248 = tpu.assume_multiple %247, 8 : i32
    %249 = arith.index_cast %248 : i32 to index
    %c0_98 = arith.constant 0 : index
    %250 = vector.load %arg7[%249, %c0_98] : memref<64x1024xf32, #tpu.memory_space<vmem>>, vector<8x1024xf32>
    %251 = arith.truncf %246 : vector<8x256xf32> to vector<8x256xbf16>
    %c0_99 = arith.constant 0 : index
    %c0_100 = arith.constant 0 : index
    %252 = vector.load %arg4[%c0_99, %c0_100] : memref<256x1024xbf16, #tpu.memory_space<vmem>>, vector<256x1024xbf16>
    %cst_101 = arith.constant dense<0.000000e+00> : vector<8x1024xf32>
    %253 = tpu.matmul %251, %252, %cst_101 {dimension_numbers = #tpu.dot_dimension_numbers<[1], [0], [0], [1], [0, 0, 1, 1], [], []>} : vector<8x256xbf16>, vector<256x1024xbf16>, vector<8x1024xf32> -> vector<8x1024xf32>
    %254 = arith.addf %250, %253 : vector<8x1024xf32>
    %255 = vector.extract_strided_slice %254 {offsets = [0, 0], sizes = [8, 256], strides = [1, 1]} : vector<8x1024xf32> to vector<8x256xf32>
    %cst_102 = arith.constant 5.000000e-01 : f32
    %256 = vector.broadcast %cst_102 : f32 to vector<8x256xf32>
    %257 = arith.mulf %256, %255 : vector<8x256xf32>
    %258 = math.tanh %257 : vector<8x256xf32>
    %cst_103 = arith.constant 5.000000e-01 : f32
    %259 = vector.broadcast %cst_103 : f32 to vector<8x256xf32>
    %260 = arith.mulf %259, %258 : vector<8x256xf32>
    %cst_104 = arith.constant 5.000000e-01 : f32
    %261 = vector.broadcast %cst_104 : f32 to vector<8x256xf32>
    %262 = arith.addf %260, %261 : vector<8x256xf32>
    %263 = vector.extract_strided_slice %254 {offsets = [0, 256], sizes = [8, 256], strides = [1, 1]} : vector<8x1024xf32> to vector<8x256xf32>
    %cst_105 = arith.constant 5.000000e-01 : f32
    %264 = vector.broadcast %cst_105 : f32 to vector<8x256xf32>
    %265 = arith.mulf %264, %263 : vector<8x256xf32>
    %266 = math.tanh %265 : vector<8x256xf32>
    %cst_106 = arith.constant 5.000000e-01 : f32
    %267 = vector.broadcast %cst_106 : f32 to vector<8x256xf32>
    %268 = arith.mulf %267, %266 : vector<8x256xf32>
    %cst_107 = arith.constant 5.000000e-01 : f32
    %269 = vector.broadcast %cst_107 : f32 to vector<8x256xf32>
    %270 = arith.addf %268, %269 : vector<8x256xf32>
    %271 = vector.extract_strided_slice %254 {offsets = [0, 512], sizes = [8, 256], strides = [1, 1]} : vector<8x1024xf32> to vector<8x256xf32>
    %272 = math.tanh %271 : vector<8x256xf32>
    %273 = vector.extract_strided_slice %254 {offsets = [0, 768], sizes = [8, 256], strides = [1, 1]} : vector<8x1024xf32> to vector<8x256xf32>
    %cst_108 = arith.constant 5.000000e-01 : f32
    %274 = vector.broadcast %cst_108 : f32 to vector<8x256xf32>
    %275 = arith.mulf %274, %273 : vector<8x256xf32>
    %276 = math.tanh %275 : vector<8x256xf32>
    %cst_109 = arith.constant 5.000000e-01 : f32
    %277 = vector.broadcast %cst_109 : f32 to vector<8x256xf32>
    %278 = arith.mulf %277, %276 : vector<8x256xf32>
    %cst_110 = arith.constant 5.000000e-01 : f32
    %279 = vector.broadcast %cst_110 : f32 to vector<8x256xf32>
    %280 = arith.addf %278, %279 : vector<8x256xf32>
    %281 = arith.mulf %270, %244 : vector<8x256xf32>
    %282 = arith.mulf %262, %272 : vector<8x256xf32>
    %283 = arith.addf %281, %282 : vector<8x256xf32>
    %284 = math.tanh %283 : vector<8x256xf32>
    %285 = arith.mulf %280, %284 : vector<8x256xf32>
    %c7_i32 = arith.constant 7 : i32
    %c8_i32_111 = arith.constant 8 : i32
    %286 = arith.muli %c7_i32, %c8_i32_111 : i32
    %287 = tpu.assume_multiple %286, 8 : i32
    %288 = arith.index_cast %287 : i32 to index
    %c0_112 = arith.constant 0 : index
    %289 = vector.load %arg7[%288, %c0_112] : memref<64x1024xf32, #tpu.memory_space<vmem>>, vector<8x1024xf32>
    %290 = arith.truncf %285 : vector<8x256xf32> to vector<8x256xbf16>
    %c0_113 = arith.constant 0 : index
    %c0_114 = arith.constant 0 : index
    %291 = vector.load %arg4[%c0_113, %c0_114] : memref<256x1024xbf16, #tpu.memory_space<vmem>>, vector<256x1024xbf16>
    %cst_115 = arith.constant dense<0.000000e+00> : vector<8x1024xf32>
    %292 = tpu.matmul %290, %291, %cst_115 {dimension_numbers = #tpu.dot_dimension_numbers<[1], [0], [0], [1], [0, 0, 1, 1], [], []>} : vector<8x256xbf16>, vector<256x1024xbf16>, vector<8x1024xf32> -> vector<8x1024xf32>
    %293 = arith.addf %289, %292 : vector<8x1024xf32>
    %294 = vector.extract_strided_slice %293 {offsets = [0, 0], sizes = [8, 256], strides = [1, 1]} : vector<8x1024xf32> to vector<8x256xf32>
    %cst_116 = arith.constant 5.000000e-01 : f32
    %295 = vector.broadcast %cst_116 : f32 to vector<8x256xf32>
    %296 = arith.mulf %295, %294 : vector<8x256xf32>
    %297 = math.tanh %296 : vector<8x256xf32>
    %cst_117 = arith.constant 5.000000e-01 : f32
    %298 = vector.broadcast %cst_117 : f32 to vector<8x256xf32>
    %299 = arith.mulf %298, %297 : vector<8x256xf32>
    %cst_118 = arith.constant 5.000000e-01 : f32
    %300 = vector.broadcast %cst_118 : f32 to vector<8x256xf32>
    %301 = arith.addf %299, %300 : vector<8x256xf32>
    %302 = vector.extract_strided_slice %293 {offsets = [0, 256], sizes = [8, 256], strides = [1, 1]} : vector<8x1024xf32> to vector<8x256xf32>
    %cst_119 = arith.constant 5.000000e-01 : f32
    %303 = vector.broadcast %cst_119 : f32 to vector<8x256xf32>
    %304 = arith.mulf %303, %302 : vector<8x256xf32>
    %305 = math.tanh %304 : vector<8x256xf32>
    %cst_120 = arith.constant 5.000000e-01 : f32
    %306 = vector.broadcast %cst_120 : f32 to vector<8x256xf32>
    %307 = arith.mulf %306, %305 : vector<8x256xf32>
    %cst_121 = arith.constant 5.000000e-01 : f32
    %308 = vector.broadcast %cst_121 : f32 to vector<8x256xf32>
    %309 = arith.addf %307, %308 : vector<8x256xf32>
    %310 = vector.extract_strided_slice %293 {offsets = [0, 512], sizes = [8, 256], strides = [1, 1]} : vector<8x1024xf32> to vector<8x256xf32>
    %311 = math.tanh %310 : vector<8x256xf32>
    %312 = vector.extract_strided_slice %293 {offsets = [0, 768], sizes = [8, 256], strides = [1, 1]} : vector<8x1024xf32> to vector<8x256xf32>
    %cst_122 = arith.constant 5.000000e-01 : f32
    %313 = vector.broadcast %cst_122 : f32 to vector<8x256xf32>
    %314 = arith.mulf %313, %312 : vector<8x256xf32>
    %315 = math.tanh %314 : vector<8x256xf32>
    %cst_123 = arith.constant 5.000000e-01 : f32
    %316 = vector.broadcast %cst_123 : f32 to vector<8x256xf32>
    %317 = arith.mulf %316, %315 : vector<8x256xf32>
    %cst_124 = arith.constant 5.000000e-01 : f32
    %318 = vector.broadcast %cst_124 : f32 to vector<8x256xf32>
    %319 = arith.addf %317, %318 : vector<8x256xf32>
    %320 = arith.mulf %309, %283 : vector<8x256xf32>
    %321 = arith.mulf %301, %311 : vector<8x256xf32>
    %322 = arith.addf %320, %321 : vector<8x256xf32>
    %323 = math.tanh %322 : vector<8x256xf32>
    %324 = arith.mulf %319, %323 : vector<8x256xf32>
    %c8_i32_125 = arith.constant 8 : i32
    %c0_126 = arith.constant 0 : index
    %c0_127 = arith.constant 0 : index
    %325 = vector.load %arg8[%c0_126, %c0_127] : memref<8x256xf32, #tpu.memory_space<vmem>>, vector<8x256xf32>
    tpu.vector_store %arg8[%c0_126, %c0_127], %324 {strides = array<i32>} : memref<8x256xf32, #tpu.memory_space<vmem>>, vector<8x256xf32>,
    %c0_128 = arith.constant 0 : index
    %c0_129 = arith.constant 0 : index
    %326 = vector.load %arg9[%c0_128, %c0_129] : memref<8x256xf32, #tpu.memory_space<vmem>>, vector<8x256xf32>
    tpu.vector_store %arg9[%c0_128, %c0_129], %322 {strides = array<i32>} : memref<8x256xf32, #tpu.memory_space<vmem>>, vector<8x256xf32>,
    %c0_i32_130 = arith.constant 0 : i32
    %327 = arith.cmpi eq, %arg1, %c0_i32_130 : i32
    %328 = arith.extui %327 : i1 to i32
    %c0_i32_131 = arith.constant 0 : i32
    %329 = arith.cmpi ne, %328, %c0_i32_131 : i32
    scf.if %329 {
      %c0_132 = arith.constant 0 : index
      %c0_133 = arith.constant 0 : index
      %330 = vector.load %arg8[%c0_132, %c0_133] : memref<8x256xf32, #tpu.memory_space<vmem>>, vector<8x256xf32>
      %c0_134 = arith.constant 0 : index
      %c0_135 = arith.constant 0 : index
      %331 = vector.load %arg6[%c0_134, %c0_135] : memref<8x256xf32, #tpu.memory_space<vmem>>, vector<8x256xf32>
      tpu.vector_store %arg6[%c0_134, %c0_135], %330 {strides = array<i32>} : memref<8x256xf32, #tpu.memory_space<vmem>>, vector<8x256xf32>,
    } else {
    }
    return
  }
  func.func @transform_0(%arg0: i32, %arg1: i32) -> (i32, i32, i32) {
    %c0_i32 = arith.constant 0 : i32
    %c0_i32_0 = arith.constant 0 : i32
    return %arg0, %arg1, %c0_i32 : i32, i32, i32
  }
  func.func @transform_1(%arg0: i32, %arg1: i32) -> (i32, i32) {
    %c0_i32 = arith.constant 0 : i32
    %c0_i32_0 = arith.constant 0 : i32
    %c0_i32_1 = arith.constant 0 : i32
    return %c0_i32, %c0_i32_0 : i32, i32
  }
  func.func @transform_2(%arg0: i32, %arg1: i32) -> (i32, i32) {
    %c0_i32 = arith.constant 0 : i32
    %c0_i32_0 = arith.constant 0 : i32
    %c0_i32_1 = arith.constant 0 : i32
    return %c0_i32, %c0_i32_0 : i32, i32
  }
  func.func @transform_3(%arg0: i32, %arg1: i32) -> (i32, i32) {
    %c0_i32 = arith.constant 0 : i32
    %c0_i32_0 = arith.constant 0 : i32
    %c0_i32_1 = arith.constant 0 : i32
    return %c0_i32, %c0_i32_0 : i32, i32
  }
  func.func @transform_4(%arg0: i32, %arg1: i32) -> (i32, i32) {
    %c0_i32 = arith.constant 0 : i32
    %c0_i32_0 = arith.constant 0 : i32
    return %arg0, %c0_i32 : i32, i32
  }
}

</mosaic_0001>

<llo_original>
// kernel: tpu_custom_call.1
$region0: #{tpu_custom_call.1}
  #allocation0 [shape = 'u32[]', space=smem, size = 0x4, offset = 0x4, fixed_abs, tag = 'smem constant byte address 0x4 - core index']
  #allocation1 [shape = 'u32[72,128]{1,0:T(1,128)}', space=vmem, size = 0x9000, scoped, tag = 'internal scratch']
  #allocation2 [shape = 'f32[64,1024]{1,0:T(8,128)}', space=vmem, size = 0x40000, scoped, tag = 'scratch operand']
  #allocation3 [shape = 'f32[8,256]{1,0:T(8,128)}', space=vmem, size = 0x2000, scoped, tag = 'scratch operand']
  #allocation4 [shape = 'f32[8,256]{1,0:T(8,128)}', space=vmem, size = 0x2000, scoped, tag = 'scratch operand']
  %s0 = inlined_call_operand.vmem [shape: bf16[1,64,32], index: 0, kind: input, shape index: {}]
  %s1 = inlined_call_operand.hbm [shape: bf16[32,1024], index: 1, kind: input, shape index: {}]
  %s2 = inlined_call_operand.hbm [shape: bf16[256,1024], index: 2, kind: input, shape index: {}]
  %s3 = inlined_call_operand.vmem [shape: f32[1,1024], index: 3, kind: input, shape index: {}]
  %s4 = inlined_call_operand.hbm [shape: f32[8,256], index: 4, kind: output, shape index: {}]
  %s5 = sld [smem:[#allocation0]]
  $region42: #{tpu_custom_call.1} parent=0
    _
  %s7 = ssub.s32 1, %s5
  %s8 = scalar_select 0, %s7, %s5
  $region1: #{tpu_custom_call.1} parent=0
    #allocation5 [shape = 'u8[65536]{0}', space=vmem, size = 0x10000, scoped, tag = 'input window, operand 1, single buffered']
    #allocation6 [shape = 's32[1]{0}', space=sflag, size = 0x4, scoped, tag = 'scoped memory for tpu_custom_call.1']
    #allocation7 [shape = 's32[1]{0}', space=sflag, size = 0x4, scoped, tag = 'scoped memory for tpu_custom_call.1']
    #allocation8 [shape = 'u8[524288]{0}', space=vmem, size = 0x80000, scoped, tag = 'input window, operand 2, single buffered']
    #allocation9 [shape = 's32[1]{0}', space=sflag, size = 0x4, scoped, tag = 'scoped memory for tpu_custom_call.1']
    #allocation10 [shape = 'u8[8192]{0}', space=vmem, size = 0x2000, scoped, tag = 'output window, operand 0, single buffered']
    %9 = vsyncpa [#allocation6], 0
    %10 = vsyncpa [#allocation9], 0
    %11 = vsyncpa [#allocation7], 0
    // Predicated region
    $region2: #{tpu_custom_call.1} parent=1 // pred_check
      _
    $region3: #{tpu_custom_call.1} parent=1 // pred_check_branch
      %13 = sbr.rel (0) target = $region5
    $region4: #{tpu_custom_call.1} parent=1 // pred_region
      _
    $region5: #{tpu_custom_call.1} parent=1 // pred_fallthru
      _
    // Predicated region
    $region6: #{tpu_custom_call.1} parent=1 // pred_check
      _
    $region7: #{tpu_custom_call.1} parent=1 // pred_check_branch
      %15 = sbr.rel (0) target = $region9
    $region8: #{tpu_custom_call.1} parent=1 // pred_region
      %17 = vsyncadd [#allocation6], 0
      %s18 = sshll.u32 %s1, 4
      %s19 = int_to_ptr.hbm [resolvable:$true] %s18
      %s20 = sshll.u32 [#allocation5], 4
      %s21 = int_to_ptr.vmem [resolvable:$true] %s20
      %26 = dma.hbm_to_vmem [thread:$0]  %s19, 2048, %s21, [#allocation6], 512, 512, 32
    $region9: #{tpu_custom_call.1} parent=1 // pred_fallthru
      _
    // Predicated region
    $region10: #{tpu_custom_call.1} parent=1 // pred_check
      _
    $region11: #{tpu_custom_call.1} parent=1 // pred_check_branch
      %28 = sbr.rel (0) target = $region13
    $region12: #{tpu_custom_call.1} parent=1 // pred_region
      %30 = vsyncadd [#allocation9], 0
      %s31 = sshll.u32 %s2, 4
      %s32 = int_to_ptr.hbm [resolvable:$true] %s31
      %s33 = sshll.u32 [#allocation8], 4
      %s34 = int_to_ptr.vmem [resolvable:$true] %s33
      %39 = dma.hbm_to_vmem [thread:$0]  %s32, 16384, %s34, [#allocation9], 512, 512, 32
    $region13: #{tpu_custom_call.1} parent=1 // pred_fallthru
      _
    // Predicated region
    $region14: #{tpu_custom_call.1} parent=1 // pred_check
      _
    $region15: #{tpu_custom_call.1} parent=1 // pred_check_branch
      %41 = sbr.rel (0) target = $region17
    $region16: #{tpu_custom_call.1} parent=1 // pred_region
      _
    $region17: #{tpu_custom_call.1} parent=1 // pred_fallthru
      _
    // Predicated region
    $region18: #{tpu_custom_call.1} parent=1 // pred_check
      _
    $region19: #{tpu_custom_call.1} parent=1 // pred_check_branch
      %43 = sbr.rel (0) target = $region21
    $region20: #{tpu_custom_call.1} parent=1 // pred_region
      %45 = dma.done [#allocation6], 2048
    $region21: #{tpu_custom_call.1} parent=1 // pred_fallthru
      _
    // Predicated region
    $region22: #{tpu_custom_call.1} parent=1 // pred_check
      _
    $region23: #{tpu_custom_call.1} parent=1 // pred_check_branch
      %47 = sbr.rel (0) target = $region25
    $region24: #{tpu_custom_call.1} parent=1 // pred_region
      %49 = dma.done [#allocation9], 16384
    $region25: #{tpu_custom_call.1} parent=1 // pred_fallthru
      _
    %p51 = scmp.eq.s32.totalorder 0, 0
    // Predicated region
    $region26: #{tpu_custom_call.1} parent=1 // pred_check
      %p52 = pneg %p51
    $region27: #{tpu_custom_call.1} parent=1 // pred_check_branch
      %54 = sbr.rel (%p52) target = $region29
    $region28: #{tpu_custom_call.1} parent=1 // pred_region
      %55 = vst [vmem:[#allocation3] sm:$0xff] 0.0
      %56 = vst [vmem:[#allocation3 + $0x8] sm:$0xff] 0.0
      %57 = vst [vmem:[#allocation4] sm:$0xff] 0.0
      %58 = vst [vmem:[#allocation4 + $0x8] sm:$0xff] 0.0
    $region29: #{tpu_custom_call.1} parent=1 // pred_fallthru
      _
    %v59 = vld [vmem:[%s0] sm:$0xf]
    %v60 = vld [vmem:[%s0 + $0x4] sm:$0xf]
    %v61 = vld [vmem:[%s0 + $0x8] sm:$0xf]
    %v62 = vld [vmem:[%s0 + $0xc] sm:$0xf]
    %v63 = vld [vmem:[%s0 + $0x10] sm:$0xf]
    %v64 = vld [vmem:[%s0 + $0x14] sm:$0xf]
    %v65 = vld [vmem:[%s0 + $0x18] sm:$0xf]
    %v66 = vld [vmem:[%s0 + $0x1c] sm:$0xf]
    %v67 = vld [vmem:[#allocation5] sm:$0xff]
    %v68 = vld [vmem:[#allocation5 + $0x8] sm:$0xff]
    %v69 = vld [vmem:[#allocation5 + $0x10] sm:$0xff]
    %v70 = vld [vmem:[#allocation5 + $0x18] sm:$0xff]
    %v71 = vld [vmem:[#allocation5 + $0x20] sm:$0xff]
    %v72 = vld [vmem:[#allocation5 + $0x28] sm:$0xff]
    %v73 = vld [vmem:[#allocation5 + $0x30] sm:$0xff]
    %v74 = vld [vmem:[#allocation5 + $0x38] sm:$0xff]
    %v75 = vld [vmem:[#allocation5 + $0x40] sm:$0xff]
    %v76 = vld [vmem:[#allocation5 + $0x48] sm:$0xff]
    %v77 = vld [vmem:[#allocation5 + $0x50] sm:$0xff]
    %v78 = vld [vmem:[#allocation5 + $0x58] sm:$0xff]
    %v79 = vld [vmem:[#allocation5 + $0x60] sm:$0xff]
    %v80 = vld [vmem:[#allocation5 + $0x68] sm:$0xff]
    %v81 = vld [vmem:[#allocation5 + $0x70] sm:$0xff]
    %v82 = vld [vmem:[#allocation5 + $0x78] sm:$0xff]
    %v83 = vld [vmem:[%s3] sm:$0xff]
    %v85 = vperm.slane %v83, 0
    %v86 = vperm.slane %v83, 1
    %v87 = vperm.slane %v83, 2
    %v88 = vperm.slane %v83, 3
    %v89 = vperm.slane %v83, 4
    %v90 = vperm.slane %v83, 5
    %v91 = vperm.slane %v83, 6
    %v92 = vperm.slane %v83, 7
    %v109 = vunpack.c.l.b16 %v59
    %v110 = vunpack.c.l.b16 %v60
    %v111 = vunpack.c.l.b16 %v61
    %v112 = vunpack.c.l.b16 %v62
    %v113 = vunpack.c.l.b16 %v63
    %v114 = vunpack.c.l.b16 %v64
    %v115 = vunpack.c.l.b16 %v65
    %v116 = vunpack.c.l.b16 %v66
    %v117 = vpack.c.b16 %v110, %v109
    %v118 = vpack.c.b16 %v112, %v111
    %v119 = vpack.c.b16 %v114, %v113
    %v120 = vpack.c.b16 %v116, %v115
    %v137 = vunpack.c.l.b16 %v67
    %v138 = vunpack.c.h.b16 %v67
    %v139 = vunpack.c.l.b16 %v68
    %v140 = vunpack.c.h.b16 %v68
    %v141 = vunpack.c.l.b16 %v69
    %v142 = vunpack.c.h.b16 %v69
    %v143 = vunpack.c.l.b16 %v70
    %v144 = vunpack.c.h.b16 %v70
    %v145 = vunpack.c.l.b16 %v71
    %v146 = vunpack.c.h.b16 %v71
    %v147 = vunpack.c.l.b16 %v72
    %v148 = vunpack.c.h.b16 %v72
    %v149 = vunpack.c.l.b16 %v73
    %v150 = vunpack.c.h.b16 %v73
    %v151 = vunpack.c.l.b16 %v74
    %v152 = vunpack.c.h.b16 %v74
    %v153 = vunpack.c.l.b16 %v75
    %v154 = vunpack.c.h.b16 %v75
    %v155 = vunpack.c.l.b16 %v76
    %v156 = vunpack.c.h.b16 %v76
    %v157 = vunpack.c.l.b16 %v77
    %v158 = vunpack.c.h.b16 %v77
    %v159 = vunpack.c.l.b16 %v78
    %v160 = vunpack.c.h.b16 %v78
    %v161 = vunpack.c.l.b16 %v79
    %v162 = vunpack.c.h.b16 %v79
    %v163 = vunpack.c.l.b16 %v80
    %v164 = vunpack.c.h.b16 %v80
    %v165 = vunpack.c.l.b16 %v81
    %v166 = vunpack.c.h.b16 %v81
    %v167 = vunpack.c.l.b16 %v82
    %v168 = vunpack.c.h.b16 %v82
    %v169 = vpack.c.b16 %v145, %v137
    %v170 = vpack.c.b16 %v146, %v138
    %v171 = vpack.c.b16 %v147, %v139
    %v172 = vpack.c.b16 %v148, %v140
    %v173 = vpack.c.b16 %v149, %v141
    %v174 = vpack.c.b16 %v150, %v142
    %v175 = vpack.c.b16 %v151, %v143
    %v176 = vpack.c.b16 %v152, %v144
    %v177 = vpack.c.b16 %v161, %v153
    %v178 = vpack.c.b16 %v162, %v154
    %v179 = vpack.c.b16 %v163, %v155
    %v180 = vpack.c.b16 %v164, %v156
    %v181 = vpack.c.b16 %v165, %v157
    %v182 = vpack.c.b16 %v166, %v158
    %v183 = vpack.c.b16 %v167, %v159
    %v184 = vpack.c.b16 %v168, %v160
    %vm201 = vcmask 261120
    %v203 = vsel %vm201, %v117, 0
    %v206 = vsel %vm201, %v118, 0
    %v209 = vsel %vm201, %v119, 0
    %v212 = vsel %vm201, %v120, 0
    %214 = vmatpush.bf16.msra.mxu0 0
    %215 = vmatpush.bf16.msra.mxu0 0
    %216 = vmatpush.bf16.msra.mxu0 0
    %217 = vmatpush.bf16.msra.mxu0 0
    %218 = vmatpush.bf16.msra.mxu0 0
    %219 = vmatpush.bf16.msra.mxu0 0
    %220 = vmatpush.bf16.msra.mxu0 %v177
    %221 = vmatpush.bf16.msra.mxu0 %v169
    %222 = vmatmul.bf16.gmra.mxu0 %v203
    %v223 = vpop.f32.mrf.mxu0
    %v224 = vadd.f32 %v85, %v223
    %v225 = vpop.f32.mrf.mxu0
    %v226 = vadd.f32 %v85, %v225
    %227 = vmatmul.bf16.gmra.mxu0 %v206
    %v228 = vpop.f32.mrf.mxu0
    %v229 = vadd.f32 %v85, %v228
    %v230 = vpop.f32.mrf.mxu0
    %v231 = vadd.f32 %v85, %v230
    %232 = vmatmul.bf16.gmra.mxu0 %v209
    %v233 = vpop.f32.mrf.mxu0
    %v234 = vadd.f32 %v85, %v233
    %v235 = vpop.f32.mrf.mxu0
    %v236 = vadd.f32 %v85, %v235
    %237 = vmatmul.bf16.gmra.mxu0 %v212
    %v238 = vpop.f32.mrf.mxu0
    %v239 = vadd.f32 %v85, %v238
    %v240 = vpop.f32.mrf.mxu0
    %v241 = vadd.f32 %v85, %v240
    %242 = vdwg.mxu0
    %243 = vmatpush.bf16.msra.mxu0 0
    %244 = vmatpush.bf16.msra.mxu0 0
    %245 = vmatpush.bf16.msra.mxu0 0
    %246 = vmatpush.bf16.msra.mxu0 0
    %247 = vmatpush.bf16.msra.mxu0 0
    %248 = vmatpush.bf16.msra.mxu0 0
    %249 = vmatpush.bf16.msra.mxu0 %v178
    %250 = vmatpush.bf16.msra.mxu0 %v170
    %251 = vmatmul.bf16.gmra.mxu0 %v203
    %v252 = vpop.f32.mrf.mxu0
    %v253 = vadd.f32 %v86, %v252
    %v254 = vpop.f32.mrf.mxu0
    %v255 = vadd.f32 %v86, %v254
    %256 = vmatmul.bf16.gmra.mxu0 %v206
    %v257 = vpop.f32.mrf.mxu0
    %v258 = vadd.f32 %v86, %v257
    %v259 = vpop.f32.mrf.mxu0
    %v260 = vadd.f32 %v86, %v259
    %261 = vmatmul.bf16.gmra.mxu0 %v209
    %v262 = vpop.f32.mrf.mxu0
    %v263 = vadd.f32 %v86, %v262
    %v264 = vpop.f32.mrf.mxu0
    %v265 = vadd.f32 %v86, %v264
    %266 = vmatmul.bf16.gmra.mxu0 %v212
    %v267 = vpop.f32.mrf.mxu0
    %v268 = vadd.f32 %v86, %v267
    %v269 = vpop.f32.mrf.mxu0
    %v270 = vadd.f32 %v86, %v269
    %271 = vdwg.mxu0
    %272 = vmatpush.bf16.msra.mxu0 0
    %273 = vmatpush.bf16.msra.mxu0 0
    %274 = vmatpush.bf16.msra.mxu0 0
    %275 = vmatpush.bf16.msra.mxu0 0
    %276 = vmatpush.bf16.msra.mxu0 0
    %277 = vmatpush.bf16.msra.mxu0 0
    %278 = vmatpush.bf16.msra.mxu0 %v179
    %279 = vmatpush.bf16.msra.mxu0 %v171
    %280 = vmatmul.bf16.gmra.mxu0 %v203
    %v281 = vpop.f32.mrf.mxu0
    %v282 = vadd.f32 %v87, %v281
    %v283 = vpop.f32.mrf.mxu0
    %v284 = vadd.f32 %v87, %v283
    %285 = vmatmul.bf16.gmra.mxu0 %v206
    %v286 = vpop.f32.mrf.mxu0
    %v287 = vadd.f32 %v87, %v286
    %v288 = vpop.f32.mrf.mxu0
    %v289 = vadd.f32 %v87, %v288
    %290 = vmatmul.bf16.gmra.mxu0 %v209
    %v291 = vpop.f32.mrf.mxu0
    %v292 = vadd.f32 %v87, %v291
    %v293 = vpop.f32.mrf.mxu0
    %v294 = vadd.f32 %v87, %v293
    %295 = vmatmul.bf16.gmra.mxu0 %v212
    %v296 = vpop.f32.mrf.mxu0
    %v297 = vadd.f32 %v87, %v296
    %v298 = vpop.f32.mrf.mxu0
    %v299 = vadd.f32 %v87, %v298
    %300 = vdwg.mxu0
    %301 = vmatpush.bf16.msra.mxu0 0
    %302 = vmatpush.bf16.msra.mxu0 0
    %303 = vmatpush.bf16.msra.mxu0 0
    %304 = vmatpush.bf16.msra.mxu0 0
    %305 = vmatpush.bf16.msra.mxu0 0
    %306 = vmatpush.bf16.msra.mxu0 0
    %307 = vmatpush.bf16.msra.mxu0 %v180
    %308 = vmatpush.bf16.msra.mxu0 %v172
    %309 = vmatmul.bf16.gmra.mxu0 %v203
    %v310 = vpop.f32.mrf.mxu0
    %v311 = vadd.f32 %v88, %v310
    %v312 = vpop.f32.mrf.mxu0
    %v313 = vadd.f32 %v88, %v312
    %314 = vmatmul.bf16.gmra.mxu0 %v206
    %v315 = vpop.f32.mrf.mxu0
    %v316 = vadd.f32 %v88, %v315
    %v317 = vpop.f32.mrf.mxu0
    %v318 = vadd.f32 %v88, %v317
    %319 = vmatmul.bf16.gmra.mxu0 %v209
    %v320 = vpop.f32.mrf.mxu0
    %v321 = vadd.f32 %v88, %v320
    %v322 = vpop.f32.mrf.mxu0
    %v323 = vadd.f32 %v88, %v322
    %324 = vmatmul.bf16.gmra.mxu0 %v212
    %v325 = vpop.f32.mrf.mxu0
    %v326 = vadd.f32 %v88, %v325
    %v327 = vpop.f32.mrf.mxu0
    %v328 = vadd.f32 %v88, %v327
    %329 = vdwg.mxu0
    %330 = vmatpush.bf16.msra.mxu0 0
    %331 = vmatpush.bf16.msra.mxu0 0
    %332 = vmatpush.bf16.msra.mxu0 0
    %333 = vmatpush.bf16.msra.mxu0 0
    %334 = vmatpush.bf16.msra.mxu0 0
    %335 = vmatpush.bf16.msra.mxu0 0
    %336 = vmatpush.bf16.msra.mxu0 %v181
    %337 = vmatpush.bf16.msra.mxu0 %v173
    %338 = vmatmul.bf16.gmra.mxu0 %v203
    %v339 = vpop.f32.mrf.mxu0
    %v340 = vadd.f32 %v89, %v339
    %v341 = vpop.f32.mrf.mxu0
    %v342 = vadd.f32 %v89, %v341
    %343 = vmatmul.bf16.gmra.mxu0 %v206
    %v344 = vpop.f32.mrf.mxu0
    %v345 = vadd.f32 %v89, %v344
    %v346 = vpop.f32.mrf.mxu0
    %v347 = vadd.f32 %v89, %v346
    %348 = vmatmul.bf16.gmra.mxu0 %v209
    %v349 = vpop.f32.mrf.mxu0
    %v350 = vadd.f32 %v89, %v349
    %v351 = vpop.f32.mrf.mxu0
    %v352 = vadd.f32 %v89, %v351
    %353 = vmatmul.bf16.gmra.mxu0 %v212
    %v354 = vpop.f32.mrf.mxu0
    %v355 = vadd.f32 %v89, %v354
    %v356 = vpop.f32.mrf.mxu0
    %v357 = vadd.f32 %v89, %v356
    %358 = vdwg.mxu0
    %359 = vmatpush.bf16.msra.mxu0 0
    %360 = vmatpush.bf16.msra.mxu0 0
    %361 = vmatpush.bf16.msra.mxu0 0
    %362 = vmatpush.bf16.msra.mxu0 0
    %363 = vmatpush.bf16.msra.mxu0 0
    %364 = vmatpush.bf16.msra.mxu0 0
    %365 = vmatpush.bf16.msra.mxu0 %v182
    %366 = vmatpush.bf16.msra.mxu0 %v174
    %367 = vmatmul.bf16.gmra.mxu0 %v203
    %v368 = vpop.f32.mrf.mxu0
    %v369 = vadd.f32 %v90, %v368
    %v370 = vpop.f32.mrf.mxu0
    %v371 = vadd.f32 %v90, %v370
    %372 = vmatmul.bf16.gmra.mxu0 %v206
    %v373 = vpop.f32.mrf.mxu0
    %v374 = vadd.f32 %v90, %v373
    %v375 = vpop.f32.mrf.mxu0
    %v376 = vadd.f32 %v90, %v375
    %377 = vmatmul.bf16.gmra.mxu0 %v209
    %v378 = vpop.f32.mrf.mxu0
    %v379 = vadd.f32 %v90, %v378
    %v380 = vpop.f32.mrf.mxu0
    %v381 = vadd.f32 %v90, %v380
    %382 = vmatmul.bf16.gmra.mxu0 %v212
    %v383 = vpop.f32.mrf.mxu0
    %v384 = vadd.f32 %v90, %v383
    %v385 = vpop.f32.mrf.mxu0
    %v386 = vadd.f32 %v90, %v385
    %387 = vdwg.mxu0
    %388 = vmatpush.bf16.msra.mxu0 0
    %389 = vmatpush.bf16.msra.mxu0 0
    %390 = vmatpush.bf16.msra.mxu0 0
    %391 = vmatpush.bf16.msra.mxu0 0
    %392 = vmatpush.bf16.msra.mxu0 0
    %393 = vmatpush.bf16.msra.mxu0 0
    %394 = vmatpush.bf16.msra.mxu0 %v183
    %395 = vmatpush.bf16.msra.mxu0 %v175
    %396 = vmatmul.bf16.gmra.mxu0 %v203
    %v397 = vpop.f32.mrf.mxu0
    %v398 = vadd.f32 %v91, %v397
    %v399 = vpop.f32.mrf.mxu0
    %v400 = vadd.f32 %v91, %v399
    %401 = vmatmul.bf16.gmra.mxu0 %v206
    %v402 = vpop.f32.mrf.mxu0
    %v403 = vadd.f32 %v91, %v402
    %v404 = vpop.f32.mrf.mxu0
    %v405 = vadd.f32 %v91, %v404
    %406 = vmatmul.bf16.gmra.mxu0 %v209
    %v407 = vpop.f32.mrf.mxu0
    %v408 = vadd.f32 %v91, %v407
    %v409 = vpop.f32.mrf.mxu0
    %v410 = vadd.f32 %v91, %v409
    %411 = vmatmul.bf16.gmra.mxu0 %v212
    %v412 = vpop.f32.mrf.mxu0
    %v413 = vadd.f32 %v91, %v412
    %v414 = vpop.f32.mrf.mxu0
    %v415 = vadd.f32 %v91, %v414
    %416 = vdwg.mxu0
    %417 = vmatpush.bf16.msra.mxu0 0
    %418 = vmatpush.bf16.msra.mxu0 0
    %419 = vmatpush.bf16.msra.mxu0 0
    %420 = vmatpush.bf16.msra.mxu0 0
    %421 = vmatpush.bf16.msra.mxu0 0
    %422 = vmatpush.bf16.msra.mxu0 0
    %423 = vmatpush.bf16.msra.mxu0 %v184
    %424 = vmatpush.bf16.msra.mxu0 %v176
    %425 = vmatmul.bf16.gmra.mxu0 %v203
    %v426 = vpop.f32.mrf.mxu0
    %v427 = vadd.f32 %v92, %v426
    %v428 = vpop.f32.mrf.mxu0
    %v429 = vadd.f32 %v92, %v428
    %430 = vmatmul.bf16.gmra.mxu0 %v206
    %v431 = vpop.f32.mrf.mxu0
    %v432 = vadd.f32 %v92, %v431
    %v433 = vpop.f32.mrf.mxu0
    %v434 = vadd.f32 %v92, %v433
    %435 = vmatmul.bf16.gmra.mxu0 %v209
    %v436 = vpop.f32.mrf.mxu0
    %v437 = vadd.f32 %v92, %v436
    %v438 = vpop.f32.mrf.mxu0
    %v439 = vadd.f32 %v92, %v438
    %440 = vmatmul.bf16.gmra.mxu0 %v212
    %v441 = vpop.f32.mrf.mxu0
    %v442 = vadd.f32 %v92, %v441
    %v443 = vpop.f32.mrf.mxu0
    %v444 = vadd.f32 %v92, %v443
    %445 = vdwg.mxu0
    %446 = vst [vmem:[#allocation2] sm:$0xff] %v224
    %447 = vst [vmem:[#allocation2 + $0x8] sm:$0xff] %v253
    %448 = vst [vmem:[#allocation2 + $0x10] sm:$0xff] %v282
    %449 = vst [vmem:[#allocation2 + $0x18] sm:$0xff] %v311
    %450 = vst [vmem:[#allocation2 + $0x20] sm:$0xff] %v340
    %451 = vst [vmem:[#allocation2 + $0x28] sm:$0xff] %v369
    %452 = vst [vmem:[#allocation2 + $0x30] sm:$0xff] %v398
    %453 = vst [vmem:[#allocation2 + $0x38] sm:$0xff] %v427
    %454 = vst [vmem:[#allocation2 + $0x40] sm:$0xff] %v226
    %455 = vst [vmem:[#allocation2 + $0x48] sm:$0xff] %v255
    %456 = vst [vmem:[#allocation2 + $0x50] sm:$0xff] %v284
    %457 = vst [vmem:[#allocation2 + $0x58] sm:$0xff] %v313
    %458 = vst [vmem:[#allocation2 + $0x60] sm:$0xff] %v342
    %459 = vst [vmem:[#allocation2 + $0x68] sm:$0xff] %v371
    %460 = vst [vmem:[#allocation2 + $0x70] sm:$0xff] %v400
    %461 = vst [vmem:[#allocation2 + $0x78] sm:$0xff] %v429
    %462 = vst [vmem:[#allocation2 + $0x80] sm:$0xff] %v229
    %463 = vst [vmem:[#allocation2 + $0x88] sm:$0xff] %v258
    %464 = vst [vmem:[#allocation2 + $0x90] sm:$0xff] %v287
    %465 = vst [vmem:[#allocation2 + $0x98] sm:$0xff] %v316
    %466 = vst [vmem:[#allocation2 + $0xa0] sm:$0xff] %v345
    %467 = vst [vmem:[#allocation2 + $0xa8] sm:$0xff] %v374
    %468 = vst [vmem:[#allocation2 + $0xb0] sm:$0xff] %v403
    %469 = vst [vmem:[#allocation2 + $0xb8] sm:$0xff] %v432
    %470 = vst [vmem:[#allocation2 + $0xc0] sm:$0xff] %v231
    %471 = vst [vmem:[#allocation2 + $0xc8] sm:$0xff] %v260
    %472 = vst [vmem:[#allocation2 + $0xd0] sm:$0xff] %v289
    %473 = vst [vmem:[#allocation2 + $0xd8] sm:$0xff] %v318
    %474 = vst [vmem:[#allocation2 + $0xe0] sm:$0xff] %v347
    %475 = vst [vmem:[#allocation2 + $0xe8] sm:$0xff] %v376
    %476 = vst [vmem:[#allocation2 + $0xf0] sm:$0xff] %v405
    %477 = vst [vmem:[#allocation2 + $0xf8] sm:$0xff] %v434
    %478 = vst [vmem:[#allocation2 + $0x100] sm:$0xff] %v234
    %479 = vst [vmem:[#allocation2 + $0x108] sm:$0xff] %v263
    %480 = vst [vmem:[#allocation2 + $0x110] sm:$0xff] %v292
    %481 = vst [vmem:[#allocation2 + $0x118] sm:$0xff] %v321
    %482 = vst [vmem:[#allocation2 + $0x120] sm:$0xff] %v350
    %483 = vst [vmem:[#allocation2 + $0x128] sm:$0xff] %v379
    %484 = vst [vmem:[#allocation2 + $0x130] sm:$0xff] %v408
    %485 = vst [vmem:[#allocation2 + $0x138] sm:$0xff] %v437
    %486 = vst [vmem:[#allocation2 + $0x140] sm:$0xff] %v236
    %487 = vst [vmem:[#allocation2 + $0x148] sm:$0xff] %v265
    %488 = vst [vmem:[#allocation2 + $0x150] sm:$0xff] %v294
    %489 = vst [vmem:[#allocation2 + $0x158] sm:$0xff] %v323
    %490 = vst [vmem:[#allocation2 + $0x160] sm:$0xff] %v352
    %491 = vst [vmem:[#allocation2 + $0x168] sm:$0xff] %v381
    %492 = vst [vmem:[#allocation2 + $0x170] sm:$0xff] %v410
    %493 = vst [vmem:[#allocation2 + $0x178] sm:$0xff] %v439
    %494 = vst [vmem:[#allocation2 + $0x180] sm:$0xff] %v239
    %495 = vst [vmem:[#allocation2 + $0x188] sm:$0xff] %v268
    %496 = vst [vmem:[#allocation2 + $0x190] sm:$0xff] %v297
    %497 = vst [vmem:[#allocation2 + $0x198] sm:$0xff] %v326
    %498 = vst [vmem:[#allocation2 + $0x1a0] sm:$0xff] %v355
    %499 = vst [vmem:[#allocation2 + $0x1a8] sm:$0xff] %v384
    %500 = vst [vmem:[#allocation2 + $0x1b0] sm:$0xff] %v413
    %501 = vst [vmem:[#allocation2 + $0x1b8] sm:$0xff] %v442
    %502 = vst [vmem:[#allocation2 + $0x1c0] sm:$0xff] %v241
    %503 = vst [vmem:[#allocation2 + $0x1c8] sm:$0xff] %v270
    %504 = vst [vmem:[#allocation2 + $0x1d0] sm:$0xff] %v299
    %505 = vst [vmem:[#allocation2 + $0x1d8] sm:$0xff] %v328
    %506 = vst [vmem:[#allocation2 + $0x1e0] sm:$0xff] %v357
    %507 = vst [vmem:[#allocation2 + $0x1e8] sm:$0xff] %v386
    %508 = vst [vmem:[#allocation2 + $0x1f0] sm:$0xff] %v415
    %509 = vst [vmem:[#allocation2 + $0x1f8] sm:$0xff] %v444
    %v510 = vld [vmem:[#allocation3] sm:$0xff]
    %v511 = vld [vmem:[#allocation3 + $0x8] sm:$0xff]
    %v512 = vld [vmem:[#allocation4] sm:$0xff]
    %v513 = vld [vmem:[#allocation4 + $0x8] sm:$0xff]
    %s514 = smul.u32 0, 8
    %s515 = smul.addr %s514, 8
    %s516 = scalar_lea.vmem [#allocation2], %s515
    %v517 = vld [vmem:[%s516] sm:$0xff]
    %v518 = vld [vmem:[%s516 + $0x8] sm:$0xff]
    %v519 = vld [vmem:[%s516 + $0x10] sm:$0xff]
    %v520 = vld [vmem:[%s516 + $0x18] sm:$0xff]
    %v521 = vld [vmem:[%s516 + $0x20] sm:$0xff]
    %v522 = vld [vmem:[%s516 + $0x28] sm:$0xff]
    %v523 = vld [vmem:[%s516 + $0x30] sm:$0xff]
    %v524 = vld [vmem:[%s516 + $0x38] sm:$0xff]
    %v525 = vpack.c.bf16 %v510, %v510
    %v526 = vpack.c.bf16 %v511, %v511
    %v527 = vld [vmem:[#allocation8] sm:$0xff]
    %v528 = vld [vmem:[#allocation8 + $0x8] sm:$0xff]
    %v529 = vld [vmem:[#allocation8 + $0x10] sm:$0xff]
    %v530 = vld [vmem:[#allocation8 + $0x18] sm:$0xff]
    %v531 = vld [vmem:[#allocation8 + $0x20] sm:$0xff]
    %v532 = vld [vmem:[#allocation8 + $0x28] sm:$0xff]
    %v533 = vld [vmem:[#allocation8 + $0x30] sm:$0xff]
    %v534 = vld [vmem:[#allocation8 + $0x38] sm:$0xff]
    %v535 = vld [vmem:[#allocation8 + $0x40] sm:$0xff]
    %v536 = vld [vmem:[#allocation8 + $0x48] sm:$0xff]
    %v537 = vld [vmem:[#allocation8 + $0x50] sm:$0xff]
    %v538 = vld [vmem:[#allocation8 + $0x58] sm:$0xff]
    %v539 = vld [vmem:[#allocation8 + $0x60] sm:$0xff]
    %v540 = vld [vmem:[#allocation8 + $0x68] sm:$0xff]
    %v541 = vld [vmem:[#allocation8 + $0x70] sm:$0xff]
    %v542 = vld [vmem:[#allocation8 + $0x78] sm:$0xff]
    %v543 = vld [vmem:[#allocation8 + $0x80] sm:$0xff]
    %v544 = vld [vmem:[#allocation8 + $0x88] sm:$0xff]
    %v545 = vld [vmem:[#allocation8 + $0x90] sm:$0xff]
    %v546 = vld [vmem:[#allocation8 + $0x98] sm:$0xff]
    %v547 = vld [vmem:[#allocation8 + $0xa0] sm:$0xff]
    %v548 = vld [vmem:[#allocation8 + $0xa8] sm:$0xff]
    %v549 = vld [vmem:[#allocation8 + $0xb0] sm:$0xff]
    %v550 = vld [vmem:[#allocation8 + $0xb8] sm:$0xff]
    %v551 = vld [vmem:[#allocation8 + $0xc0] sm:$0xff]
    %v552 = vld [vmem:[#allocation8 + $0xc8] sm:$0xff]
    %v553 = vld [vmem:[#allocation8 + $0xd0] sm:$0xff]
    %v554 = vld [vmem:[#allocation8 + $0xd8] sm:$0xff]
    %v555 = vld [vmem:[#allocation8 + $0xe0] sm:$0xff]
    %v556 = vld [vmem:[#allocation8 + $0xe8] sm:$0xff]
    %v557 = vld [vmem:[#allocation8 + $0xf0] sm:$0xff]
    %v558 = vld [vmem:[#allocation8 + $0xf8] sm:$0xff]
    %v559 = vld [vmem:[#allocation8 + $0x100] sm:$0xff]
    %v560 = vld [vmem:[#allocation8 + $0x108] sm:$0xff]
    %v561 = vld [vmem:[#allocation8 + $0x110] sm:$0xff]
    %v562 = vld [vmem:[#allocation8 + $0x118] sm:$0xff]
    %v563 = vld [vmem:[#allocation8 + $0x120] sm:$0xff]
    %v564 = vld [vmem:[#allocation8 + $0x128] sm:$0xff]
    %v565 = vld [vmem:[#allocation8 + $0x130] sm:$0xff]
    %v566 = vld [vmem:[#allocation8 + $0x138] sm:$0xff]
    %v567 = vld [vmem:[#allocation8 + $0x140] sm:$0xff]
    %v568 = vld [vmem:[#allocation8 + $0x148] sm:$0xff]
    %v569 = vld [vmem:[#allocation8 + $0x150] sm:$0xff]
    %v570 = vld [vmem:[#allocation8 + $0x158] sm:$0xff]
    %v571 = vld [vmem:[#allocation8 + $0x160] sm:$0xff]
    %v572 = vld [vmem:[#allocation8 + $0x168] sm:$0xff]
    %v573 = vld [vmem:[#allocation8 + $0x170] sm:$0xff]
    %v574 = vld [vmem:[#allocation8 + $0x178] sm:$0xff]
    %v575 = vld [vmem:[#allocation8 + $0x180] sm:$0xff]
    %v576 = vld [vmem:[#allocation8 + $0x188] sm:$0xff]
    %v577 = vld [vmem:[#allocation8 + $0x190] sm:$0xff]
    %v578 = vld [vmem:[#allocation8 + $0x198] sm:$0xff]
    %v579 = vld [vmem:[#allocation8 + $0x1a0] sm:$0xff]
    %v580 = vld [vmem:[#allocation8 + $0x1a8] sm:$0xff]
    %v581 = vld [vmem:[#allocation8 + $0x1b0] sm:$0xff]
    %v582 = vld [vmem:[#allocation8 + $0x1b8] sm:$0xff]
    %v583 = vld [vmem:[#allocation8 + $0x1c0] sm:$0xff]
    %v584 = vld [vmem:[#allocation8 + $0x1c8] sm:$0xff]
    %v585 = vld [vmem:[#allocation8 + $0x1d0] sm:$0xff]
    %v586 = vld [vmem:[#allocation8 + $0x1d8] sm:$0xff]
    %v587 = vld [vmem:[#allocation8 + $0x1e0] sm:$0xff]
    %v588 = vld [vmem:[#allocation8 + $0x1e8] sm:$0xff]
    %v589 = vld [vmem:[#allocation8 + $0x1f0] sm:$0xff]
    %v590 = vld [vmem:[#allocation8 + $0x1f8] sm:$0xff]
    %v591 = vld [vmem:[#allocation8 + $0x200] sm:$0xff]
    %v592 = vld [vmem:[#allocation8 + $0x208] sm:$0xff]
    %v593 = vld [vmem:[#allocation8 + $0x210] sm:$0xff]
    %v594 = vld [vmem:[#allocation8 + $0x218] sm:$0xff]
    %v595 = vld [vmem:[#allocation8 + $0x220] sm:$0xff]
    %v596 = vld [vmem:[#allocation8 + $0x228] sm:$0xff]
    %v597 = vld [vmem:[#allocation8 + $0x230] sm:$0xff]
    %v598 = vld [vmem:[#allocation8 + $0x238] sm:$0xff]
    %v599 = vld [vmem:[#allocation8 + $0x240] sm:$0xff]
    %v600 = vld [vmem:[#allocation8 + $0x248] sm:$0xff]
    %v601 = vld [vmem:[#allocation8 + $0x250] sm:$0xff]
    %v602 = vld [vmem:[#allocation8 + $0x258] sm:$0xff]
    %v603 = vld [vmem:[#allocation8 + $0x260] sm:$0xff]
    %v604 = vld [vmem:[#allocation8 + $0x268] sm:$0xff]
    %v605 = vld [vmem:[#allocation8 + $0x270] sm:$0xff]
    %v606 = vld [vmem:[#allocation8 + $0x278] sm:$0xff]
    %v607 = vld [vmem:[#allocation8 + $0x280] sm:$0xff]
    %v608 = vld [vmem:[#allocation8 + $0x288] sm:$0xff]
    %v609 = vld [vmem:[#allocation8 + $0x290] sm:$0xff]
    %v610 = vld [vmem:[#allocation8 + $0x298] sm:$0xff]
    %v611 = vld [vmem:[#allocation8 + $0x2a0] sm:$0xff]
    %v612 = vld [vmem:[#allocation8 + $0x2a8] sm:$0xff]
    %v613 = vld [vmem:[#allocation8 + $0x2b0] sm:$0xff]
    %v614 = vld [vmem:[#allocation8 + $0x2b8] sm:$0xff]
    %v615 = vld [vmem:[#allocation8 + $0x2c0] sm:$0xff]
    %v616 = vld [vmem:[#allocation8 + $0x2c8] sm:$0xff]
    %v617 = vld [vmem:[#allocation8 + $0x2d0] sm:$0xff]
    %v618 = vld [vmem:[#allocation8 + $0x2d8] sm:$0xff]
    %v619 = vld [vmem:[#allocation8 + $0x2e0] sm:$0xff]
    %v620 = vld [vmem:[#allocation8 + $0x2e8] sm:$0xff]
    %v621 = vld [vmem:[#allocation8 + $0x2f0] sm:$0xff]
    %v622 = vld [vmem:[#allocation8 + $0x2f8] sm:$0xff]
    %v623 = vld [vmem:[#allocation8 + $0x300] sm:$0xff]
    %v624 = vld [vmem:[#allocation8 + $0x308] sm:$0xff]
    %v625 = vld [vmem:[#allocation8 + $0x310] sm:$0xff]
    %v626 = vld [vmem:[#allocation8 + $0x318] sm:$0xff]
    %v627 = vld [vmem:[#allocation8 + $0x320] sm:$0xff]
    %v628 = vld [vmem:[#allocation8 + $0x328] sm:$0xff]
    %v629 = vld [vmem:[#allocation8 + $0x330] sm:$0xff]
    %v630 = vld [vmem:[#allocation8 + $0x338] sm:$0xff]
    %v631 = vld [vmem:[#allocation8 + $0x340] sm:$0xff]
    %v632 = vld [vmem:[#allocation8 + $0x348] sm:$0xff]
    %v633 = vld [vmem:[#allocation8 + $0x350] sm:$0xff]
    %v634 = vld [vmem:[#allocation8 + $0x358] sm:$0xff]
    %v635 = vld [vmem:[#allocation8 + $0x360] sm:$0xff]
    %v636 = vld [vmem:[#allocation8 + $0x368] sm:$0xff]
    %v637 = vld [vmem:[#allocation8 + $0x370] sm:$0xff]
    %v638 = vld [vmem:[#allocation8 + $0x378] sm:$0xff]
    %v639 = vld [vmem:[#allocation8 + $0x380] sm:$0xff]
    %v640 = vld [vmem:[#allocation8 + $0x388] sm:$0xff]
    %v641 = vld [vmem:[#allocation8 + $0x390] sm:$0xff]
    %v642 = vld [vmem:[#allocation8 + $0x398] sm:$0xff]
    %v643 = vld [vmem:[#allocation8 + $0x3a0] sm:$0xff]
    %v644 = vld [vmem:[#allocation8 + $0x3a8] sm:$0xff]
    %v645 = vld [vmem:[#allocation8 + $0x3b0] sm:$0xff]
    %v646 = vld [vmem:[#allocation8 + $0x3b8] sm:$0xff]
    %v647 = vld [vmem:[#allocation8 + $0x3c0] sm:$0xff]
    %v648 = vld [vmem:[#allocation8 + $0x3c8] sm:$0xff]
    %v649 = vld [vmem:[#allocation8 + $0x3d0] sm:$0xff]
    %v650 = vld [vmem:[#allocation8 + $0x3d8] sm:$0xff]
    %v651 = vld [vmem:[#allocation8 + $0x3e0] sm:$0xff]
    %v652 = vld [vmem:[#allocation8 + $0x3e8] sm:$0xff]
    %v653 = vld [vmem:[#allocation8 + $0x3f0] sm:$0xff]
    %v654 = vld [vmem:[#allocation8 + $0x3f8] sm:$0xff]
    %v783 = vunpack.c.l.b16 %v527
    %v784 = vunpack.c.h.b16 %v527
    %v785 = vunpack.c.l.b16 %v528
    %v786 = vunpack.c.h.b16 %v528
    %v787 = vunpack.c.l.b16 %v529
    %v788 = vunpack.c.h.b16 %v529
    %v789 = vunpack.c.l.b16 %v530
    %v790 = vunpack.c.h.b16 %v530
    %v791 = vunpack.c.l.b16 %v531
    %v792 = vunpack.c.h.b16 %v531
    %v793 = vunpack.c.l.b16 %v532
    %v794 = vunpack.c.h.b16 %v532
    %v795 = vunpack.c.l.b16 %v533
    %v796 = vunpack.c.h.b16 %v533
    %v797 = vunpack.c.l.b16 %v534
    %v798 = vunpack.c.h.b16 %v534
    %v799 = vunpack.c.l.b16 %v535
    %v800 = vunpack.c.h.b16 %v535
    %v801 = vunpack.c.l.b16 %v536
    %v802 = vunpack.c.h.b16 %v536
    %v803 = vunpack.c.l.b16 %v537
    %v804 = vunpack.c.h.b16 %v537
    %v805 = vunpack.c.l.b16 %v538
    %v806 = vunpack.c.h.b16 %v538
    %v807 = vunpack.c.l.b16 %v539
    %v808 = vunpack.c.h.b16 %v539
    %v809 = vunpack.c.l.b16 %v540
    %v810 = vunpack.c.h.b16 %v540
    %v811 = vunpack.c.l.b16 %v541
    %v812 = vunpack.c.h.b16 %v541
    %v813 = vunpack.c.l.b16 %v542
    %v814 = vunpack.c.h.b16 %v542
    %v815 = vunpack.c.l.b16 %v543
    %v816 = vunpack.c.h.b16 %v543
    %v817 = vunpack.c.l.b16 %v544
    %v818 = vunpack.c.h.b16 %v544
    %v819 = vunpack.c.l.b16 %v545
    %v820 = vunpack.c.h.b16 %v545
    %v821 = vunpack.c.l.b16 %v546
    %v822 = vunpack.c.h.b16 %v546
    %v823 = vunpack.c.l.b16 %v547
    %v824 = vunpack.c.h.b16 %v547
    %v825 = vunpack.c.l.b16 %v548
    %v826 = vunpack.c.h.b16 %v548
    %v827 = vunpack.c.l.b16 %v549
    %v828 = vunpack.c.h.b16 %v549
    %v829 = vunpack.c.l.b16 %v550
    %v830 = vunpack.c.h.b16 %v550
    %v831 = vunpack.c.l.b16 %v551
    %v832 = vunpack.c.h.b16 %v551
    %v833 = vunpack.c.l.b16 %v552
    %v834 = vunpack.c.h.b16 %v552
    %v835 = vunpack.c.l.b16 %v553
    %v836 = vunpack.c.h.b16 %v553
    %v837 = vunpack.c.l.b16 %v554
    %v838 = vunpack.c.h.b16 %v554
    %v839 = vunpack.c.l.b16 %v555
    %v840 = vunpack.c.h.b16 %v555
    %v841 = vunpack.c.l.b16 %v556
    %v842 = vunpack.c.h.b16 %v556
    %v843 = vunpack.c.l.b16 %v557
    %v844 = vunpack.c.h.b16 %v557
    %v845 = vunpack.c.l.b16 %v558
    %v846 = vunpack.c.h.b16 %v558
    %v847 = vunpack.c.l.b16 %v559
    %v848 = vunpack.c.h.b16 %v559
    %v849 = vunpack.c.l.b16 %v560
    %v850 = vunpack.c.h.b16 %v560
    %v851 = vunpack.c.l.b16 %v561
    %v852 = vunpack.c.h.b16 %v561
    %v853 = vunpack.c.l.b16 %v562
    %v854 = vunpack.c.h.b16 %v562
    %v855 = vunpack.c.l.b16 %v563
    %v856 = vunpack.c.h.b16 %v563
    %v857 = vunpack.c.l.b16 %v564
    %v858 = vunpack.c.h.b16 %v564
    %v859 = vunpack.c.l.b16 %v565
    %v860 = vunpack.c.h.b16 %v565
    %v861 = vunpack.c.l.b16 %v566
    %v862 = vunpack.c.h.b16 %v566
    %v863 = vunpack.c.l.b16 %v567
    %v864 = vunpack.c.h.b16 %v567
    %v865 = vunpack.c.l.b16 %v568
    %v866 = vunpack.c.h.b16 %v568
    %v867 = vunpack.c.l.b16 %v569
    %v868 = vunpack.c.h.b16 %v569
    %v869 = vunpack.c.l.b16 %v570
    %v870 = vunpack.c.h.b16 %v570
    %v871 = vunpack.c.l.b16 %v571
    %v872 = vunpack.c.h.b16 %v571
    %v873 = vunpack.c.l.b16 %v572
    %v874 = vunpack.c.h.b16 %v572
    %v875 = vunpack.c.l.b16 %v573
    %v876 = vunpack.c.h.b16 %v573
    %v877 = vunpack.c.l.b16 %v574
    %v878 = vunpack.c.h.b16 %v574
    %v879 = vunpack.c.l.b16 %v575
    %v880 = vunpack.c.h.b16 %v575
    %v881 = vunpack.c.l.b16 %v576
    %v882 = vunpack.c.h.b16 %v576
    %v883 = vunpack.c.l.b16 %v577
    %v884 = vunpack.c.h.b16 %v577
    %v885 = vunpack.c.l.b16 %v578
    %v886 = vunpack.c.h.b16 %v578
    %v887 = vunpack.c.l.b16 %v579
    %v888 = vunpack.c.h.b16 %v579
    %v889 = vunpack.c.l.b16 %v580
    %v890 = vunpack.c.h.b16 %v580
    %v891 = vunpack.c.l.b16 %v581
    %v892 = vunpack.c.h.b16 %v581
    %v893 = vunpack.c.l.b16 %v582
    %v894 = vunpack.c.h.b16 %v582
    %v895 = vunpack.c.l.b16 %v583
    %v896 = vunpack.c.h.b16 %v583
    %v897 = vunpack.c.l.b16 %v584
    %v898 = vunpack.c.h.b16 %v584
    %v899 = vunpack.c.l.b16 %v585
    %v900 = vunpack.c.h.b16 %v585
    %v901 = vunpack.c.l.b16 %v586
    %v902 = vunpack.c.h.b16 %v586
    %v903 = vunpack.c.l.b16 %v587
    %v904 = vunpack.c.h.b16 %v587
    %v905 = vunpack.c.l.b16 %v588
    %v906 = vunpack.c.h.b16 %v588
    %v907 = vunpack.c.l.b16 %v589
    %v908 = vunpack.c.h.b16 %v589
    %v909 = vunpack.c.l.b16 %v590
    %v910 = vunpack.c.h.b16 %v590
    %v911 = vunpack.c.l.b16 %v591
    %v912 = vunpack.c.h.b16 %v591
    %v913 = vunpack.c.l.b16 %v592
    %v914 = vunpack.c.h.b16 %v592
    %v915 = vunpack.c.l.b16 %v593
    %v916 = vunpack.c.h.b16 %v593
    %v917 = vunpack.c.l.b16 %v594
    %v918 = vunpack.c.h.b16 %v594
    %v919 = vunpack.c.l.b16 %v595
    %v920 = vunpack.c.h.b16 %v595
    %v921 = vunpack.c.l.b16 %v596
    %v922 = vunpack.c.h.b16 %v596
    %v923 = vunpack.c.l.b16 %v597
    %v924 = vunpack.c.h.b16 %v597
    %v925 = vunpack.c.l.b16 %v598
    %v926 = vunpack.c.h.b16 %v598
    %v927 = vunpack.c.l.b16 %v599
    %v928 = vunpack.c.h.b16 %v599
    %v929 = vunpack.c.l.b16 %v600
    %v930 = vunpack.c.h.b16 %v600
    %v931 = vunpack.c.l.b16 %v601
    %v932 = vunpack.c.h.b16 %v601
    %v933 = vunpack.c.l.b16 %v602
    %v934 = vunpack.c.h.b16 %v602
    %v935 = vunpack.c.l.b16 %v603
    %v936 = vunpack.c.h.b16 %v603
    %v937 = vunpack.c.l.b16 %v604
    %v938 = vunpack.c.h.b16 %v604
    %v939 = vunpack.c.l.b16 %v605
    %v940 = vunpack.c.h.b16 %v605
    %v941 = vunpack.c.l.b16 %v606
    %v942 = vunpack.c.h.b16 %v606
    %v943 = vunpack.c.l.b16 %v607
    %v944 = vunpack.c.h.b16 %v607
    %v945 = vunpack.c.l.b16 %v608
    %v946 = vunpack.c.h.b16 %v608
    %v947 = vunpack.c.l.b16 %v609
    %v948 = vunpack.c.h.b16 %v609
    %v949 = vunpack.c.l.b16 %v610
    %v950 = vunpack.c.h.b16 %v610
    %v951 = vunpack.c.l.b16 %v611
    %v952 = vunpack.c.h.b16 %v611
    %v953 = vunpack.c.l.b16 %v612
    %v954 = vunpack.c.h.b16 %v612
    %v955 = vunpack.c.l.b16 %v613
    %v956 = vunpack.c.h.b16 %v613
    %v957 = vunpack.c.l.b16 %v614
    %v958 = vunpack.c.h.b16 %v614
    %v959 = vunpack.c.l.b16 %v615
    %v960 = vunpack.c.h.b16 %v615
    %v961 = vunpack.c.l.b16 %v616
    %v962 = vunpack.c.h.b16 %v616
    %v963 = vunpack.c.l.b16 %v617
    %v964 = vunpack.c.h.b16 %v617
    %v965 = vunpack.c.l.b16 %v618
    %v966 = vunpack.c.h.b16 %v618
    %v967 = vunpack.c.l.b16 %v619
    %v968 = vunpack.c.h.b16 %v619
    %v969 = vunpack.c.l.b16 %v620
    %v970 = vunpack.c.h.b16 %v620
    %v971 = vunpack.c.l.b16 %v621
    %v972 = vunpack.c.h.b16 %v621
    %v973 = vunpack.c.l.b16 %v622
    %v974 = vunpack.c.h.b16 %v622
    %v975 = vunpack.c.l.b16 %v623
    %v976 = vunpack.c.h.b16 %v623
    %v977 = vunpack.c.l.b16 %v624
    %v978 = vunpack.c.h.b16 %v624
    %v979 = vunpack.c.l.b16 %v625
    %v980 = vunpack.c.h.b16 %v625
    %v981 = vunpack.c.l.b16 %v626
    %v982 = vunpack.c.h.b16 %v626
    %v983 = vunpack.c.l.b16 %v627
    %v984 = vunpack.c.h.b16 %v627
    %v985 = vunpack.c.l.b16 %v628
    %v986 = vunpack.c.h.b16 %v628
    %v987 = vunpack.c.l.b16 %v629
    %v988 = vunpack.c.h.b16 %v629
    %v989 = vunpack.c.l.b16 %v630
    %v990 = vunpack.c.h.b16 %v630
    %v991 = vunpack.c.l.b16 %v631
    %v992 = vunpack.c.h.b16 %v631
    %v993 = vunpack.c.l.b16 %v632
    %v994 = vunpack.c.h.b16 %v632
    %v995 = vunpack.c.l.b16 %v633
    %v996 = vunpack.c.h.b16 %v633
    %v997 = vunpack.c.l.b16 %v634
    %v998 = vunpack.c.h.b16 %v634
    %v999 = vunpack.c.l.b16 %v635
    %v1000 = vunpack.c.h.b16 %v635
    %v1001 = vunpack.c.l.b16 %v636
    %v1002 = vunpack.c.h.b16 %v636
    %v1003 = vunpack.c.l.b16 %v637
    %v1004 = vunpack.c.h.b16 %v637
    %v1005 = vunpack.c.l.b16 %v638
    %v1006 = vunpack.c.h.b16 %v638
    %v1007 = vunpack.c.l.b16 %v639
    %v1008 = vunpack.c.h.b16 %v639
    %v1009 = vunpack.c.l.b16 %v640
    %v1010 = vunpack.c.h.b16 %v640
    %v1011 = vunpack.c.l.b16 %v641
    %v1012 = vunpack.c.h.b16 %v641
    %v1013 = vunpack.c.l.b16 %v642
    %v1014 = vunpack.c.h.b16 %v642
    %v1015 = vunpack.c.l.b16 %v643
    %v1016 = vunpack.c.h.b16 %v643
    %v1017 = vunpack.c.l.b16 %v644
    %v1018 = vunpack.c.h.b16 %v644
    %v1019 = vunpack.c.l.b16 %v645
    %v1020 = vunpack.c.h.b16 %v645
    %v1021 = vunpack.c.l.b16 %v646
    %v1022 = vunpack.c.h.b16 %v646
    %v1023 = vunpack.c.l.b16 %v647
    %v1024 = vunpack.c.h.b16 %v647
    %v1025 = vunpack.c.l.b16 %v648
    %v1026 = vunpack.c.h.b16 %v648
    %v1027 = vunpack.c.l.b16 %v649
    %v1028 = vunpack.c.h.b16 %v649
    %v1029 = vunpack.c.l.b16 %v650
    %v1030 = vunpack.c.h.b16 %v650
    %v1031 = vunpack.c.l.b16 %v651
    %v1032 = vunpack.c.h.b16 %v651
    %v1033 = vunpack.c.l.b16 %v652
    %v1034 = vunpack.c.h.b16 %v652
    %v1035 = vunpack.c.l.b16 %v653
    %v1036 = vunpack.c.h.b16 %v653
    %v1037 = vunpack.c.l.b16 %v654
    %v1038 = vunpack.c.h.b16 %v654
    %v1039 = vpack.c.b16 %v791, %v783
    %v1040 = vpack.c.b16 %v792, %v784
    %v1041 = vpack.c.b16 %v793, %v785
    %v1042 = vpack.c.b16 %v794, %v786
    %v1043 = vpack.c.b16 %v795, %v787
    %v1044 = vpack.c.b16 %v796, %v788
    %v1045 = vpack.c.b16 %v797, %v789
    %v1046 = vpack.c.b16 %v798, %v790
    %v1047 = vpack.c.b16 %v807, %v799
    %v1048 = vpack.c.b16 %v808, %v800
    %v1049 = vpack.c.b16 %v809, %v801
    %v1050 = vpack.c.b16 %v810, %v802
    %v1051 = vpack.c.b16 %v811, %v803
    %v1052 = vpack.c.b16 %v812, %v804
    %v1053 = vpack.c.b16 %v813, %v805
    %v1054 = vpack.c.b16 %v814, %v806
    %v1055 = vpack.c.b16 %v823, %v815
    %v1056 = vpack.c.b16 %v824, %v816
    %v1057 = vpack.c.b16 %v825, %v817
    %v1058 = vpack.c.b16 %v826, %v818
    %v1059 = vpack.c.b16 %v827, %v819
    %v1060 = vpack.c.b16 %v828, %v820
    %v1061 = vpack.c.b16 %v829, %v821
    %v1062 = vpack.c.b16 %v830, %v822
    %v1063 = vpack.c.b16 %v839, %v831
    %v1064 = vpack.c.b16 %v840, %v832
    %v1065 = vpack.c.b16 %v841, %v833
    %v1066 = vpack.c.b16 %v842, %v834
    %v1067 = vpack.c.b16 %v843, %v835
    %v1068 = vpack.c.b16 %v844, %v836
    %v1069 = vpack.c.b16 %v845, %v837
    %v1070 = vpack.c.b16 %v846, %v838
    %v1071 = vpack.c.b16 %v855, %v847
    %v1072 = vpack.c.b16 %v856, %v848
    %v1073 = vpack.c.b16 %v857, %v849
    %v1074 = vpack.c.b16 %v858, %v850
    %v1075 = vpack.c.b16 %v859, %v851
    %v1076 = vpack.c.b16 %v860, %v852
    %v1077 = vpack.c.b16 %v861, %v853
    %v1078 = vpack.c.b16 %v862, %v854
    %v1079 = vpack.c.b16 %v871, %v863
    %v1080 = vpack.c.b16 %v872, %v864
    %v1081 = vpack.c.b16 %v873, %v865
    %v1082 = vpack.c.b16 %v874, %v866
    %v1083 = vpack.c.b16 %v875, %v867
    %v1084 = vpack.c.b16 %v876, %v868
    %v1085 = vpack.c.b16 %v877, %v869
    %v1086 = vpack.c.b16 %v878, %v870
    %v1087 = vpack.c.b16 %v887, %v879
    %v1088 = vpack.c.b16 %v888, %v880
    %v1089 = vpack.c.b16 %v889, %v881
    %v1090 = vpack.c.b16 %v890, %v882
    %v1091 = vpack.c.b16 %v891, %v883
    %v1092 = vpack.c.b16 %v892, %v884
    %v1093 = vpack.c.b16 %v893, %v885
    %v1094 = vpack.c.b16 %v894, %v886
    %v1095 = vpack.c.b16 %v903, %v895
    %v1096 = vpack.c.b16 %v904, %v896
    %v1097 = vpack.c.b16 %v905, %v897
    %v1098 = vpack.c.b16 %v906, %v898
    %v1099 = vpack.c.b16 %v907, %v899
    %v1100 = vpack.c.b16 %v908, %v900
    %v1101 = vpack.c.b16 %v909, %v901
    %v1102 = vpack.c.b16 %v910, %v902
    %v1103 = vpack.c.b16 %v919, %v911
    %v1104 = vpack.c.b16 %v920, %v912
    %v1105 = vpack.c.b16 %v921, %v913
    %v1106 = vpack.c.b16 %v922, %v914
    %v1107 = vpack.c.b16 %v923, %v915
    %v1108 = vpack.c.b16 %v924, %v916
    %v1109 = vpack.c.b16 %v925, %v917
    %v1110 = vpack.c.b16 %v926, %v918
    %v1111 = vpack.c.b16 %v935, %v927
    %v1112 = vpack.c.b16 %v936, %v928
    %v1113 = vpack.c.b16 %v937, %v929
    %v1114 = vpack.c.b16 %v938, %v930
    %v1115 = vpack.c.b16 %v939, %v931
    %v1116 = vpack.c.b16 %v940, %v932
    %v1117 = vpack.c.b16 %v941, %v933
    %v1118 = vpack.c.b16 %v942, %v934
    %v1119 = vpack.c.b16 %v951, %v943
    %v1120 = vpack.c.b16 %v952, %v944
    %v1121 = vpack.c.b16 %v953, %v945
    %v1122 = vpack.c.b16 %v954, %v946
    %v1123 = vpack.c.b16 %v955, %v947
    %v1124 = vpack.c.b16 %v956, %v948
    %v1125 = vpack.c.b16 %v957, %v949
    %v1126 = vpack.c.b16 %v958, %v950
    %v1127 = vpack.c.b16 %v967, %v959
    %v1128 = vpack.c.b16 %v968, %v960
    %v1129 = vpack.c.b16 %v969, %v961
    %v1130 = vpack.c.b16 %v970, %v962
    %v1131 = vpack.c.b16 %v971, %v963
    %v1132 = vpack.c.b16 %v972, %v964
    %v1133 = vpack.c.b16 %v973, %v965
    %v1134 = vpack.c.b16 %v974, %v966
    %v1135 = vpack.c.b16 %v983, %v975
    %v1136 = vpack.c.b16 %v984, %v976
    %v1137 = vpack.c.b16 %v985, %v977
    %v1138 = vpack.c.b16 %v986, %v978
    %v1139 = vpack.c.b16 %v987, %v979
    %v1140 = vpack.c.b16 %v988, %v980
    %v1141 = vpack.c.b16 %v989, %v981
    %v1142 = vpack.c.b16 %v990, %v982
    %v1143 = vpack.c.b16 %v999, %v991
    %v1144 = vpack.c.b16 %v1000, %v992
    %v1145 = vpack.c.b16 %v1001, %v993
    %v1146 = vpack.c.b16 %v1002, %v994
    %v1147 = vpack.c.b16 %v1003, %v995
    %v1148 = vpack.c.b16 %v1004, %v996
    %v1149 = vpack.c.b16 %v1005, %v997
    %v1150 = vpack.c.b16 %v1006, %v998
    %v1151 = vpack.c.b16 %v1015, %v1007
    %v1152 = vpack.c.b16 %v1016, %v1008
    %v1153 = vpack.c.b16 %v1017, %v1009
    %v1154 = vpack.c.b16 %v1018, %v1010
    %v1155 = vpack.c.b16 %v1019, %v1011
    %v1156 = vpack.c.b16 %v1020, %v1012
    %v1157 = vpack.c.b16 %v1021, %v1013
    %v1158 = vpack.c.b16 %v1022, %v1014
    %v1159 = vpack.c.b16 %v1031, %v1023
    %v1160 = vpack.c.b16 %v1032, %v1024
    %v1161 = vpack.c.b16 %v1033, %v1025
    %v1162 = vpack.c.b16 %v1034, %v1026
    %v1163 = vpack.c.b16 %v1035, %v1027
    %v1164 = vpack.c.b16 %v1036, %v1028
    %v1165 = vpack.c.b16 %v1037, %v1029
    %v1166 = vpack.c.b16 %v1038, %v1030
    %1295 = vmatpush.bf16.msra.mxu0 %v1095
    %1296 = vmatpush.bf16.msra.mxu0 %v1087
    %1297 = vmatpush.bf16.msra.mxu0 %v1079
    %1298 = vmatpush.bf16.msra.mxu0 %v1071
    %1299 = vmatpush.bf16.msra.mxu0 %v1063
    %1300 = vmatpush.bf16.msra.mxu0 %v1055
    %1301 = vmatpush.bf16.msra.mxu0 %v1047
    %1302 = vmatpush.bf16.msra.mxu0 %v1039
    %1303 = vmatmul.bf16.gmra.mxu0 %v525
    %v1304 = vpop.f32.mrf.mxu0
    %v1305 = vadd.f32 0.0, %v1304
    %v1306 = vpop.f32.mrf.mxu0
    %1307 = vdwg.mxu0
    %1308 = vmatpush.bf16.msra.mxu0 %v1159
    %1309 = vmatpush.bf16.msra.mxu0 %v1151
    %1310 = vmatpush.bf16.msra.mxu0 %v1143
    %1311 = vmatpush.bf16.msra.mxu0 %v1135
    %1312 = vmatpush.bf16.msra.mxu0 %v1127
    %1313 = vmatpush.bf16.msra.mxu0 %v1119
    %1314 = vmatpush.bf16.msra.mxu0 %v1111
    %1315 = vmatpush.bf16.msra.mxu0 %v1103
    %1316 = vmatmul.bf16.gmra.mxu0 %v526
    %v1317 = vpop.f32.mrf.mxu0
    %v1318 = vadd.f32 %v1305, %v1317
    %v1319 = vpop.f32.mrf.mxu0
    %1320 = vdwg.mxu0
    %1321 = vmatpush.bf16.msra.mxu0 %v1096
    %1322 = vmatpush.bf16.msra.mxu0 %v1088
    %1323 = vmatpush.bf16.msra.mxu0 %v1080
    %1324 = vmatpush.bf16.msra.mxu0 %v1072
    %1325 = vmatpush.bf16.msra.mxu0 %v1064
    %1326 = vmatpush.bf16.msra.mxu0 %v1056
    %1327 = vmatpush.bf16.msra.mxu0 %v1048
    %1328 = vmatpush.bf16.msra.mxu0 %v1040
    %1329 = vmatmul.bf16.gmra.mxu0 %v525
    %v1330 = vpop.f32.mrf.mxu0
    %v1331 = vadd.f32 0.0, %v1330
    %v1332 = vpop.f32.mrf.mxu0
    %1333 = vdwg.mxu0
    %1334 = vmatpush.bf16.msra.mxu0 %v1160
    %1335 = vmatpush.bf16.msra.mxu0 %v1152
    %1336 = vmatpush.bf16.msra.mxu0 %v1144
    %1337 = vmatpush.bf16.msra.mxu0 %v1136
    %1338 = vmatpush.bf16.msra.mxu0 %v1128
    %1339 = vmatpush.bf16.msra.mxu0 %v1120
    %1340 = vmatpush.bf16.msra.mxu0 %v1112
    %1341 = vmatpush.bf16.msra.mxu0 %v1104
    %1342 = vmatmul.bf16.gmra.mxu0 %v526
    %v1343 = vpop.f32.mrf.mxu0
    %v1344 = vadd.f32 %v1331, %v1343
    %v1345 = vpop.f32.mrf.mxu0
    %1346 = vdwg.mxu0
    %1347 = vmatpush.bf16.msra.mxu0 %v1097
    %1348 = vmatpush.bf16.msra.mxu0 %v1089
    %1349 = vmatpush.bf16.msra.mxu0 %v1081
    %1350 = vmatpush.bf16.msra.mxu0 %v1073
    %1351 = vmatpush.bf16.msra.mxu0 %v1065
    %1352 = vmatpush.bf16.msra.mxu0 %v1057
    %1353 = vmatpush.bf16.msra.mxu0 %v1049
    %1354 = vmatpush.bf16.msra.mxu0 %v1041
    %1355 = vmatmul.bf16.gmra.mxu0 %v525
    %v1356 = vpop.f32.mrf.mxu0
    %v1357 = vadd.f32 0.0, %v1356
    %v1358 = vpop.f32.mrf.mxu0
    %1359 = vdwg.mxu0
    %1360 = vmatpush.bf16.msra.mxu0 %v1161
    %1361 = vmatpush.bf16.msra.mxu0 %v1153
    %1362 = vmatpush.bf16.msra.mxu0 %v1145
    %1363 = vmatpush.bf16.msra.mxu0 %v1137
    %1364 = vmatpush.bf16.msra.mxu0 %v1129
    %1365 = vmatpush.bf16.msra.mxu0 %v1121
    %1366 = vmatpush.bf16.msra.mxu0 %v1113
    %1367 = vmatpush.bf16.msra.mxu0 %v1105
    %1368 = vmatmul.bf16.gmra.mxu0 %v526
    %v1369 = vpop.f32.mrf.mxu0
    %v1370 = vadd.f32 %v1357, %v1369
    %v1371 = vpop.f32.mrf.mxu0
    %1372 = vdwg.mxu0
    %1373 = vmatpush.bf16.msra.mxu0 %v1098
    %1374 = vmatpush.bf16.msra.mxu0 %v1090
    %1375 = vmatpush.bf16.msra.mxu0 %v1082
    %1376 = vmatpush.bf16.msra.mxu0 %v1074
    %1377 = vmatpush.bf16.msra.mxu0 %v1066
    %1378 = vmatpush.bf16.msra.mxu0 %v1058
    %1379 = vmatpush.bf16.msra.mxu0 %v1050
    %1380 = vmatpush.bf16.msra.mxu0 %v1042
    %1381 = vmatmul.bf16.gmra.mxu0 %v525
    %v1382 = vpop.f32.mrf.mxu0
    %v1383 = vadd.f32 0.0, %v1382
    %v1384 = vpop.f32.mrf.mxu0
    %1385 = vdwg.mxu0
    %1386 = vmatpush.bf16.msra.mxu0 %v1162
    %1387 = vmatpush.bf16.msra.mxu0 %v1154
    %1388 = vmatpush.bf16.msra.mxu0 %v1146
    %1389 = vmatpush.bf16.msra.mxu0 %v1138
    %1390 = vmatpush.bf16.msra.mxu0 %v1130
    %1391 = vmatpush.bf16.msra.mxu0 %v1122
    %1392 = vmatpush.bf16.msra.mxu0 %v1114
    %1393 = vmatpush.bf16.msra.mxu0 %v1106
    %1394 = vmatmul.bf16.gmra.mxu0 %v526
    %v1395 = vpop.f32.mrf.mxu0
    %v1396 = vadd.f32 %v1383, %v1395
    %v1397 = vpop.f32.mrf.mxu0
    %1398 = vdwg.mxu0
    %1399 = vmatpush.bf16.msra.mxu0 %v1099
    %1400 = vmatpush.bf16.msra.mxu0 %v1091
    %1401 = vmatpush.bf16.msra.mxu0 %v1083
    %1402 = vmatpush.bf16.msra.mxu0 %v1075
    %1403 = vmatpush.bf16.msra.mxu0 %v1067
    %1404 = vmatpush.bf16.msra.mxu0 %v1059
    %1405 = vmatpush.bf16.msra.mxu0 %v1051
    %1406 = vmatpush.bf16.msra.mxu0 %v1043
    %1407 = vmatmul.bf16.gmra.mxu0 %v525
    %v1408 = vpop.f32.mrf.mxu0
    %v1409 = vadd.f32 0.0, %v1408
    %v1410 = vpop.f32.mrf.mxu0
    %1411 = vdwg.mxu0
    %1412 = vmatpush.bf16.msra.mxu0 %v1163
    %1413 = vmatpush.bf16.msra.mxu0 %v1155
    %1414 = vmatpush.bf16.msra.mxu0 %v1147
    %1415 = vmatpush.bf16.msra.mxu0 %v1139
    %1416 = vmatpush.bf16.msra.mxu0 %v1131
    %1417 = vmatpush.bf16.msra.mxu0 %v1123
    %1418 = vmatpush.bf16.msra.mxu0 %v1115
    %1419 = vmatpush.bf16.msra.mxu0 %v1107
    %1420 = vmatmul.bf16.gmra.mxu0 %v526
    %v1421 = vpop.f32.mrf.mxu0
    %v1422 = vadd.f32 %v1409, %v1421
    %v1423 = vpop.f32.mrf.mxu0
    %1424 = vdwg.mxu0
    %1425 = vmatpush.bf16.msra.mxu0 %v1100
    %1426 = vmatpush.bf16.msra.mxu0 %v1092
    %1427 = vmatpush.bf16.msra.mxu0 %v1084
    %1428 = vmatpush.bf16.msra.mxu0 %v1076
    %1429 = vmatpush.bf16.msra.mxu0 %v1068
    %1430 = vmatpush.bf16.msra.mxu0 %v1060
    %1431 = vmatpush.bf16.msra.mxu0 %v1052
    %1432 = vmatpush.bf16.msra.mxu0 %v1044
    %1433 = vmatmul.bf16.gmra.mxu0 %v525
    %v1434 = vpop.f32.mrf.mxu0
    %v1435 = vadd.f32 0.0, %v1434
    %v1436 = vpop.f32.mrf.mxu0
    %1437 = vdwg.mxu0
    %1438 = vmatpush.bf16.msra.mxu0 %v1164
    %1439 = vmatpush.bf16.msra.mxu0 %v1156
    %1440 = vmatpush.bf16.msra.mxu0 %v1148
    %1441 = vmatpush.bf16.msra.mxu0 %v1140
    %1442 = vmatpush.bf16.msra.mxu0 %v1132
    %1443 = vmatpush.bf16.msra.mxu0 %v1124
    %1444 = vmatpush.bf16.msra.mxu0 %v1116
    %1445 = vmatpush.bf16.msra.mxu0 %v1108
    %1446 = vmatmul.bf16.gmra.mxu0 %v526
    %v1447 = vpop.f32.mrf.mxu0
    %v1448 = vadd.f32 %v1435, %v1447
    %v1449 = vpop.f32.mrf.mxu0
    %1450 = vdwg.mxu0
    %1451 = vmatpush.bf16.msra.mxu0 %v1101
    %1452 = vmatpush.bf16.msra.mxu0 %v1093
    %1453 = vmatpush.bf16.msra.mxu0 %v1085
    %1454 = vmatpush.bf16.msra.mxu0 %v1077
    %1455 = vmatpush.bf16.msra.mxu0 %v1069
    %1456 = vmatpush.bf16.msra.mxu0 %v1061
    %1457 = vmatpush.bf16.msra.mxu0 %v1053
    %1458 = vmatpush.bf16.msra.mxu0 %v1045
    %1459 = vmatmul.bf16.gmra.mxu0 %v525
    %v1460 = vpop.f32.mrf.mxu0
    %v1461 = vadd.f32 0.0, %v1460
    %v1462 = vpop.f32.mrf.mxu0
    %1463 = vdwg.mxu0
    %1464 = vmatpush.bf16.msra.mxu0 %v1165
    %1465 = vmatpush.bf16.msra.mxu0 %v1157
    %1466 = vmatpush.bf16.msra.mxu0 %v1149
    %1467 = vmatpush.bf16.msra.mxu0 %v1141
    %1468 = vmatpush.bf16.msra.mxu0 %v1133
    %1469 = vmatpush.bf16.msra.mxu0 %v1125
    %1470 = vmatpush.bf16.msra.mxu0 %v1117
    %1471 = vmatpush.bf16.msra.mxu0 %v1109
    %1472 = vmatmul.bf16.gmra.mxu0 %v526
    %v1473 = vpop.f32.mrf.mxu0
    %v1474 = vadd.f32 %v1461, %v1473
    %v1475 = vpop.f32.mrf.mxu0
    %1476 = vdwg.mxu0
    %1477 = vmatpush.bf16.msra.mxu0 %v1102
    %1478 = vmatpush.bf16.msra.mxu0 %v1094
    %1479 = vmatpush.bf16.msra.mxu0 %v1086
    %1480 = vmatpush.bf16.msra.mxu0 %v1078
    %1481 = vmatpush.bf16.msra.mxu0 %v1070
    %1482 = vmatpush.bf16.msra.mxu0 %v1062
    %1483 = vmatpush.bf16.msra.mxu0 %v1054
    %1484 = vmatpush.bf16.msra.mxu0 %v1046
    %1485 = vmatmul.bf16.gmra.mxu0 %v525
    %v1486 = vpop.f32.mrf.mxu0
    %v1487 = vadd.f32 0.0, %v1486
    %v1488 = vpop.f32.mrf.mxu0
    %1489 = vdwg.mxu0
    %1490 = vmatpush.bf16.msra.mxu0 %v1166
    %1491 = vmatpush.bf16.msra.mxu0 %v1158
    %1492 = vmatpush.bf16.msra.mxu0 %v1150
    %1493 = vmatpush.bf16.msra.mxu0 %v1142
    %1494 = vmatpush.bf16.msra.mxu0 %v1134
    %1495 = vmatpush.bf16.msra.mxu0 %v1126
    %1496 = vmatpush.bf16.msra.mxu0 %v1118
    %1497 = vmatpush.bf16.msra.mxu0 %v1110
    %1498 = vmatmul.bf16.gmra.mxu0 %v526
    %v1499 = vpop.f32.mrf.mxu0
    %v1500 = vadd.f32 %v1487, %v1499
    %v1501 = vpop.f32.mrf.mxu0
    %1502 = vdwg.mxu0
    %v1503 = vadd.f32 %v517, %v1318
    %v1504 = vadd.f32 %v518, %v1344
    %v1505 = vadd.f32 %v519, %v1370
    %v1506 = vadd.f32 %v520, %v1396
    %v1507 = vadd.f32 %v521, %v1422
    %v1508 = vadd.f32 %v522, %v1448
    %v1509 = vadd.f32 %v523, %v1474
    %v1510 = vadd.f32 %v524, %v1500
    %v1511 = vmul.f32 %v1503, 0.5
    %v1512 = vmul.f32 %v1504, 0.5
    %v1513 = vtanh.pop %v1511
    %v1514 = vtanh.pop %v1512
    %v1515 = vmul.f32 %v1513, 0.5
    %v1516 = vmul.f32 %v1514, 0.5
    %v1517 = vadd.f32 %v1515, 0.5
    %v1518 = vadd.f32 %v1516, 0.5
    %v1519 = vmul.f32 %v1505, 0.5
    %v1520 = vmul.f32 %v1506, 0.5
    %v1521 = vtanh.pop %v1519
    %v1522 = vtanh.pop %v1520
    %v1523 = vmul.f32 %v1521, 0.5
    %v1524 = vmul.f32 %v1522, 0.5
    %v1525 = vadd.f32 %v1523, 0.5
    %v1526 = vadd.f32 %v1524, 0.5
    %v1527 = vtanh.pop %v1507
    %v1528 = vtanh.pop %v1508
    %v1529 = vmul.f32 %v1509, 0.5
    %v1530 = vmul.f32 %v1510, 0.5
    %v1531 = vtanh.pop %v1529
    %v1532 = vtanh.pop %v1530
    %v1533 = vmul.f32 %v1531, 0.5
    %v1534 = vmul.f32 %v1532, 0.5
    %v1535 = vadd.f32 %v1533, 0.5
    %v1536 = vadd.f32 %v1534, 0.5
    %v1537 = vmul.f32 %v1525, %v512
    %v1538 = vmul.f32 %v1526, %v513
    %v1539 = vmul.f32 %v1517, %v1527
    %v1540 = vmul.f32 %v1518, %v1528
    %v1541 = vadd.f32 %v1537, %v1539
    %v1542 = vadd.f32 %v1538, %v1540
    %v1543 = vtanh.pop %v1541
    %v1544 = vtanh.pop %v1542
    %v1545 = vmul.f32 %v1535, %v1543
    %v1546 = vmul.f32 %v1536, %v1544
    %s1547 = smul.u32 1, 8
    %s1548 = smul.addr %s1547, 8
    %s1549 = scalar_lea.vmem [#allocation2], %s1548
    %v1550 = vld [vmem:[%s1549] sm:$0xff]
    %v1551 = vld [vmem:[%s1549 + $0x8] sm:$0xff]
    %v1552 = vld [vmem:[%s1549 + $0x10] sm:$0xff]
    %v1553 = vld [vmem:[%s1549 + $0x18] sm:$0xff]
    %v1554 = vld [vmem:[%s1549 + $0x20] sm:$0xff]
    %v1555 = vld [vmem:[%s1549 + $0x28] sm:$0xff]
    %v1556 = vld [vmem:[%s1549 + $0x30] sm:$0xff]
    %v1557 = vld [vmem:[%s1549 + $0x38] sm:$0xff]
    %v1558 = vpack.c.bf16 %v1545, %v1545
    %v1559 = vpack.c.bf16 %v1546, %v1546
    %1560 = vmatpush.bf16.msra.mxu0 %v1095
    %1561 = vmatpush.bf16.msra.mxu0 %v1087
    %1562 = vmatpush.bf16.msra.mxu0 %v1079
    %1563 = vmatpush.bf16.msra.mxu0 %v1071
    %1564 = vmatpush.bf16.msra.mxu0 %v1063
    %1565 = vmatpush.bf16.msra.mxu0 %v1055
    %1566 = vmatpush.bf16.msra.mxu0 %v1047
    %1567 = vmatpush.bf16.msra.mxu0 %v1039
    %1568 = vmatmul.bf16.gmra.mxu0 %v1558
    %v1569 = vpop.f32.mrf.mxu0
    %v1570 = vadd.f32 0.0, %v1569
    %v1571 = vpop.f32.mrf.mxu0
    %1572 = vdwg.mxu0
    %1573 = vmatpush.bf16.msra.mxu0 %v1159
    %1574 = vmatpush.bf16.msra.mxu0 %v1151
    %1575 = vmatpush.bf16.msra.mxu0 %v1143
    %1576 = vmatpush.bf16.msra.mxu0 %v1135
    %1577 = vmatpush.bf16.msra.mxu0 %v1127
    %1578 = vmatpush.bf16.msra.mxu0 %v1119
    %1579 = vmatpush.bf16.msra.mxu0 %v1111
    %1580 = vmatpush.bf16.msra.mxu0 %v1103
    %1581 = vmatmul.bf16.gmra.mxu0 %v1559
    %v1582 = vpop.f32.mrf.mxu0
    %v1583 = vadd.f32 %v1570, %v1582
    %v1584 = vpop.f32.mrf.mxu0
    %1585 = vdwg.mxu0
    %1586 = vmatpush.bf16.msra.mxu0 %v1096
    %1587 = vmatpush.bf16.msra.mxu0 %v1088
    %1588 = vmatpush.bf16.msra.mxu0 %v1080
    %1589 = vmatpush.bf16.msra.mxu0 %v1072
    %1590 = vmatpush.bf16.msra.mxu0 %v1064
    %1591 = vmatpush.bf16.msra.mxu0 %v1056
    %1592 = vmatpush.bf16.msra.mxu0 %v1048
    %1593 = vmatpush.bf16.msra.mxu0 %v1040
    %1594 = vmatmul.bf16.gmra.mxu0 %v1558
    %v1595 = vpop.f32.mrf.mxu0
    %v1596 = vadd.f32 0.0, %v1595
    %v1597 = vpop.f32.mrf.mxu0
    %1598 = vdwg.mxu0
    %1599 = vmatpush.bf16.msra.mxu0 %v1160
    %1600 = vmatpush.bf16.msra.mxu0 %v1152
    %1601 = vmatpush.bf16.msra.mxu0 %v1144
    %1602 = vmatpush.bf16.msra.mxu0 %v1136
    %1603 = vmatpush.bf16.msra.mxu0 %v1128
    %1604 = vmatpush.bf16.msra.mxu0 %v1120
    %1605 = vmatpush.bf16.msra.mxu0 %v1112
    %1606 = vmatpush.bf16.msra.mxu0 %v1104
    %1607 = vmatmul.bf16.gmra.mxu0 %v1559
    %v1608 = vpop.f32.mrf.mxu0
    %v1609 = vadd.f32 %v1596, %v1608
    %v1610 = vpop.f32.mrf.mxu0
    %1611 = vdwg.mxu0
    %1612 = vmatpush.bf16.msra.mxu0 %v1097
    %1613 = vmatpush.bf16.msra.mxu0 %v1089
    %1614 = vmatpush.bf16.msra.mxu0 %v1081
    %1615 = vmatpush.bf16.msra.mxu0 %v1073
    %1616 = vmatpush.bf16.msra.mxu0 %v1065
    %1617 = vmatpush.bf16.msra.mxu0 %v1057
    %1618 = vmatpush.bf16.msra.mxu0 %v1049
    %1619 = vmatpush.bf16.msra.mxu0 %v1041
    %1620 = vmatmul.bf16.gmra.mxu0 %v1558
    %v1621 = vpop.f32.mrf.mxu0
    %v1622 = vadd.f32 0.0, %v1621
    %v1623 = vpop.f32.mrf.mxu0
    %1624 = vdwg.mxu0
    %1625 = vmatpush.bf16.msra.mxu0 %v1161
    %1626 = vmatpush.bf16.msra.mxu0 %v1153
    %1627 = vmatpush.bf16.msra.mxu0 %v1145
    %1628 = vmatpush.bf16.msra.mxu0 %v1137
    %1629 = vmatpush.bf16.msra.mxu0 %v1129
    %1630 = vmatpush.bf16.msra.mxu0 %v1121
    %1631 = vmatpush.bf16.msra.mxu0 %v1113
    %1632 = vmatpush.bf16.msra.mxu0 %v1105
    %1633 = vmatmul.bf16.gmra.mxu0 %v1559
    %v1634 = vpop.f32.mrf.mxu0
    %v1635 = vadd.f32 %v1622, %v1634
    %v1636 = vpop.f32.mrf.mxu0
    %1637 = vdwg.mxu0
    %1638 = vmatpush.bf16.msra.mxu0 %v1098
    %1639 = vmatpush.bf16.msra.mxu0 %v1090
    %1640 = vmatpush.bf16.msra.mxu0 %v1082
    %1641 = vmatpush.bf16.msra.mxu0 %v1074
    %1642 = vmatpush.bf16.msra.mxu0 %v1066
    %1643 = vmatpush.bf16.msra.mxu0 %v1058
    %1644 = vmatpush.bf16.msra.mxu0 %v1050
    %1645 = vmatpush.bf16.msra.mxu0 %v1042
    %1646 = vmatmul.bf16.gmra.mxu0 %v1558
    %v1647 = vpop.f32.mrf.mxu0
    %v1648 = vadd.f32 0.0, %v1647
    %v1649 = vpop.f32.mrf.mxu0
    %1650 = vdwg.mxu0
    %1651 = vmatpush.bf16.msra.mxu0 %v1162
    %1652 = vmatpush.bf16.msra.mxu0 %v1154
    %1653 = vmatpush.bf16.msra.mxu0 %v1146
    %1654 = vmatpush.bf16.msra.mxu0 %v1138
    %1655 = vmatpush.bf16.msra.mxu0 %v1130
    %1656 = vmatpush.bf16.msra.mxu0 %v1122
    %1657 = vmatpush.bf16.msra.mxu0 %v1114
    %1658 = vmatpush.bf16.msra.mxu0 %v1106
    %1659 = vmatmul.bf16.gmra.mxu0 %v1559
    %v1660 = vpop.f32.mrf.mxu0
    %v1661 = vadd.f32 %v1648, %v1660
    %v1662 = vpop.f32.mrf.mxu0
    %1663 = vdwg.mxu0
    %1664 = vmatpush.bf16.msra.mxu0 %v1099
    %1665 = vmatpush.bf16.msra.mxu0 %v1091
    %1666 = vmatpush.bf16.msra.mxu0 %v1083
    %1667 = vmatpush.bf16.msra.mxu0 %v1075
    %1668 = vmatpush.bf16.msra.mxu0 %v1067
    %1669 = vmatpush.bf16.msra.mxu0 %v1059
    %1670 = vmatpush.bf16.msra.mxu0 %v1051
    %1671 = vmatpush.bf16.msra.mxu0 %v1043
    %1672 = vmatmul.bf16.gmra.mxu0 %v1558
    %v1673 = vpop.f32.mrf.mxu0
    %v1674 = vadd.f32 0.0, %v1673
    %v1675 = vpop.f32.mrf.mxu0
    %1676 = vdwg.mxu0
    %1677 = vmatpush.bf16.msra.mxu0 %v1163
    %1678 = vmatpush.bf16.msra.mxu0 %v1155
    %1679 = vmatpush.bf16.msra.mxu0 %v1147
    %1680 = vmatpush.bf16.msra.mxu0 %v1139
    %1681 = vmatpush.bf16.msra.mxu0 %v1131
    %1682 = vmatpush.bf16.msra.mxu0 %v1123
    %1683 = vmatpush.bf16.msra.mxu0 %v1115
    %1684 = vmatpush.bf16.msra.mxu0 %v1107
    %1685 = vmatmul.bf16.gmra.mxu0 %v1559
    %v1686 = vpop.f32.mrf.mxu0
    %v1687 = vadd.f32 %v1674, %v1686
    %v1688 = vpop.f32.mrf.mxu0
    %1689 = vdwg.mxu0
    %1690 = vmatpush.bf16.msra.mxu0 %v1100
    %1691 = vmatpush.bf16.msra.mxu0 %v1092
    %1692 = vmatpush.bf16.msra.mxu0 %v1084
    %1693 = vmatpush.bf16.msra.mxu0 %v1076
    %1694 = vmatpush.bf16.msra.mxu0 %v1068
    %1695 = vmatpush.bf16.msra.mxu0 %v1060
    %1696 = vmatpush.bf16.msra.mxu0 %v1052
    %1697 = vmatpush.bf16.msra.mxu0 %v1044
    %1698 = vmatmul.bf16.gmra.mxu0 %v1558
    %v1699 = vpop.f32.mrf.mxu0
    %v1700 = vadd.f32 0.0, %v1699
    %v1701 = vpop.f32.mrf.mxu0
    %1702 = vdwg.mxu0
    %1703 = vmatpush.bf16.msra.mxu0 %v1164
    %1704 = vmatpush.bf16.msra.mxu0 %v1156
    %1705 = vmatpush.bf16.msra.mxu0 %v1148
    %1706 = vmatpush.bf16.msra.mxu0 %v1140
    %1707 = vmatpush.bf16.msra.mxu0 %v1132
    %1708 = vmatpush.bf16.msra.mxu0 %v1124
    %1709 = vmatpush.bf16.msra.mxu0 %v1116
    %1710 = vmatpush.bf16.msra.mxu0 %v1108
    %1711 = vmatmul.bf16.gmra.mxu0 %v1559
    %v1712 = vpop.f32.mrf.mxu0
    %v1713 = vadd.f32 %v1700, %v1712
    %v1714 = vpop.f32.mrf.mxu0
    %1715 = vdwg.mxu0
    %1716 = vmatpush.bf16.msra.mxu0 %v1101
    %1717 = vmatpush.bf16.msra.mxu0 %v1093
    %1718 = vmatpush.bf16.msra.mxu0 %v1085
    %1719 = vmatpush.bf16.msra.mxu0 %v1077
    %1720 = vmatpush.bf16.msra.mxu0 %v1069
    %1721 = vmatpush.bf16.msra.mxu0 %v1061
    %1722 = vmatpush.bf16.msra.mxu0 %v1053
    %1723 = vmatpush.bf16.msra.mxu0 %v1045
    %1724 = vmatmul.bf16.gmra.mxu0 %v1558
    %v1725 = vpop.f32.mrf.mxu0
    %v1726 = vadd.f32 0.0, %v1725
    %v1727 = vpop.f32.mrf.mxu0
    %1728 = vdwg.mxu0
    %1729 = vmatpush.bf16.msra.mxu0 %v1165
    %1730 = vmatpush.bf16.msra.mxu0 %v1157
    %1731 = vmatpush.bf16.msra.mxu0 %v1149
    %1732 = vmatpush.bf16.msra.mxu0 %v1141
    %1733 = vmatpush.bf16.msra.mxu0 %v1133
    %1734 = vmatpush.bf16.msra.mxu0 %v1125
    %1735 = vmatpush.bf16.msra.mxu0 %v1117
    %1736 = vmatpush.bf16.msra.mxu0 %v1109
    %1737 = vmatmul.bf16.gmra.mxu0 %v1559
    %v1738 = vpop.f32.mrf.mxu0
    %v1739 = vadd.f32 %v1726, %v1738
    %v1740 = vpop.f32.mrf.mxu0
    %1741 = vdwg.mxu0
    %1742 = vmatpush.bf16.msra.mxu0 %v1102
    %1743 = vmatpush.bf16.msra.mxu0 %v1094
    %1744 = vmatpush.bf16.msra.mxu0 %v1086
    %1745 = vmatpush.bf16.msra.mxu0 %v1078
    %1746 = vmatpush.bf16.msra.mxu0 %v1070
    %1747 = vmatpush.bf16.msra.mxu0 %v1062
    %1748 = vmatpush.bf16.msra.mxu0 %v1054
    %1749 = vmatpush.bf16.msra.mxu0 %v1046
    %1750 = vmatmul.bf16.gmra.mxu0 %v1558
    %v1751 = vpop.f32.mrf.mxu0
    %v1752 = vadd.f32 0.0, %v1751
    %v1753 = vpop.f32.mrf.mxu0
    %1754 = vdwg.mxu0
    %1755 = vmatpush.bf16.msra.mxu0 %v1166
    %1756 = vmatpush.bf16.msra.mxu0 %v1158
    %1757 = vmatpush.bf16.msra.mxu0 %v1150
    %1758 = vmatpush.bf16.msra.mxu0 %v1142
    %1759 = vmatpush.bf16.msra.mxu0 %v1134
    %1760 = vmatpush.bf16.msra.mxu0 %v1126
    %1761 = vmatpush.bf16.msra.mxu0 %v1118
    %1762 = vmatpush.bf16.msra.mxu0 %v1110
    %1763 = vmatmul.bf16.gmra.mxu0 %v1559
    %v1764 = vpop.f32.mrf.mxu0
    %v1765 = vadd.f32 %v1752, %v1764
    %v1766 = vpop.f32.mrf.mxu0
    %1767 = vdwg.mxu0
    %v1768 = vadd.f32 %v1550, %v1583
    %v1769 = vadd.f32 %v1551, %v1609
    %v1770 = vadd.f32 %v1552, %v1635
    %v1771 = vadd.f32 %v1553, %v1661
    %v1772 = vadd.f32 %v1554, %v1687
    %v1773 = vadd.f32 %v1555, %v1713
    %v1774 = vadd.f32 %v1556, %v1739
    %v1775 = vadd.f32 %v1557, %v1765
    %v1776 = vmul.f32 %v1768, 0.5
    %v1777 = vmul.f32 %v1769, 0.5
    %v1778 = vtanh.pop %v1776
    %v1779 = vtanh.pop %v1777
    %v1780 = vmul.f32 %v1778, 0.5
    %v1781 = vmul.f32 %v1779, 0.5
    %v1782 = vadd.f32 %v1780, 0.5
    %v1783 = vadd.f32 %v1781, 0.5
    %v1784 = vmul.f32 %v1770, 0.5
    %v1785 = vmul.f32 %v1771, 0.5
    %v1786 = vtanh.pop %v1784
    %v1787 = vtanh.pop %v1785
    %v1788 = vmul.f32 %v1786, 0.5
    %v1789 = vmul.f32 %v1787, 0.5
    %v1790 = vadd.f32 %v1788, 0.5
    %v1791 = vadd.f32 %v1789, 0.5
    %v1792 = vtanh.pop %v1772
    %v1793 = vtanh.pop %v1773
    %v1794 = vmul.f32 %v1774, 0.5
    %v1795 = vmul.f32 %v1775, 0.5
    %v1796 = vtanh.pop %v1794
    %v1797 = vtanh.pop %v1795
    %v1798 = vmul.f32 %v1796, 0.5
    %v1799 = vmul.f32 %v1797, 0.5
    %v1800 = vadd.f32 %v1798, 0.5
    %v1801 = vadd.f32 %v1799, 0.5
    %v1802 = vmul.f32 %v1790, %v1541
    %v1803 = vmul.f32 %v1791, %v1542
    %v1804 = vmul.f32 %v1782, %v1792
    %v1805 = vmul.f32 %v1783, %v1793
    %v1806 = vadd.f32 %v1802, %v1804
    %v1807 = vadd.f32 %v1803, %v1805
    %v1808 = vtanh.pop %v1806
    %v1809 = vtanh.pop %v1807
    %v1810 = vmul.f32 %v1800, %v1808
    %v1811 = vmul.f32 %v1801, %v1809
    %s1812 = smul.u32 2, 8
    %s1813 = smul.addr %s1812, 8
    %s1814 = scalar_lea.vmem [#allocation2], %s1813
    %v1815 = vld [vmem:[%s1814] sm:$0xff]
    %v1816 = vld [vmem:[%s1814 + $0x8] sm:$0xff]
    %v1817 = vld [vmem:[%s1814 + $0x10] sm:$0xff]
    %v1818 = vld [vmem:[%s1814 + $0x18] sm:$0xff]
    %v1819 = vld [vmem:[%s1814 + $0x20] sm:$0xff]
    %v1820 = vld [vmem:[%s1814 + $0x28] sm:$0xff]
    %v1821 = vld [vmem:[%s1814 + $0x30] sm:$0xff]
    %v1822 = vld [vmem:[%s1814 + $0x38] sm:$0xff]
    %v1823 = vpack.c.bf16 %v1810, %v1810
    %v1824 = vpack.c.bf16 %v1811, %v1811
    %1825 = vmatpush.bf16.msra.mxu0 %v1095
    %1826 = vmatpush.bf16.msra.mxu0 %v1087
    %1827 = vmatpush.bf16.msra.mxu0 %v1079
    %1828 = vmatpush.bf16.msra.mxu0 %v1071
    %1829 = vmatpush.bf16.msra.mxu0 %v1063
    %1830 = vmatpush.bf16.msra.mxu0 %v1055
    %1831 = vmatpush.bf16.msra.mxu0 %v1047
    %1832 = vmatpush.bf16.msra.mxu0 %v1039
    %1833 = vmatmul.bf16.gmra.mxu0 %v1823
    %v1834 = vpop.f32.mrf.mxu0
    %v1835 = vadd.f32 0.0, %v1834
    %v1836 = vpop.f32.mrf.mxu0
    %1837 = vdwg.mxu0
    %1838 = vmatpush.bf16.msra.mxu0 %v1159
    %1839 = vmatpush.bf16.msra.mxu0 %v1151
    %1840 = vmatpush.bf16.msra.mxu0 %v1143
    %1841 = vmatpush.bf16.msra.mxu0 %v1135
    %1842 = vmatpush.bf16.msra.mxu0 %v1127
    %1843 = vmatpush.bf16.msra.mxu0 %v1119
    %1844 = vmatpush.bf16.msra.mxu0 %v1111
    %1845 = vmatpush.bf16.msra.mxu0 %v1103
    %1846 = vmatmul.bf16.gmra.mxu0 %v1824
    %v1847 = vpop.f32.mrf.mxu0
    %v1848 = vadd.f32 %v1835, %v1847
    %v1849 = vpop.f32.mrf.mxu0
    %1850 = vdwg.mxu0
    %1851 = vmatpush.bf16.msra.mxu0 %v1096
    %1852 = vmatpush.bf16.msra.mxu0 %v1088
    %1853 = vmatpush.bf16.msra.mxu0 %v1080
    %1854 = vmatpush.bf16.msra.mxu0 %v1072
    %1855 = vmatpush.bf16.msra.mxu0 %v1064
    %1856 = vmatpush.bf16.msra.mxu0 %v1056
    %1857 = vmatpush.bf16.msra.mxu0 %v1048
    %1858 = vmatpush.bf16.msra.mxu0 %v1040
    %1859 = vmatmul.bf16.gmra.mxu0 %v1823
    %v1860 = vpop.f32.mrf.mxu0
    %v1861 = vadd.f32 0.0, %v1860
    %v1862 = vpop.f32.mrf.mxu0
    %1863 = vdwg.mxu0
    %1864 = vmatpush.bf16.msra.mxu0 %v1160
    %1865 = vmatpush.bf16.msra.mxu0 %v1152
    %1866 = vmatpush.bf16.msra.mxu0 %v1144
    %1867 = vmatpush.bf16.msra.mxu0 %v1136
    %1868 = vmatpush.bf16.msra.mxu0 %v1128
    %1869 = vmatpush.bf16.msra.mxu0 %v1120
    %1870 = vmatpush.bf16.msra.mxu0 %v1112
    %1871 = vmatpush.bf16.msra.mxu0 %v1104
    %1872 = vmatmul.bf16.gmra.mxu0 %v1824
    %v1873 = vpop.f32.mrf.mxu0
    %v1874 = vadd.f32 %v1861, %v1873
    %v1875 = vpop.f32.mrf.mxu0
    %1876 = vdwg.mxu0
    %1877 = vmatpush.bf16.msra.mxu0 %v1097
    %1878 = vmatpush.bf16.msra.mxu0 %v1089
    %1879 = vmatpush.bf16.msra.mxu0 %v1081
    %1880 = vmatpush.bf16.msra.mxu0 %v1073
    %1881 = vmatpush.bf16.msra.mxu0 %v1065
    %1882 = vmatpush.bf16.msra.mxu0 %v1057
    %1883 = vmatpush.bf16.msra.mxu0 %v1049
    %1884 = vmatpush.bf16.msra.mxu0 %v1041
    %1885 = vmatmul.bf16.gmra.mxu0 %v1823
    %v1886 = vpop.f32.mrf.mxu0
    %v1887 = vadd.f32 0.0, %v1886
    %v1888 = vpop.f32.mrf.mxu0
    %1889 = vdwg.mxu0
    %1890 = vmatpush.bf16.msra.mxu0 %v1161
    %1891 = vmatpush.bf16.msra.mxu0 %v1153
    %1892 = vmatpush.bf16.msra.mxu0 %v1145
    %1893 = vmatpush.bf16.msra.mxu0 %v1137
    %1894 = vmatpush.bf16.msra.mxu0 %v1129
    %1895 = vmatpush.bf16.msra.mxu0 %v1121
    %1896 = vmatpush.bf16.msra.mxu0 %v1113
    %1897 = vmatpush.bf16.msra.mxu0 %v1105
    %1898 = vmatmul.bf16.gmra.mxu0 %v1824
    %v1899 = vpop.f32.mrf.mxu0
    %v1900 = vadd.f32 %v1887, %v1899
    %v1901 = vpop.f32.mrf.mxu0
    %1902 = vdwg.mxu0
    %1903 = vmatpush.bf16.msra.mxu0 %v1098
    %1904 = vmatpush.bf16.msra.mxu0 %v1090
    %1905 = vmatpush.bf16.msra.mxu0 %v1082
    %1906 = vmatpush.bf16.msra.mxu0 %v1074
    %1907 = vmatpush.bf16.msra.mxu0 %v1066
    %1908 = vmatpush.bf16.msra.mxu0 %v1058
    %1909 = vmatpush.bf16.msra.mxu0 %v1050
    %1910 = vmatpush.bf16.msra.mxu0 %v1042
    %1911 = vmatmul.bf16.gmra.mxu0 %v1823
    %v1912 = vpop.f32.mrf.mxu0
    %v1913 = vadd.f32 0.0, %v1912
    %v1914 = vpop.f32.mrf.mxu0
    %1915 = vdwg.mxu0
    %1916 = vmatpush.bf16.msra.mxu0 %v1162
    %1917 = vmatpush.bf16.msra.mxu0 %v1154
    %1918 = vmatpush.bf16.msra.mxu0 %v1146
    %1919 = vmatpush.bf16.msra.mxu0 %v1138
    %1920 = vmatpush.bf16.msra.mxu0 %v1130
    %1921 = vmatpush.bf16.msra.mxu0 %v1122
    %1922 = vmatpush.bf16.msra.mxu0 %v1114
    %1923 = vmatpush.bf16.msra.mxu0 %v1106
    %1924 = vmatmul.bf16.gmra.mxu0 %v1824
    %v1925 = vpop.f32.mrf.mxu0
    %v1926 = vadd.f32 %v1913, %v1925
    %v1927 = vpop.f32.mrf.mxu0
    %1928 = vdwg.mxu0
    %1929 = vmatpush.bf16.msra.mxu0 %v1099
    %1930 = vmatpush.bf16.msra.mxu0 %v1091
    %1931 = vmatpush.bf16.msra.mxu0 %v1083
    %1932 = vmatpush.bf16.msra.mxu0 %v1075
    %1933 = vmatpush.bf16.msra.mxu0 %v1067
    %1934 = vmatpush.bf16.msra.mxu0 %v1059
    %1935 = vmatpush.bf16.msra.mxu0 %v1051
    %1936 = vmatpush.bf16.msra.mxu0 %v1043
    %1937 = vmatmul.bf16.gmra.mxu0 %v1823
    %v1938 = vpop.f32.mrf.mxu0
    %v1939 = vadd.f32 0.0, %v1938
    %v1940 = vpop.f32.mrf.mxu0
    %1941 = vdwg.mxu0
    %1942 = vmatpush.bf16.msra.mxu0 %v1163
    %1943 = vmatpush.bf16.msra.mxu0 %v1155
    %1944 = vmatpush.bf16.msra.mxu0 %v1147
    %1945 = vmatpush.bf16.msra.mxu0 %v1139
    %1946 = vmatpush.bf16.msra.mxu0 %v1131
    %1947 = vmatpush.bf16.msra.mxu0 %v1123
    %1948 = vmatpush.bf16.msra.mxu0 %v1115
    %1949 = vmatpush.bf16.msra.mxu0 %v1107
    %1950 = vmatmul.bf16.gmra.mxu0 %v1824
    %v1951 = vpop.f32.mrf.mxu0
    %v1952 = vadd.f32 %v1939, %v1951
    %v1953 = vpop.f32.mrf.mxu0
    %1954 = vdwg.mxu0
    %1955 = vmatpush.bf16.msra.mxu0 %v1100
    %1956 = vmatpush.bf16.msra.mxu0 %v1092
    %1957 = vmatpush.bf16.msra.mxu0 %v1084
    %1958 = vmatpush.bf16.msra.mxu0 %v1076
    %1959 = vmatpush.bf16.msra.mxu0 %v1068
    %1960 = vmatpush.bf16.msra.mxu0 %v1060
    %1961 = vmatpush.bf16.msra.mxu0 %v1052
    %1962 = vmatpush.bf16.msra.mxu0 %v1044
    %1963 = vmatmul.bf16.gmra.mxu0 %v1823
    %v1964 = vpop.f32.mrf.mxu0
    %v1965 = vadd.f32 0.0, %v1964
    %v1966 = vpop.f32.mrf.mxu0
    %1967 = vdwg.mxu0
    %1968 = vmatpush.bf16.msra.mxu0 %v1164
    %1969 = vmatpush.bf16.msra.mxu0 %v1156
    %1970 = vmatpush.bf16.msra.mxu0 %v1148
    %1971 = vmatpush.bf16.msra.mxu0 %v1140
    %1972 = vmatpush.bf16.msra.mxu0 %v1132
    %1973 = vmatpush.bf16.msra.mxu0 %v1124
    %1974 = vmatpush.bf16.msra.mxu0 %v1116
    %1975 = vmatpush.bf16.msra.mxu0 %v1108
    %1976 = vmatmul.bf16.gmra.mxu0 %v1824
    %v1977 = vpop.f32.mrf.mxu0
    %v1978 = vadd.f32 %v1965, %v1977
    %v1979 = vpop.f32.mrf.mxu0
    %1980 = vdwg.mxu0
    %1981 = vmatpush.bf16.msra.mxu0 %v1101
    %1982 = vmatpush.bf16.msra.mxu0 %v1093
    %1983 = vmatpush.bf16.msra.mxu0 %v1085
    %1984 = vmatpush.bf16.msra.mxu0 %v1077
    %1985 = vmatpush.bf16.msra.mxu0 %v1069
    %1986 = vmatpush.bf16.msra.mxu0 %v1061
    %1987 = vmatpush.bf16.msra.mxu0 %v1053
    %1988 = vmatpush.bf16.msra.mxu0 %v1045
    %1989 = vmatmul.bf16.gmra.mxu0 %v1823
    %v1990 = vpop.f32.mrf.mxu0
    %v1991 = vadd.f32 0.0, %v1990
    %v1992 = vpop.f32.mrf.mxu0
    %1993 = vdwg.mxu0
    %1994 = vmatpush.bf16.msra.mxu0 %v1165
    %1995 = vmatpush.bf16.msra.mxu0 %v1157
    %1996 = vmatpush.bf16.msra.mxu0 %v1149
    %1997 = vmatpush.bf16.msra.mxu0 %v1141
    %1998 = vmatpush.bf16.msra.mxu0 %v1133
    %1999 = vmatpush.bf16.msra.mxu0 %v1125
    %2000 = vmatpush.bf16.msra.mxu0 %v1117
    %2001 = vmatpush.bf16.msra.mxu0 %v1109
    %2002 = vmatmul.bf16.gmra.mxu0 %v1824
    %v2003 = vpop.f32.mrf.mxu0
    %v2004 = vadd.f32 %v1991, %v2003
    %v2005 = vpop.f32.mrf.mxu0
    %2006 = vdwg.mxu0
    %2007 = vmatpush.bf16.msra.mxu0 %v1102
    %2008 = vmatpush.bf16.msra.mxu0 %v1094
    %2009 = vmatpush.bf16.msra.mxu0 %v1086
    %2010 = vmatpush.bf16.msra.mxu0 %v1078
    %2011 = vmatpush.bf16.msra.mxu0 %v1070
    %2012 = vmatpush.bf16.msra.mxu0 %v1062
    %2013 = vmatpush.bf16.msra.mxu0 %v1054
    %2014 = vmatpush.bf16.msra.mxu0 %v1046
    %2015 = vmatmul.bf16.gmra.mxu0 %v1823
    %v2016 = vpop.f32.mrf.mxu0
    %v2017 = vadd.f32 0.0, %v2016
    %v2018 = vpop.f32.mrf.mxu0
    %2019 = vdwg.mxu0
    %2020 = vmatpush.bf16.msra.mxu0 %v1166
    %2021 = vmatpush.bf16.msra.mxu0 %v1158
    %2022 = vmatpush.bf16.msra.mxu0 %v1150
    %2023 = vmatpush.bf16.msra.mxu0 %v1142
    %2024 = vmatpush.bf16.msra.mxu0 %v1134
    %2025 = vmatpush.bf16.msra.mxu0 %v1126
    %2026 = vmatpush.bf16.msra.mxu0 %v1118
    %2027 = vmatpush.bf16.msra.mxu0 %v1110
    %2028 = vmatmul.bf16.gmra.mxu0 %v1824
    %v2029 = vpop.f32.mrf.mxu0
    %v2030 = vadd.f32 %v2017, %v2029
    %v2031 = vpop.f32.mrf.mxu0
    %2032 = vdwg.mxu0
    %v2033 = vadd.f32 %v1815, %v1848
    %v2034 = vadd.f32 %v1816, %v1874
    %v2035 = vadd.f32 %v1817, %v1900
    %v2036 = vadd.f32 %v1818, %v1926
    %v2037 = vadd.f32 %v1819, %v1952
    %v2038 = vadd.f32 %v1820, %v1978
    %v2039 = vadd.f32 %v1821, %v2004
    %v2040 = vadd.f32 %v1822, %v2030
    %v2041 = vmul.f32 %v2033, 0.5
    %v2042 = vmul.f32 %v2034, 0.5
    %v2043 = vtanh.pop %v2041
    %v2044 = vtanh.pop %v2042
    %v2045 = vmul.f32 %v2043, 0.5
    %v2046 = vmul.f32 %v2044, 0.5
    %v2047 = vadd.f32 %v2045, 0.5
    %v2048 = vadd.f32 %v2046, 0.5
    %v2049 = vmul.f32 %v2035, 0.5
    %v2050 = vmul.f32 %v2036, 0.5
    %v2051 = vtanh.pop %v2049
    %v2052 = vtanh.pop %v2050
    %v2053 = vmul.f32 %v2051, 0.5
    %v2054 = vmul.f32 %v2052, 0.5
    %v2055 = vadd.f32 %v2053, 0.5
    %v2056 = vadd.f32 %v2054, 0.5
    %v2057 = vtanh.pop %v2037
    %v2058 = vtanh.pop %v2038
    %v2059 = vmul.f32 %v2039, 0.5
    %v2060 = vmul.f32 %v2040, 0.5
    %v2061 = vtanh.pop %v2059
    %v2062 = vtanh.pop %v2060
    %v2063 = vmul.f32 %v2061, 0.5
    %v2064 = vmul.f32 %v2062, 0.5
    %v2065 = vadd.f32 %v2063, 0.5
    %v2066 = vadd.f32 %v2064, 0.5
    %v2067 = vmul.f32 %v2055, %v1806
    %v2068 = vmul.f32 %v2056, %v1807
    %v2069 = vmul.f32 %v2047, %v2057
    %v2070 = vmul.f32 %v2048, %v2058
    %v2071 = vadd.f32 %v2067, %v2069
    %v2072 = vadd.f32 %v2068, %v2070
    %v2073 = vtanh.pop %v2071
    %v2074 = vtanh.pop %v2072
    %v2075 = vmul.f32 %v2065, %v2073
    %v2076 = vmul.f32 %v2066, %v2074
    %s2077 = smul.u32 3, 8
    %s2078 = smul.addr %s2077, 8
    %s2079 = scalar_lea.vmem [#allocation2], %s2078
    %v2080 = vld [vmem:[%s2079] sm:$0xff]
    %v2081 = vld [vmem:[%s2079 + $0x8] sm:$0xff]
    %v2082 = vld [vmem:[%s2079 + $0x10] sm:$0xff]
    %v2083 = vld [vmem:[%s2079 + $0x18] sm:$0xff]
    %v2084 = vld [vmem:[%s2079 + $0x20] sm:$0xff]
    %v2085 = vld [vmem:[%s2079 + $0x28] sm:$0xff]
    %v2086 = vld [vmem:[%s2079 + $0x30] sm:$0xff]
    %v2087 = vld [vmem:[%s2079 + $0x38] sm:$0xff]
    %v2088 = vpack.c.bf16 %v2075, %v2075
    %v2089 = vpack.c.bf16 %v2076, %v2076
    %2090 = vmatpush.bf16.msra.mxu0 %v1095
    %2091 = vmatpush.bf16.msra.mxu0 %v1087
    %2092 = vmatpush.bf16.msra.mxu0 %v1079
    %2093 = vmatpush.bf16.msra.mxu0 %v1071
    %2094 = vmatpush.bf16.msra.mxu0 %v1063
    %2095 = vmatpush.bf16.msra.mxu0 %v1055
    %2096 = vmatpush.bf16.msra.mxu0 %v1047
    %2097 = vmatpush.bf16.msra.mxu0 %v1039
    %2098 = vmatmul.bf16.gmra.mxu0 %v2088
    %v2099 = vpop.f32.mrf.mxu0
    %v2100 = vadd.f32 0.0, %v2099
    %v2101 = vpop.f32.mrf.mxu0
    %2102 = vdwg.mxu0
    %2103 = vmatpush.bf16.msra.mxu0 %v1159
    %2104 = vmatpush.bf16.msra.mxu0 %v1151
    %2105 = vmatpush.bf16.msra.mxu0 %v1143
    %2106 = vmatpush.bf16.msra.mxu0 %v1135
    %2107 = vmatpush.bf16.msra.mxu0 %v1127
    %2108 = vmatpush.bf16.msra.mxu0 %v1119
    %2109 = vmatpush.bf16.msra.mxu0 %v1111
    %2110 = vmatpush.bf16.msra.mxu0 %v1103
    %2111 = vmatmul.bf16.gmra.mxu0 %v2089
    %v2112 = vpop.f32.mrf.mxu0
    %v2113 = vadd.f32 %v2100, %v2112
    %v2114 = vpop.f32.mrf.mxu0
    %2115 = vdwg.mxu0
    %2116 = vmatpush.bf16.msra.mxu0 %v1096
    %2117 = vmatpush.bf16.msra.mxu0 %v1088
    %2118 = vmatpush.bf16.msra.mxu0 %v1080
    %2119 = vmatpush.bf16.msra.mxu0 %v1072
    %2120 = vmatpush.bf16.msra.mxu0 %v1064
    %2121 = vmatpush.bf16.msra.mxu0 %v1056
    %2122 = vmatpush.bf16.msra.mxu0 %v1048
    %2123 = vmatpush.bf16.msra.mxu0 %v1040
    %2124 = vmatmul.bf16.gmra.mxu0 %v2088
    %v2125 = vpop.f32.mrf.mxu0
    %v2126 = vadd.f32 0.0, %v2125
    %v2127 = vpop.f32.mrf.mxu0
    %2128 = vdwg.mxu0
    %2129 = vmatpush.bf16.msra.mxu0 %v1160
    %2130 = vmatpush.bf16.msra.mxu0 %v1152
    %2131 = vmatpush.bf16.msra.mxu0 %v1144
    %2132 = vmatpush.bf16.msra.mxu0 %v1136
    %2133 = vmatpush.bf16.msra.mxu0 %v1128
    %2134 = vmatpush.bf16.msra.mxu0 %v1120
    %2135 = vmatpush.bf16.msra.mxu0 %v1112
    %2136 = vmatpush.bf16.msra.mxu0 %v1104
    %2137 = vmatmul.bf16.gmra.mxu0 %v2089
    %v2138 = vpop.f32.mrf.mxu0
    %v2139 = vadd.f32 %v2126, %v2138
    %v2140 = vpop.f32.mrf.mxu0
    %2141 = vdwg.mxu0
    %2142 = vmatpush.bf16.msra.mxu0 %v1097
    %2143 = vmatpush.bf16.msra.mxu0 %v1089
    %2144 = vmatpush.bf16.msra.mxu0 %v1081
    %2145 = vmatpush.bf16.msra.mxu0 %v1073
    %2146 = vmatpush.bf16.msra.mxu0 %v1065
    %2147 = vmatpush.bf16.msra.mxu0 %v1057
    %2148 = vmatpush.bf16.msra.mxu0 %v1049
    %2149 = vmatpush.bf16.msra.mxu0 %v1041
    %2150 = vmatmul.bf16.gmra.mxu0 %v2088
    %v2151 = vpop.f32.mrf.mxu0
    %v2152 = vadd.f32 0.0, %v2151
    %v2153 = vpop.f32.mrf.mxu0
    %2154 = vdwg.mxu0
    %2155 = vmatpush.bf16.msra.mxu0 %v1161
    %2156 = vmatpush.bf16.msra.mxu0 %v1153
    %2157 = vmatpush.bf16.msra.mxu0 %v1145
    %2158 = vmatpush.bf16.msra.mxu0 %v1137
    %2159 = vmatpush.bf16.msra.mxu0 %v1129
    %2160 = vmatpush.bf16.msra.mxu0 %v1121
    %2161 = vmatpush.bf16.msra.mxu0 %v1113
    %2162 = vmatpush.bf16.msra.mxu0 %v1105
    %2163 = vmatmul.bf16.gmra.mxu0 %v2089
    %v2164 = vpop.f32.mrf.mxu0
    %v2165 = vadd.f32 %v2152, %v2164
    %v2166 = vpop.f32.mrf.mxu0
    %2167 = vdwg.mxu0
    %2168 = vmatpush.bf16.msra.mxu0 %v1098
    %2169 = vmatpush.bf16.msra.mxu0 %v1090
    %2170 = vmatpush.bf16.msra.mxu0 %v1082
    %2171 = vmatpush.bf16.msra.mxu0 %v1074
    %2172 = vmatpush.bf16.msra.mxu0 %v1066
    %2173 = vmatpush.bf16.msra.mxu0 %v1058
    %2174 = vmatpush.bf16.msra.mxu0 %v1050
    %2175 = vmatpush.bf16.msra.mxu0 %v1042
    %2176 = vmatmul.bf16.gmra.mxu0 %v2088
    %v2177 = vpop.f32.mrf.mxu0
    %v2178 = vadd.f32 0.0, %v2177
    %v2179 = vpop.f32.mrf.mxu0
    %2180 = vdwg.mxu0
    %2181 = vmatpush.bf16.msra.mxu0 %v1162
    %2182 = vmatpush.bf16.msra.mxu0 %v1154
    %2183 = vmatpush.bf16.msra.mxu0 %v1146
    %2184 = vmatpush.bf16.msra.mxu0 %v1138
    %2185 = vmatpush.bf16.msra.mxu0 %v1130
    %2186 = vmatpush.bf16.msra.mxu0 %v1122
    %2187 = vmatpush.bf16.msra.mxu0 %v1114
    %2188 = vmatpush.bf16.msra.mxu0 %v1106
    %2189 = vmatmul.bf16.gmra.mxu0 %v2089
    %v2190 = vpop.f32.mrf.mxu0
    %v2191 = vadd.f32 %v2178, %v2190
    %v2192 = vpop.f32.mrf.mxu0
    %2193 = vdwg.mxu0
    %2194 = vmatpush.bf16.msra.mxu0 %v1099
    %2195 = vmatpush.bf16.msra.mxu0 %v1091
    %2196 = vmatpush.bf16.msra.mxu0 %v1083
    %2197 = vmatpush.bf16.msra.mxu0 %v1075
    %2198 = vmatpush.bf16.msra.mxu0 %v1067
    %2199 = vmatpush.bf16.msra.mxu0 %v1059
    %2200 = vmatpush.bf16.msra.mxu0 %v1051
    %2201 = vmatpush.bf16.msra.mxu0 %v1043
    %2202 = vmatmul.bf16.gmra.mxu0 %v2088
    %v2203 = vpop.f32.mrf.mxu0
    %v2204 = vadd.f32 0.0, %v2203
    %v2205 = vpop.f32.mrf.mxu0
    %2206 = vdwg.mxu0
    %2207 = vmatpush.bf16.msra.mxu0 %v1163
    %2208 = vmatpush.bf16.msra.mxu0 %v1155
    %2209 = vmatpush.bf16.msra.mxu0 %v1147
    %2210 = vmatpush.bf16.msra.mxu0 %v1139
    %2211 = vmatpush.bf16.msra.mxu0 %v1131
    %2212 = vmatpush.bf16.msra.mxu0 %v1123
    %2213 = vmatpush.bf16.msra.mxu0 %v1115
    %2214 = vmatpush.bf16.msra.mxu0 %v1107
    %2215 = vmatmul.bf16.gmra.mxu0 %v2089
    %v2216 = vpop.f32.mrf.mxu0
    %v2217 = vadd.f32 %v2204, %v2216
    %v2218 = vpop.f32.mrf.mxu0
    %2219 = vdwg.mxu0
    %2220 = vmatpush.bf16.msra.mxu0 %v1100
    %2221 = vmatpush.bf16.msra.mxu0 %v1092
    %2222 = vmatpush.bf16.msra.mxu0 %v1084
    %2223 = vmatpush.bf16.msra.mxu0 %v1076
    %2224 = vmatpush.bf16.msra.mxu0 %v1068
    %2225 = vmatpush.bf16.msra.mxu0 %v1060
    %2226 = vmatpush.bf16.msra.mxu0 %v1052
    %2227 = vmatpush.bf16.msra.mxu0 %v1044
    %2228 = vmatmul.bf16.gmra.mxu0 %v2088
    %v2229 = vpop.f32.mrf.mxu0
    %v2230 = vadd.f32 0.0, %v2229
    %v2231 = vpop.f32.mrf.mxu0
    %2232 = vdwg.mxu0
    %2233 = vmatpush.bf16.msra.mxu0 %v1164
    %2234 = vmatpush.bf16.msra.mxu0 %v1156
    %2235 = vmatpush.bf16.msra.mxu0 %v1148
    %2236 = vmatpush.bf16.msra.mxu0 %v1140
    %2237 = vmatpush.bf16.msra.mxu0 %v1132
    %2238 = vmatpush.bf16.msra.mxu0 %v1124
    %2239 = vmatpush.bf16.msra.mxu0 %v1116
    %2240 = vmatpush.bf16.msra.mxu0 %v1108
    %2241 = vmatmul.bf16.gmra.mxu0 %v2089
    %v2242 = vpop.f32.mrf.mxu0
    %v2243 = vadd.f32 %v2230, %v2242
    %v2244 = vpop.f32.mrf.mxu0
    %2245 = vdwg.mxu0
    %2246 = vmatpush.bf16.msra.mxu0 %v1101
    %2247 = vmatpush.bf16.msra.mxu0 %v1093
    %2248 = vmatpush.bf16.msra.mxu0 %v1085
    %2249 = vmatpush.bf16.msra.mxu0 %v1077
    %2250 = vmatpush.bf16.msra.mxu0 %v1069
    %2251 = vmatpush.bf16.msra.mxu0 %v1061
    %2252 = vmatpush.bf16.msra.mxu0 %v1053
    %2253 = vmatpush.bf16.msra.mxu0 %v1045
    %2254 = vmatmul.bf16.gmra.mxu0 %v2088
    %v2255 = vpop.f32.mrf.mxu0
    %v2256 = vadd.f32 0.0, %v2255
    %v2257 = vpop.f32.mrf.mxu0
    %2258 = vdwg.mxu0
    %2259 = vmatpush.bf16.msra.mxu0 %v1165
    %2260 = vmatpush.bf16.msra.mxu0 %v1157
    %2261 = vmatpush.bf16.msra.mxu0 %v1149
    %2262 = vmatpush.bf16.msra.mxu0 %v1141
    %2263 = vmatpush.bf16.msra.mxu0 %v1133
    %2264 = vmatpush.bf16.msra.mxu0 %v1125
    %2265 = vmatpush.bf16.msra.mxu0 %v1117
    %2266 = vmatpush.bf16.msra.mxu0 %v1109
    %2267 = vmatmul.bf16.gmra.mxu0 %v2089
    %v2268 = vpop.f32.mrf.mxu0
    %v2269 = vadd.f32 %v2256, %v2268
    %v2270 = vpop.f32.mrf.mxu0
    %2271 = vdwg.mxu0
    %2272 = vmatpush.bf16.msra.mxu0 %v1102
    %2273 = vmatpush.bf16.msra.mxu0 %v1094
    %2274 = vmatpush.bf16.msra.mxu0 %v1086
    %2275 = vmatpush.bf16.msra.mxu0 %v1078
    %2276 = vmatpush.bf16.msra.mxu0 %v1070
    %2277 = vmatpush.bf16.msra.mxu0 %v1062
    %2278 = vmatpush.bf16.msra.mxu0 %v1054
    %2279 = vmatpush.bf16.msra.mxu0 %v1046
    %2280 = vmatmul.bf16.gmra.mxu0 %v2088
    %v2281 = vpop.f32.mrf.mxu0
    %v2282 = vadd.f32 0.0, %v2281
    %v2283 = vpop.f32.mrf.mxu0
    %2284 = vdwg.mxu0
    %2285 = vmatpush.bf16.msra.mxu0 %v1166
    %2286 = vmatpush.bf16.msra.mxu0 %v1158
    %2287 = vmatpush.bf16.msra.mxu0 %v1150
    %2288 = vmatpush.bf16.msra.mxu0 %v1142
    %2289 = vmatpush.bf16.msra.mxu0 %v1134
    %2290 = vmatpush.bf16.msra.mxu0 %v1126
    %2291 = vmatpush.bf16.msra.mxu0 %v1118
    %2292 = vmatpush.bf16.msra.mxu0 %v1110
    %2293 = vmatmul.bf16.gmra.mxu0 %v2089
    %v2294 = vpop.f32.mrf.mxu0
    %v2295 = vadd.f32 %v2282, %v2294
    %v2296 = vpop.f32.mrf.mxu0
    %2297 = vdwg.mxu0
    %v2298 = vadd.f32 %v2080, %v2113
    %v2299 = vadd.f32 %v2081, %v2139
    %v2300 = vadd.f32 %v2082, %v2165
    %v2301 = vadd.f32 %v2083, %v2191
    %v2302 = vadd.f32 %v2084, %v2217
    %v2303 = vadd.f32 %v2085, %v2243
    %v2304 = vadd.f32 %v2086, %v2269
    %v2305 = vadd.f32 %v2087, %v2295
    %v2306 = vmul.f32 %v2298, 0.5
    %v2307 = vmul.f32 %v2299, 0.5
    %v2308 = vtanh.pop %v2306
    %v2309 = vtanh.pop %v2307
    %v2310 = vmul.f32 %v2308, 0.5
    %v2311 = vmul.f32 %v2309, 0.5
    %v2312 = vadd.f32 %v2310, 0.5
    %v2313 = vadd.f32 %v2311, 0.5
    %v2314 = vmul.f32 %v2300, 0.5
    %v2315 = vmul.f32 %v2301, 0.5
    %v2316 = vtanh.pop %v2314
    %v2317 = vtanh.pop %v2315
    %v2318 = vmul.f32 %v2316, 0.5
    %v2319 = vmul.f32 %v2317, 0.5
    %v2320 = vadd.f32 %v2318, 0.5
    %v2321 = vadd.f32 %v2319, 0.5
    %v2322 = vtanh.pop %v2302
    %v2323 = vtanh.pop %v2303
    %v2324 = vmul.f32 %v2304, 0.5
    %v2325 = vmul.f32 %v2305, 0.5
    %v2326 = vtanh.pop %v2324
    %v2327 = vtanh.pop %v2325
    %v2328 = vmul.f32 %v2326, 0.5
    %v2329 = vmul.f32 %v2327, 0.5
    %v2330 = vadd.f32 %v2328, 0.5
    %v2331 = vadd.f32 %v2329, 0.5
    %v2332 = vmul.f32 %v2320, %v2071
    %v2333 = vmul.f32 %v2321, %v2072
    %v2334 = vmul.f32 %v2312, %v2322
    %v2335 = vmul.f32 %v2313, %v2323
    %v2336 = vadd.f32 %v2332, %v2334
    %v2337 = vadd.f32 %v2333, %v2335
    %v2338 = vtanh.pop %v2336
    %v2339 = vtanh.pop %v2337
    %v2340 = vmul.f32 %v2330, %v2338
    %v2341 = vmul.f32 %v2331, %v2339
    %s2342 = smul.u32 4, 8
    %s2343 = smul.addr %s2342, 8
    %s2344 = scalar_lea.vmem [#allocation2], %s2343
    %v2345 = vld [vmem:[%s2344] sm:$0xff]
    %v2346 = vld [vmem:[%s2344 + $0x8] sm:$0xff]
    %v2347 = vld [vmem:[%s2344 + $0x10] sm:$0xff]
    %v2348 = vld [vmem:[%s2344 + $0x18] sm:$0xff]
    %v2349 = vld [vmem:[%s2344 + $0x20] sm:$0xff]
    %v2350 = vld [vmem:[%s2344 + $0x28] sm:$0xff]
    %v2351 = vld [vmem:[%s2344 + $0x30] sm:$0xff]
    %v2352 = vld [vmem:[%s2344 + $0x38] sm:$0xff]
    %v2353 = vpack.c.bf16 %v2340, %v2340
    %v2354 = vpack.c.bf16 %v2341, %v2341
    %2355 = vmatpush.bf16.msra.mxu0 %v1095
    %2356 = vmatpush.bf16.msra.mxu0 %v1087
    %2357 = vmatpush.bf16.msra.mxu0 %v1079
    %2358 = vmatpush.bf16.msra.mxu0 %v1071
    %2359 = vmatpush.bf16.msra.mxu0 %v1063
    %2360 = vmatpush.bf16.msra.mxu0 %v1055
    %2361 = vmatpush.bf16.msra.mxu0 %v1047
    %2362 = vmatpush.bf16.msra.mxu0 %v1039
    %2363 = vmatmul.bf16.gmra.mxu0 %v2353
    %v2364 = vpop.f32.mrf.mxu0
    %v2365 = vadd.f32 0.0, %v2364
    %v2366 = vpop.f32.mrf.mxu0
    %2367 = vdwg.mxu0
    %2368 = vmatpush.bf16.msra.mxu0 %v1159
    %2369 = vmatpush.bf16.msra.mxu0 %v1151
    %2370 = vmatpush.bf16.msra.mxu0 %v1143
    %2371 = vmatpush.bf16.msra.mxu0 %v1135
    %2372 = vmatpush.bf16.msra.mxu0 %v1127
    %2373 = vmatpush.bf16.msra.mxu0 %v1119
    %2374 = vmatpush.bf16.msra.mxu0 %v1111
    %2375 = vmatpush.bf16.msra.mxu0 %v1103
    %2376 = vmatmul.bf16.gmra.mxu0 %v2354
    %v2377 = vpop.f32.mrf.mxu0
    %v2378 = vadd.f32 %v2365, %v2377
    %v2379 = vpop.f32.mrf.mxu0
    %2380 = vdwg.mxu0
    %2381 = vmatpush.bf16.msra.mxu0 %v1096
    %2382 = vmatpush.bf16.msra.mxu0 %v1088
    %2383 = vmatpush.bf16.msra.mxu0 %v1080
    %2384 = vmatpush.bf16.msra.mxu0 %v1072
    %2385 = vmatpush.bf16.msra.mxu0 %v1064
    %2386 = vmatpush.bf16.msra.mxu0 %v1056
    %2387 = vmatpush.bf16.msra.mxu0 %v1048
    %2388 = vmatpush.bf16.msra.mxu0 %v1040
    %2389 = vmatmul.bf16.gmra.mxu0 %v2353
    %v2390 = vpop.f32.mrf.mxu0
    %v2391 = vadd.f32 0.0, %v2390
    %v2392 = vpop.f32.mrf.mxu0
    %2393 = vdwg.mxu0
    %2394 = vmatpush.bf16.msra.mxu0 %v1160
    %2395 = vmatpush.bf16.msra.mxu0 %v1152
    %2396 = vmatpush.bf16.msra.mxu0 %v1144
    %2397 = vmatpush.bf16.msra.mxu0 %v1136
    %2398 = vmatpush.bf16.msra.mxu0 %v1128
    %2399 = vmatpush.bf16.msra.mxu0 %v1120
    %2400 = vmatpush.bf16.msra.mxu0 %v1112
    %2401 = vmatpush.bf16.msra.mxu0 %v1104
    %2402 = vmatmul.bf16.gmra.mxu0 %v2354
    %v2403 = vpop.f32.mrf.mxu0
    %v2404 = vadd.f32 %v2391, %v2403
    %v2405 = vpop.f32.mrf.mxu0
    %2406 = vdwg.mxu0
    %2407 = vmatpush.bf16.msra.mxu0 %v1097
    %2408 = vmatpush.bf16.msra.mxu0 %v1089
    %2409 = vmatpush.bf16.msra.mxu0 %v1081
    %2410 = vmatpush.bf16.msra.mxu0 %v1073
    %2411 = vmatpush.bf16.msra.mxu0 %v1065
    %2412 = vmatpush.bf16.msra.mxu0 %v1057
    %2413 = vmatpush.bf16.msra.mxu0 %v1049
    %2414 = vmatpush.bf16.msra.mxu0 %v1041
    %2415 = vmatmul.bf16.gmra.mxu0 %v2353
    %v2416 = vpop.f32.mrf.mxu0
    %v2417 = vadd.f32 0.0, %v2416
    %v2418 = vpop.f32.mrf.mxu0
    %2419 = vdwg.mxu0
    %2420 = vmatpush.bf16.msra.mxu0 %v1161
    %2421 = vmatpush.bf16.msra.mxu0 %v1153
    %2422 = vmatpush.bf16.msra.mxu0 %v1145
    %2423 = vmatpush.bf16.msra.mxu0 %v1137
    %2424 = vmatpush.bf16.msra.mxu0 %v1129
    %2425 = vmatpush.bf16.msra.mxu0 %v1121
    %2426 = vmatpush.bf16.msra.mxu0 %v1113
    %2427 = vmatpush.bf16.msra.mxu0 %v1105
    %2428 = vmatmul.bf16.gmra.mxu0 %v2354
    %v2429 = vpop.f32.mrf.mxu0
    %v2430 = vadd.f32 %v2417, %v2429
    %v2431 = vpop.f32.mrf.mxu0
    %2432 = vdwg.mxu0
    %2433 = vmatpush.bf16.msra.mxu0 %v1098
    %2434 = vmatpush.bf16.msra.mxu0 %v1090
    %2435 = vmatpush.bf16.msra.mxu0 %v1082
    %2436 = vmatpush.bf16.msra.mxu0 %v1074
    %2437 = vmatpush.bf16.msra.mxu0 %v1066
    %2438 = vmatpush.bf16.msra.mxu0 %v1058
    %2439 = vmatpush.bf16.msra.mxu0 %v1050
    %2440 = vmatpush.bf16.msra.mxu0 %v1042
    %2441 = vmatmul.bf16.gmra.mxu0 %v2353
    %v2442 = vpop.f32.mrf.mxu0
    %v2443 = vadd.f32 0.0, %v2442
    %v2444 = vpop.f32.mrf.mxu0
    %2445 = vdwg.mxu0
    %2446 = vmatpush.bf16.msra.mxu0 %v1162
    %2447 = vmatpush.bf16.msra.mxu0 %v1154
    %2448 = vmatpush.bf16.msra.mxu0 %v1146
    %2449 = vmatpush.bf16.msra.mxu0 %v1138
    %2450 = vmatpush.bf16.msra.mxu0 %v1130
    %2451 = vmatpush.bf16.msra.mxu0 %v1122
    %2452 = vmatpush.bf16.msra.mxu0 %v1114
    %2453 = vmatpush.bf16.msra.mxu0 %v1106
    %2454 = vmatmul.bf16.gmra.mxu0 %v2354
    %v2455 = vpop.f32.mrf.mxu0
    %v2456 = vadd.f32 %v2443, %v2455
    %v2457 = vpop.f32.mrf.mxu0
    %2458 = vdwg.mxu0
    %2459 = vmatpush.bf16.msra.mxu0 %v1099
    %2460 = vmatpush.bf16.msra.mxu0 %v1091
    %2461 = vmatpush.bf16.msra.mxu0 %v1083
    %2462 = vmatpush.bf16.msra.mxu0 %v1075
    %2463 = vmatpush.bf16.msra.mxu0 %v1067
    %2464 = vmatpush.bf16.msra.mxu0 %v1059
    %2465 = vmatpush.bf16.msra.mxu0 %v1051
    %2466 = vmatpush.bf16.msra.mxu0 %v1043
    %2467 = vmatmul.bf16.gmra.mxu0 %v2353
    %v2468 = vpop.f32.mrf.mxu0
    %v2469 = vadd.f32 0.0, %v2468
    %v2470 = vpop.f32.mrf.mxu0
    %2471 = vdwg.mxu0
    %2472 = vmatpush.bf16.msra.mxu0 %v1163
    %2473 = vmatpush.bf16.msra.mxu0 %v1155
    %2474 = vmatpush.bf16.msra.mxu0 %v1147
    %2475 = vmatpush.bf16.msra.mxu0 %v1139
    %2476 = vmatpush.bf16.msra.mxu0 %v1131
    %2477 = vmatpush.bf16.msra.mxu0 %v1123
    %2478 = vmatpush.bf16.msra.mxu0 %v1115
    %2479 = vmatpush.bf16.msra.mxu0 %v1107
    %2480 = vmatmul.bf16.gmra.mxu0 %v2354
    %v2481 = vpop.f32.mrf.mxu0
    %v2482 = vadd.f32 %v2469, %v2481
    %v2483 = vpop.f32.mrf.mxu0
    %2484 = vdwg.mxu0
    %2485 = vmatpush.bf16.msra.mxu0 %v1100
    %2486 = vmatpush.bf16.msra.mxu0 %v1092
    %2487 = vmatpush.bf16.msra.mxu0 %v1084
    %2488 = vmatpush.bf16.msra.mxu0 %v1076
    %2489 = vmatpush.bf16.msra.mxu0 %v1068
    %2490 = vmatpush.bf16.msra.mxu0 %v1060
    %2491 = vmatpush.bf16.msra.mxu0 %v1052
    %2492 = vmatpush.bf16.msra.mxu0 %v1044
    %2493 = vmatmul.bf16.gmra.mxu0 %v2353
    %v2494 = vpop.f32.mrf.mxu0
    %v2495 = vadd.f32 0.0, %v2494
    %v2496 = vpop.f32.mrf.mxu0
    %2497 = vdwg.mxu0
    %2498 = vmatpush.bf16.msra.mxu0 %v1164
    %2499 = vmatpush.bf16.msra.mxu0 %v1156
    %2500 = vmatpush.bf16.msra.mxu0 %v1148
    %2501 = vmatpush.bf16.msra.mxu0 %v1140
    %2502 = vmatpush.bf16.msra.mxu0 %v1132
    %2503 = vmatpush.bf16.msra.mxu0 %v1124
    %2504 = vmatpush.bf16.msra.mxu0 %v1116
    %2505 = vmatpush.bf16.msra.mxu0 %v1108
    %2506 = vmatmul.bf16.gmra.mxu0 %v2354
    %v2507 = vpop.f32.mrf.mxu0
    %v2508 = vadd.f32 %v2495, %v2507
    %v2509 = vpop.f32.mrf.mxu0
    %2510 = vdwg.mxu0
    %2511 = vmatpush.bf16.msra.mxu0 %v1101
    %2512 = vmatpush.bf16.msra.mxu0 %v1093
    %2513 = vmatpush.bf16.msra.mxu0 %v1085
    %2514 = vmatpush.bf16.msra.mxu0 %v1077
    %2515 = vmatpush.bf16.msra.mxu0 %v1069
    %2516 = vmatpush.bf16.msra.mxu0 %v1061
    %2517 = vmatpush.bf16.msra.mxu0 %v1053
    %2518 = vmatpush.bf16.msra.mxu0 %v1045
    %2519 = vmatmul.bf16.gmra.mxu0 %v2353
    %v2520 = vpop.f32.mrf.mxu0
    %v2521 = vadd.f32 0.0, %v2520
    %v2522 = vpop.f32.mrf.mxu0
    %2523 = vdwg.mxu0
    %2524 = vmatpush.bf16.msra.mxu0 %v1165
    %2525 = vmatpush.bf16.msra.mxu0 %v1157
    %2526 = vmatpush.bf16.msra.mxu0 %v1149
    %2527 = vmatpush.bf16.msra.mxu0 %v1141
    %2528 = vmatpush.bf16.msra.mxu0 %v1133
    %2529 = vmatpush.bf16.msra.mxu0 %v1125
    %2530 = vmatpush.bf16.msra.mxu0 %v1117
    %2531 = vmatpush.bf16.msra.mxu0 %v1109
    %2532 = vmatmul.bf16.gmra.mxu0 %v2354
    %v2533 = vpop.f32.mrf.mxu0
    %v2534 = vadd.f32 %v2521, %v2533
    %v2535 = vpop.f32.mrf.mxu0
    %2536 = vdwg.mxu0
    %2537 = vmatpush.bf16.msra.mxu0 %v1102
    %2538 = vmatpush.bf16.msra.mxu0 %v1094
    %2539 = vmatpush.bf16.msra.mxu0 %v1086
    %2540 = vmatpush.bf16.msra.mxu0 %v1078
    %2541 = vmatpush.bf16.msra.mxu0 %v1070
    %2542 = vmatpush.bf16.msra.mxu0 %v1062
    %2543 = vmatpush.bf16.msra.mxu0 %v1054
    %2544 = vmatpush.bf16.msra.mxu0 %v1046
    %2545 = vmatmul.bf16.gmra.mxu0 %v2353
    %v2546 = vpop.f32.mrf.mxu0
    %v2547 = vadd.f32 0.0, %v2546
    %v2548 = vpop.f32.mrf.mxu0
    %2549 = vdwg.mxu0
    %2550 = vmatpush.bf16.msra.mxu0 %v1166
    %2551 = vmatpush.bf16.msra.mxu0 %v1158
    %2552 = vmatpush.bf16.msra.mxu0 %v1150
    %2553 = vmatpush.bf16.msra.mxu0 %v1142
    %2554 = vmatpush.bf16.msra.mxu0 %v1134
    %2555 = vmatpush.bf16.msra.mxu0 %v1126
    %2556 = vmatpush.bf16.msra.mxu0 %v1118
    %2557 = vmatpush.bf16.msra.mxu0 %v1110
    %2558 = vmatmul.bf16.gmra.mxu0 %v2354
    %v2559 = vpop.f32.mrf.mxu0
    %v2560 = vadd.f32 %v2547, %v2559
    %v2561 = vpop.f32.mrf.mxu0
    %2562 = vdwg.mxu0
    %v2563 = vadd.f32 %v2345, %v2378
    %v2564 = vadd.f32 %v2346, %v2404
    %v2565 = vadd.f32 %v2347, %v2430
    %v2566 = vadd.f32 %v2348, %v2456
    %v2567 = vadd.f32 %v2349, %v2482
    %v2568 = vadd.f32 %v2350, %v2508
    %v2569 = vadd.f32 %v2351, %v2534
    %v2570 = vadd.f32 %v2352, %v2560
    %v2571 = vmul.f32 %v2563, 0.5
    %v2572 = vmul.f32 %v2564, 0.5
    %v2573 = vtanh.pop %v2571
    %v2574 = vtanh.pop %v2572
    %v2575 = vmul.f32 %v2573, 0.5
    %v2576 = vmul.f32 %v2574, 0.5
    %v2577 = vadd.f32 %v2575, 0.5
    %v2578 = vadd.f32 %v2576, 0.5
    %v2579 = vmul.f32 %v2565, 0.5
    %v2580 = vmul.f32 %v2566, 0.5
    %v2581 = vtanh.pop %v2579
    %v2582 = vtanh.pop %v2580
    %v2583 = vmul.f32 %v2581, 0.5
    %v2584 = vmul.f32 %v2582, 0.5
    %v2585 = vadd.f32 %v2583, 0.5
    %v2586 = vadd.f32 %v2584, 0.5
    %v2587 = vtanh.pop %v2567
    %v2588 = vtanh.pop %v2568
    %v2589 = vmul.f32 %v2569, 0.5
    %v2590 = vmul.f32 %v2570, 0.5
    %v2591 = vtanh.pop %v2589
    %v2592 = vtanh.pop %v2590
    %v2593 = vmul.f32 %v2591, 0.5
    %v2594 = vmul.f32 %v2592, 0.5
    %v2595 = vadd.f32 %v2593, 0.5
    %v2596 = vadd.f32 %v2594, 0.5
    %v2597 = vmul.f32 %v2585, %v2336
    %v2598 = vmul.f32 %v2586, %v2337
    %v2599 = vmul.f32 %v2577, %v2587
    %v2600 = vmul.f32 %v2578, %v2588
    %v2601 = vadd.f32 %v2597, %v2599
    %v2602 = vadd.f32 %v2598, %v2600
    %v2603 = vtanh.pop %v2601
    %v2604 = vtanh.pop %v2602
    %v2605 = vmul.f32 %v2595, %v2603
    %v2606 = vmul.f32 %v2596, %v2604
    %s2607 = smul.u32 5, 8
    %s2608 = smul.addr %s2607, 8
    %s2609 = scalar_lea.vmem [#allocation2], %s2608
    %v2610 = vld [vmem:[%s2609] sm:$0xff]
    %v2611 = vld [vmem:[%s2609 + $0x8] sm:$0xff]
    %v2612 = vld [vmem:[%s2609 + $0x10] sm:$0xff]
    %v2613 = vld [vmem:[%s2609 + $0x18] sm:$0xff]
    %v2614 = vld [vmem:[%s2609 + $0x20] sm:$0xff]
    %v2615 = vld [vmem:[%s2609 + $0x28] sm:$0xff]
    %v2616 = vld [vmem:[%s2609 + $0x30] sm:$0xff]
    %v2617 = vld [vmem:[%s2609 + $0x38] sm:$0xff]
    %v2618 = vpack.c.bf16 %v2605, %v2605
    %v2619 = vpack.c.bf16 %v2606, %v2606
    %2620 = vmatpush.bf16.msra.mxu0 %v1095
    %2621 = vmatpush.bf16.msra.mxu0 %v1087
    %2622 = vmatpush.bf16.msra.mxu0 %v1079
    %2623 = vmatpush.bf16.msra.mxu0 %v1071
    %2624 = vmatpush.bf16.msra.mxu0 %v1063
    %2625 = vmatpush.bf16.msra.mxu0 %v1055
    %2626 = vmatpush.bf16.msra.mxu0 %v1047
    %2627 = vmatpush.bf16.msra.mxu0 %v1039
    %2628 = vmatmul.bf16.gmra.mxu0 %v2618
    %v2629 = vpop.f32.mrf.mxu0
    %v2630 = vadd.f32 0.0, %v2629
    %v2631 = vpop.f32.mrf.mxu0
    %2632 = vdwg.mxu0
    %2633 = vmatpush.bf16.msra.mxu0 %v1159
    %2634 = vmatpush.bf16.msra.mxu0 %v1151
    %2635 = vmatpush.bf16.msra.mxu0 %v1143
    %2636 = vmatpush.bf16.msra.mxu0 %v1135
    %2637 = vmatpush.bf16.msra.mxu0 %v1127
    %2638 = vmatpush.bf16.msra.mxu0 %v1119
    %2639 = vmatpush.bf16.msra.mxu0 %v1111
    %2640 = vmatpush.bf16.msra.mxu0 %v1103
    %2641 = vmatmul.bf16.gmra.mxu0 %v2619
    %v2642 = vpop.f32.mrf.mxu0
    %v2643 = vadd.f32 %v2630, %v2642
    %v2644 = vpop.f32.mrf.mxu0
    %2645 = vdwg.mxu0
    %2646 = vmatpush.bf16.msra.mxu0 %v1096
    %2647 = vmatpush.bf16.msra.mxu0 %v1088
    %2648 = vmatpush.bf16.msra.mxu0 %v1080
    %2649 = vmatpush.bf16.msra.mxu0 %v1072
    %2650 = vmatpush.bf16.msra.mxu0 %v1064
    %2651 = vmatpush.bf16.msra.mxu0 %v1056
    %2652 = vmatpush.bf16.msra.mxu0 %v1048
    %2653 = vmatpush.bf16.msra.mxu0 %v1040
    %2654 = vmatmul.bf16.gmra.mxu0 %v2618
    %v2655 = vpop.f32.mrf.mxu0
    %v2656 = vadd.f32 0.0, %v2655
    %v2657 = vpop.f32.mrf.mxu0
    %2658 = vdwg.mxu0
    %2659 = vmatpush.bf16.msra.mxu0 %v1160
    %2660 = vmatpush.bf16.msra.mxu0 %v1152
    %2661 = vmatpush.bf16.msra.mxu0 %v1144
    %2662 = vmatpush.bf16.msra.mxu0 %v1136
    %2663 = vmatpush.bf16.msra.mxu0 %v1128
    %2664 = vmatpush.bf16.msra.mxu0 %v1120
    %2665 = vmatpush.bf16.msra.mxu0 %v1112
    %2666 = vmatpush.bf16.msra.mxu0 %v1104
    %2667 = vmatmul.bf16.gmra.mxu0 %v2619
    %v2668 = vpop.f32.mrf.mxu0
    %v2669 = vadd.f32 %v2656, %v2668
    %v2670 = vpop.f32.mrf.mxu0
    %2671 = vdwg.mxu0
    %2672 = vmatpush.bf16.msra.mxu0 %v1097
    %2673 = vmatpush.bf16.msra.mxu0 %v1089
    %2674 = vmatpush.bf16.msra.mxu0 %v1081
    %2675 = vmatpush.bf16.msra.mxu0 %v1073
    %2676 = vmatpush.bf16.msra.mxu0 %v1065
    %2677 = vmatpush.bf16.msra.mxu0 %v1057
    %2678 = vmatpush.bf16.msra.mxu0 %v1049
    %2679 = vmatpush.bf16.msra.mxu0 %v1041
    %2680 = vmatmul.bf16.gmra.mxu0 %v2618
    %v2681 = vpop.f32.mrf.mxu0
    %v2682 = vadd.f32 0.0, %v2681
    %v2683 = vpop.f32.mrf.mxu0
    %2684 = vdwg.mxu0
    %2685 = vmatpush.bf16.msra.mxu0 %v1161
    %2686 = vmatpush.bf16.msra.mxu0 %v1153
    %2687 = vmatpush.bf16.msra.mxu0 %v1145
    %2688 = vmatpush.bf16.msra.mxu0 %v1137
    %2689 = vmatpush.bf16.msra.mxu0 %v1129
    %2690 = vmatpush.bf16.msra.mxu0 %v1121
    %2691 = vmatpush.bf16.msra.mxu0 %v1113
    %2692 = vmatpush.bf16.msra.mxu0 %v1105
    %2693 = vmatmul.bf16.gmra.mxu0 %v2619
    %v2694 = vpop.f32.mrf.mxu0
    %v2695 = vadd.f32 %v2682, %v2694
    %v2696 = vpop.f32.mrf.mxu0
    %2697 = vdwg.mxu0
    %2698 = vmatpush.bf16.msra.mxu0 %v1098
    %2699 = vmatpush.bf16.msra.mxu0 %v1090
    %2700 = vmatpush.bf16.msra.mxu0 %v1082
    %2701 = vmatpush.bf16.msra.mxu0 %v1074
    %2702 = vmatpush.bf16.msra.mxu0 %v1066
    %2703 = vmatpush.bf16.msra.mxu0 %v1058
    %2704 = vmatpush.bf16.msra.mxu0 %v1050
    %2705 = vmatpush.bf16.msra.mxu0 %v1042
    %2706 = vmatmul.bf16.gmra.mxu0 %v2618
    %v2707 = vpop.f32.mrf.mxu0
    %v2708 = vadd.f32 0.0, %v2707
    %v2709 = vpop.f32.mrf.mxu0
    %2710 = vdwg.mxu0
    %2711 = vmatpush.bf16.msra.mxu0 %v1162
    %2712 = vmatpush.bf16.msra.mxu0 %v1154
    %2713 = vmatpush.bf16.msra.mxu0 %v1146
    %2714 = vmatpush.bf16.msra.mxu0 %v1138
    %2715 = vmatpush.bf16.msra.mxu0 %v1130
    %2716 = vmatpush.bf16.msra.mxu0 %v1122
    %2717 = vmatpush.bf16.msra.mxu0 %v1114
    %2718 = vmatpush.bf16.msra.mxu0 %v1106
    %2719 = vmatmul.bf16.gmra.mxu0 %v2619
    %v2720 = vpop.f32.mrf.mxu0
    %v2721 = vadd.f32 %v2708, %v2720
    %v2722 = vpop.f32.mrf.mxu0
    %2723 = vdwg.mxu0
    %2724 = vmatpush.bf16.msra.mxu0 %v1099
    %2725 = vmatpush.bf16.msra.mxu0 %v1091
    %2726 = vmatpush.bf16.msra.mxu0 %v1083
    %2727 = vmatpush.bf16.msra.mxu0 %v1075
    %2728 = vmatpush.bf16.msra.mxu0 %v1067
    %2729 = vmatpush.bf16.msra.mxu0 %v1059
    %2730 = vmatpush.bf16.msra.mxu0 %v1051
    %2731 = vmatpush.bf16.msra.mxu0 %v1043
    %2732 = vmatmul.bf16.gmra.mxu0 %v2618
    %v2733 = vpop.f32.mrf.mxu0
    %v2734 = vadd.f32 0.0, %v2733
    %v2735 = vpop.f32.mrf.mxu0
    %2736 = vdwg.mxu0
    %2737 = vmatpush.bf16.msra.mxu0 %v1163
    %2738 = vmatpush.bf16.msra.mxu0 %v1155
    %2739 = vmatpush.bf16.msra.mxu0 %v1147
    %2740 = vmatpush.bf16.msra.mxu0 %v1139
    %2741 = vmatpush.bf16.msra.mxu0 %v1131
    %2742 = vmatpush.bf16.msra.mxu0 %v1123
    %2743 = vmatpush.bf16.msra.mxu0 %v1115
    %2744 = vmatpush.bf16.msra.mxu0 %v1107
    %2745 = vmatmul.bf16.gmra.mxu0 %v2619
    %v2746 = vpop.f32.mrf.mxu0
    %v2747 = vadd.f32 %v2734, %v2746
    %v2748 = vpop.f32.mrf.mxu0
    %2749 = vdwg.mxu0
    %2750 = vmatpush.bf16.msra.mxu0 %v1100
    %2751 = vmatpush.bf16.msra.mxu0 %v1092
    %2752 = vmatpush.bf16.msra.mxu0 %v1084
    %2753 = vmatpush.bf16.msra.mxu0 %v1076
    %2754 = vmatpush.bf16.msra.mxu0 %v1068
    %2755 = vmatpush.bf16.msra.mxu0 %v1060
    %2756 = vmatpush.bf16.msra.mxu0 %v1052
    %2757 = vmatpush.bf16.msra.mxu0 %v1044
    %2758 = vmatmul.bf16.gmra.mxu0 %v2618
    %v2759 = vpop.f32.mrf.mxu0
    %v2760 = vadd.f32 0.0, %v2759
    %v2761 = vpop.f32.mrf.mxu0
    %2762 = vdwg.mxu0
    %2763 = vmatpush.bf16.msra.mxu0 %v1164
    %2764 = vmatpush.bf16.msra.mxu0 %v1156
    %2765 = vmatpush.bf16.msra.mxu0 %v1148
    %2766 = vmatpush.bf16.msra.mxu0 %v1140
    %2767 = vmatpush.bf16.msra.mxu0 %v1132
    %2768 = vmatpush.bf16.msra.mxu0 %v1124
    %2769 = vmatpush.bf16.msra.mxu0 %v1116
    %2770 = vmatpush.bf16.msra.mxu0 %v1108
    %2771 = vmatmul.bf16.gmra.mxu0 %v2619
    %v2772 = vpop.f32.mrf.mxu0
    %v2773 = vadd.f32 %v2760, %v2772
    %v2774 = vpop.f32.mrf.mxu0
    %2775 = vdwg.mxu0
    %2776 = vmatpush.bf16.msra.mxu0 %v1101
    %2777 = vmatpush.bf16.msra.mxu0 %v1093
    %2778 = vmatpush.bf16.msra.mxu0 %v1085
    %2779 = vmatpush.bf16.msra.mxu0 %v1077
    %2780 = vmatpush.bf16.msra.mxu0 %v1069
    %2781 = vmatpush.bf16.msra.mxu0 %v1061
    %2782 = vmatpush.bf16.msra.mxu0 %v1053
    %2783 = vmatpush.bf16.msra.mxu0 %v1045
    %2784 = vmatmul.bf16.gmra.mxu0 %v2618
    %v2785 = vpop.f32.mrf.mxu0
    %v2786 = vadd.f32 0.0, %v2785
    %v2787 = vpop.f32.mrf.mxu0
    %2788 = vdwg.mxu0
    %2789 = vmatpush.bf16.msra.mxu0 %v1165
    %2790 = vmatpush.bf16.msra.mxu0 %v1157
    %2791 = vmatpush.bf16.msra.mxu0 %v1149
    %2792 = vmatpush.bf16.msra.mxu0 %v1141
    %2793 = vmatpush.bf16.msra.mxu0 %v1133
    %2794 = vmatpush.bf16.msra.mxu0 %v1125
    %2795 = vmatpush.bf16.msra.mxu0 %v1117
    %2796 = vmatpush.bf16.msra.mxu0 %v1109
    %2797 = vmatmul.bf16.gmra.mxu0 %v2619
    %v2798 = vpop.f32.mrf.mxu0
    %v2799 = vadd.f32 %v2786, %v2798
    %v2800 = vpop.f32.mrf.mxu0
    %2801 = vdwg.mxu0
    %2802 = vmatpush.bf16.msra.mxu0 %v1102
    %2803 = vmatpush.bf16.msra.mxu0 %v1094
    %2804 = vmatpush.bf16.msra.mxu0 %v1086
    %2805 = vmatpush.bf16.msra.mxu0 %v1078
    %2806 = vmatpush.bf16.msra.mxu0 %v1070
    %2807 = vmatpush.bf16.msra.mxu0 %v1062
    %2808 = vmatpush.bf16.msra.mxu0 %v1054
    %2809 = vmatpush.bf16.msra.mxu0 %v1046
    %2810 = vmatmul.bf16.gmra.mxu0 %v2618
    %v2811 = vpop.f32.mrf.mxu0
    %v2812 = vadd.f32 0.0, %v2811
    %v2813 = vpop.f32.mrf.mxu0
    %2814 = vdwg.mxu0
    %2815 = vmatpush.bf16.msra.mxu0 %v1166
    %2816 = vmatpush.bf16.msra.mxu0 %v1158
    %2817 = vmatpush.bf16.msra.mxu0 %v1150
    %2818 = vmatpush.bf16.msra.mxu0 %v1142
    %2819 = vmatpush.bf16.msra.mxu0 %v1134
    %2820 = vmatpush.bf16.msra.mxu0 %v1126
    %2821 = vmatpush.bf16.msra.mxu0 %v1118
    %2822 = vmatpush.bf16.msra.mxu0 %v1110
    %2823 = vmatmul.bf16.gmra.mxu0 %v2619
    %v2824 = vpop.f32.mrf.mxu0
    %v2825 = vadd.f32 %v2812, %v2824
    %v2826 = vpop.f32.mrf.mxu0
    %2827 = vdwg.mxu0
    %v2828 = vadd.f32 %v2610, %v2643
    %v2829 = vadd.f32 %v2611, %v2669
    %v2830 = vadd.f32 %v2612, %v2695
    %v2831 = vadd.f32 %v2613, %v2721
    %v2832 = vadd.f32 %v2614, %v2747
    %v2833 = vadd.f32 %v2615, %v2773
    %v2834 = vadd.f32 %v2616, %v2799
    %v2835 = vadd.f32 %v2617, %v2825
    %v2836 = vmul.f32 %v2828, 0.5
    %v2837 = vmul.f32 %v2829, 0.5
    %v2838 = vtanh.pop %v2836
    %v2839 = vtanh.pop %v2837
    %v2840 = vmul.f32 %v2838, 0.5
    %v2841 = vmul.f32 %v2839, 0.5
    %v2842 = vadd.f32 %v2840, 0.5
    %v2843 = vadd.f32 %v2841, 0.5
    %v2844 = vmul.f32 %v2830, 0.5
    %v2845 = vmul.f32 %v2831, 0.5
    %v2846 = vtanh.pop %v2844
    %v2847 = vtanh.pop %v2845
    %v2848 = vmul.f32 %v2846, 0.5
    %v2849 = vmul.f32 %v2847, 0.5
    %v2850 = vadd.f32 %v2848, 0.5
    %v2851 = vadd.f32 %v2849, 0.5
    %v2852 = vtanh.pop %v2832
    %v2853 = vtanh.pop %v2833
    %v2854 = vmul.f32 %v2834, 0.5
    %v2855 = vmul.f32 %v2835, 0.5
    %v2856 = vtanh.pop %v2854
    %v2857 = vtanh.pop %v2855
    %v2858 = vmul.f32 %v2856, 0.5
    %v2859 = vmul.f32 %v2857, 0.5
    %v2860 = vadd.f32 %v2858, 0.5
    %v2861 = vadd.f32 %v2859, 0.5
    %v2862 = vmul.f32 %v2850, %v2601
    %v2863 = vmul.f32 %v2851, %v2602
    %v2864 = vmul.f32 %v2842, %v2852
    %v2865 = vmul.f32 %v2843, %v2853
    %v2866 = vadd.f32 %v2862, %v2864
    %v2867 = vadd.f32 %v2863, %v2865
    %v2868 = vtanh.pop %v2866
    %v2869 = vtanh.pop %v2867
    %v2870 = vmul.f32 %v2860, %v2868
    %v2871 = vmul.f32 %v2861, %v2869
    %s2872 = smul.u32 6, 8
    %s2873 = smul.addr %s2872, 8
    %s2874 = scalar_lea.vmem [#allocation2], %s2873
    %v2875 = vld [vmem:[%s2874] sm:$0xff]
    %v2876 = vld [vmem:[%s2874 + $0x8] sm:$0xff]
    %v2877 = vld [vmem:[%s2874 + $0x10] sm:$0xff]
    %v2878 = vld [vmem:[%s2874 + $0x18] sm:$0xff]
    %v2879 = vld [vmem:[%s2874 + $0x20] sm:$0xff]
    %v2880 = vld [vmem:[%s2874 + $0x28] sm:$0xff]
    %v2881 = vld [vmem:[%s2874 + $0x30] sm:$0xff]
    %v2882 = vld [vmem:[%s2874 + $0x38] sm:$0xff]
    %v2883 = vpack.c.bf16 %v2870, %v2870
    %v2884 = vpack.c.bf16 %v2871, %v2871
    %2885 = vmatpush.bf16.msra.mxu0 %v1095
    %2886 = vmatpush.bf16.msra.mxu0 %v1087
    %2887 = vmatpush.bf16.msra.mxu0 %v1079
    %2888 = vmatpush.bf16.msra.mxu0 %v1071
    %2889 = vmatpush.bf16.msra.mxu0 %v1063
    %2890 = vmatpush.bf16.msra.mxu0 %v1055
    %2891 = vmatpush.bf16.msra.mxu0 %v1047
    %2892 = vmatpush.bf16.msra.mxu0 %v1039
    %2893 = vmatmul.bf16.gmra.mxu0 %v2883
    %v2894 = vpop.f32.mrf.mxu0
    %v2895 = vadd.f32 0.0, %v2894
    %v2896 = vpop.f32.mrf.mxu0
    %2897 = vdwg.mxu0
    %2898 = vmatpush.bf16.msra.mxu0 %v1159
    %2899 = vmatpush.bf16.msra.mxu0 %v1151
    %2900 = vmatpush.bf16.msra.mxu0 %v1143
    %2901 = vmatpush.bf16.msra.mxu0 %v1135
    %2902 = vmatpush.bf16.msra.mxu0 %v1127
    %2903 = vmatpush.bf16.msra.mxu0 %v1119
    %2904 = vmatpush.bf16.msra.mxu0 %v1111
    %2905 = vmatpush.bf16.msra.mxu0 %v1103
    %2906 = vmatmul.bf16.gmra.mxu0 %v2884
    %v2907 = vpop.f32.mrf.mxu0
    %v2908 = vadd.f32 %v2895, %v2907
    %v2909 = vpop.f32.mrf.mxu0
    %2910 = vdwg.mxu0
    %2911 = vmatpush.bf16.msra.mxu0 %v1096
    %2912 = vmatpush.bf16.msra.mxu0 %v1088
    %2913 = vmatpush.bf16.msra.mxu0 %v1080
    %2914 = vmatpush.bf16.msra.mxu0 %v1072
    %2915 = vmatpush.bf16.msra.mxu0 %v1064
    %2916 = vmatpush.bf16.msra.mxu0 %v1056
    %2917 = vmatpush.bf16.msra.mxu0 %v1048
    %2918 = vmatpush.bf16.msra.mxu0 %v1040
    %2919 = vmatmul.bf16.gmra.mxu0 %v2883
    %v2920 = vpop.f32.mrf.mxu0
    %v2921 = vadd.f32 0.0, %v2920
    %v2922 = vpop.f32.mrf.mxu0
    %2923 = vdwg.mxu0
    %2924 = vmatpush.bf16.msra.mxu0 %v1160
    %2925 = vmatpush.bf16.msra.mxu0 %v1152
    %2926 = vmatpush.bf16.msra.mxu0 %v1144
    %2927 = vmatpush.bf16.msra.mxu0 %v1136
    %2928 = vmatpush.bf16.msra.mxu0 %v1128
    %2929 = vmatpush.bf16.msra.mxu0 %v1120
    %2930 = vmatpush.bf16.msra.mxu0 %v1112
    %2931 = vmatpush.bf16.msra.mxu0 %v1104
    %2932 = vmatmul.bf16.gmra.mxu0 %v2884
    %v2933 = vpop.f32.mrf.mxu0
    %v2934 = vadd.f32 %v2921, %v2933
    %v2935 = vpop.f32.mrf.mxu0
    %2936 = vdwg.mxu0
    %2937 = vmatpush.bf16.msra.mxu0 %v1097
    %2938 = vmatpush.bf16.msra.mxu0 %v1089
    %2939 = vmatpush.bf16.msra.mxu0 %v1081
    %2940 = vmatpush.bf16.msra.mxu0 %v1073
    %2941 = vmatpush.bf16.msra.mxu0 %v1065
    %2942 = vmatpush.bf16.msra.mxu0 %v1057
    %2943 = vmatpush.bf16.msra.mxu0 %v1049
    %2944 = vmatpush.bf16.msra.mxu0 %v1041
    %2945 = vmatmul.bf16.gmra.mxu0 %v2883
    %v2946 = vpop.f32.mrf.mxu0
    %v2947 = vadd.f32 0.0, %v2946
    %v2948 = vpop.f32.mrf.mxu0
    %2949 = vdwg.mxu0
    %2950 = vmatpush.bf16.msra.mxu0 %v1161
    %2951 = vmatpush.bf16.msra.mxu0 %v1153
    %2952 = vmatpush.bf16.msra.mxu0 %v1145
    %2953 = vmatpush.bf16.msra.mxu0 %v1137
    %2954 = vmatpush.bf16.msra.mxu0 %v1129
    %2955 = vmatpush.bf16.msra.mxu0 %v1121
    %2956 = vmatpush.bf16.msra.mxu0 %v1113
    %2957 = vmatpush.bf16.msra.mxu0 %v1105
    %2958 = vmatmul.bf16.gmra.mxu0 %v2884
    %v2959 = vpop.f32.mrf.mxu0
    %v2960 = vadd.f32 %v2947, %v2959
    %v2961 = vpop.f32.mrf.mxu0
    %2962 = vdwg.mxu0
    %2963 = vmatpush.bf16.msra.mxu0 %v1098
    %2964 = vmatpush.bf16.msra.mxu0 %v1090
    %2965 = vmatpush.bf16.msra.mxu0 %v1082
    %2966 = vmatpush.bf16.msra.mxu0 %v1074
    %2967 = vmatpush.bf16.msra.mxu0 %v1066
    %2968 = vmatpush.bf16.msra.mxu0 %v1058
    %2969 = vmatpush.bf16.msra.mxu0 %v1050
    %2970 = vmatpush.bf16.msra.mxu0 %v1042
    %2971 = vmatmul.bf16.gmra.mxu0 %v2883
    %v2972 = vpop.f32.mrf.mxu0
    %v2973 = vadd.f32 0.0, %v2972
    %v2974 = vpop.f32.mrf.mxu0
    %2975 = vdwg.mxu0
    %2976 = vmatpush.bf16.msra.mxu0 %v1162
    %2977 = vmatpush.bf16.msra.mxu0 %v1154
    %2978 = vmatpush.bf16.msra.mxu0 %v1146
    %2979 = vmatpush.bf16.msra.mxu0 %v1138
    %2980 = vmatpush.bf16.msra.mxu0 %v1130
    %2981 = vmatpush.bf16.msra.mxu0 %v1122
    %2982 = vmatpush.bf16.msra.mxu0 %v1114
    %2983 = vmatpush.bf16.msra.mxu0 %v1106
    %2984 = vmatmul.bf16.gmra.mxu0 %v2884
    %v2985 = vpop.f32.mrf.mxu0
    %v2986 = vadd.f32 %v2973, %v2985
    %v2987 = vpop.f32.mrf.mxu0
    %2988 = vdwg.mxu0
    %2989 = vmatpush.bf16.msra.mxu0 %v1099
    %2990 = vmatpush.bf16.msra.mxu0 %v1091
    %2991 = vmatpush.bf16.msra.mxu0 %v1083
    %2992 = vmatpush.bf16.msra.mxu0 %v1075
    %2993 = vmatpush.bf16.msra.mxu0 %v1067
    %2994 = vmatpush.bf16.msra.mxu0 %v1059
    %2995 = vmatpush.bf16.msra.mxu0 %v1051
    %2996 = vmatpush.bf16.msra.mxu0 %v1043
    %2997 = vmatmul.bf16.gmra.mxu0 %v2883
    %v2998 = vpop.f32.mrf.mxu0
    %v2999 = vadd.f32 0.0, %v2998
    %v3000 = vpop.f32.mrf.mxu0
    %3001 = vdwg.mxu0
    %3002 = vmatpush.bf16.msra.mxu0 %v1163
    %3003 = vmatpush.bf16.msra.mxu0 %v1155
    %3004 = vmatpush.bf16.msra.mxu0 %v1147
    %3005 = vmatpush.bf16.msra.mxu0 %v1139
    %3006 = vmatpush.bf16.msra.mxu0 %v1131
    %3007 = vmatpush.bf16.msra.mxu0 %v1123
    %3008 = vmatpush.bf16.msra.mxu0 %v1115
    %3009 = vmatpush.bf16.msra.mxu0 %v1107
    %3010 = vmatmul.bf16.gmra.mxu0 %v2884
    %v3011 = vpop.f32.mrf.mxu0
    %v3012 = vadd.f32 %v2999, %v3011
    %v3013 = vpop.f32.mrf.mxu0
    %3014 = vdwg.mxu0
    %3015 = vmatpush.bf16.msra.mxu0 %v1100
    %3016 = vmatpush.bf16.msra.mxu0 %v1092
    %3017 = vmatpush.bf16.msra.mxu0 %v1084
    %3018 = vmatpush.bf16.msra.mxu0 %v1076
    %3019 = vmatpush.bf16.msra.mxu0 %v1068
    %3020 = vmatpush.bf16.msra.mxu0 %v1060
    %3021 = vmatpush.bf16.msra.mxu0 %v1052
    %3022 = vmatpush.bf16.msra.mxu0 %v1044
    %3023 = vmatmul.bf16.gmra.mxu0 %v2883
    %v3024 = vpop.f32.mrf.mxu0
    %v3025 = vadd.f32 0.0, %v3024
    %v3026 = vpop.f32.mrf.mxu0
    %3027 = vdwg.mxu0
    %3028 = vmatpush.bf16.msra.mxu0 %v1164
    %3029 = vmatpush.bf16.msra.mxu0 %v1156
    %3030 = vmatpush.bf16.msra.mxu0 %v1148
    %3031 = vmatpush.bf16.msra.mxu0 %v1140
    %3032 = vmatpush.bf16.msra.mxu0 %v1132
    %3033 = vmatpush.bf16.msra.mxu0 %v1124
    %3034 = vmatpush.bf16.msra.mxu0 %v1116
    %3035 = vmatpush.bf16.msra.mxu0 %v1108
    %3036 = vmatmul.bf16.gmra.mxu0 %v2884
    %v3037 = vpop.f32.mrf.mxu0
    %v3038 = vadd.f32 %v3025, %v3037
    %v3039 = vpop.f32.mrf.mxu0
    %3040 = vdwg.mxu0
    %3041 = vmatpush.bf16.msra.mxu0 %v1101
    %3042 = vmatpush.bf16.msra.mxu0 %v1093
    %3043 = vmatpush.bf16.msra.mxu0 %v1085
    %3044 = vmatpush.bf16.msra.mxu0 %v1077
    %3045 = vmatpush.bf16.msra.mxu0 %v1069
    %3046 = vmatpush.bf16.msra.mxu0 %v1061
    %3047 = vmatpush.bf16.msra.mxu0 %v1053
    %3048 = vmatpush.bf16.msra.mxu0 %v1045
    %3049 = vmatmul.bf16.gmra.mxu0 %v2883
    %v3050 = vpop.f32.mrf.mxu0
    %v3051 = vadd.f32 0.0, %v3050
    %v3052 = vpop.f32.mrf.mxu0
    %3053 = vdwg.mxu0
    %3054 = vmatpush.bf16.msra.mxu0 %v1165
    %3055 = vmatpush.bf16.msra.mxu0 %v1157
    %3056 = vmatpush.bf16.msra.mxu0 %v1149
    %3057 = vmatpush.bf16.msra.mxu0 %v1141
    %3058 = vmatpush.bf16.msra.mxu0 %v1133
    %3059 = vmatpush.bf16.msra.mxu0 %v1125
    %3060 = vmatpush.bf16.msra.mxu0 %v1117
    %3061 = vmatpush.bf16.msra.mxu0 %v1109
    %3062 = vmatmul.bf16.gmra.mxu0 %v2884
    %v3063 = vpop.f32.mrf.mxu0
    %v3064 = vadd.f32 %v3051, %v3063
    %v3065 = vpop.f32.mrf.mxu0
    %3066 = vdwg.mxu0
    %3067 = vmatpush.bf16.msra.mxu0 %v1102
    %3068 = vmatpush.bf16.msra.mxu0 %v1094
    %3069 = vmatpush.bf16.msra.mxu0 %v1086
    %3070 = vmatpush.bf16.msra.mxu0 %v1078
    %3071 = vmatpush.bf16.msra.mxu0 %v1070
    %3072 = vmatpush.bf16.msra.mxu0 %v1062
    %3073 = vmatpush.bf16.msra.mxu0 %v1054
    %3074 = vmatpush.bf16.msra.mxu0 %v1046
    %3075 = vmatmul.bf16.gmra.mxu0 %v2883
    %v3076 = vpop.f32.mrf.mxu0
    %v3077 = vadd.f32 0.0, %v3076
    %v3078 = vpop.f32.mrf.mxu0
    %3079 = vdwg.mxu0
    %3080 = vmatpush.bf16.msra.mxu0 %v1166
    %3081 = vmatpush.bf16.msra.mxu0 %v1158
    %3082 = vmatpush.bf16.msra.mxu0 %v1150
    %3083 = vmatpush.bf16.msra.mxu0 %v1142
    %3084 = vmatpush.bf16.msra.mxu0 %v1134
    %3085 = vmatpush.bf16.msra.mxu0 %v1126
    %3086 = vmatpush.bf16.msra.mxu0 %v1118
    %3087 = vmatpush.bf16.msra.mxu0 %v1110
    %3088 = vmatmul.bf16.gmra.mxu0 %v2884
    %v3089 = vpop.f32.mrf.mxu0
    %v3090 = vadd.f32 %v3077, %v3089
    %v3091 = vpop.f32.mrf.mxu0
    %3092 = vdwg.mxu0
    %v3093 = vadd.f32 %v2875, %v2908
    %v3094 = vadd.f32 %v2876, %v2934
    %v3095 = vadd.f32 %v2877, %v2960
    %v3096 = vadd.f32 %v2878, %v2986
    %v3097 = vadd.f32 %v2879, %v3012
    %v3098 = vadd.f32 %v2880, %v3038
    %v3099 = vadd.f32 %v2881, %v3064
    %v3100 = vadd.f32 %v2882, %v3090
    %v3101 = vmul.f32 %v3093, 0.5
    %v3102 = vmul.f32 %v3094, 0.5
    %v3103 = vtanh.pop %v3101
    %v3104 = vtanh.pop %v3102
    %v3105 = vmul.f32 %v3103, 0.5
    %v3106 = vmul.f32 %v3104, 0.5
    %v3107 = vadd.f32 %v3105, 0.5
    %v3108 = vadd.f32 %v3106, 0.5
    %v3109 = vmul.f32 %v3095, 0.5
    %v3110 = vmul.f32 %v3096, 0.5
    %v3111 = vtanh.pop %v3109
    %v3112 = vtanh.pop %v3110
    %v3113 = vmul.f32 %v3111, 0.5
    %v3114 = vmul.f32 %v3112, 0.5
    %v3115 = vadd.f32 %v3113, 0.5
    %v3116 = vadd.f32 %v3114, 0.5
    %v3117 = vtanh.pop %v3097
    %v3118 = vtanh.pop %v3098
    %v3119 = vmul.f32 %v3099, 0.5
    %v3120 = vmul.f32 %v3100, 0.5
    %v3121 = vtanh.pop %v3119
    %v3122 = vtanh.pop %v3120
    %v3123 = vmul.f32 %v3121, 0.5
    %v3124 = vmul.f32 %v3122, 0.5
    %v3125 = vadd.f32 %v3123, 0.5
    %v3126 = vadd.f32 %v3124, 0.5
    %v3127 = vmul.f32 %v3115, %v2866
    %v3128 = vmul.f32 %v3116, %v2867
    %v3129 = vmul.f32 %v3107, %v3117
    %v3130 = vmul.f32 %v3108, %v3118
    %v3131 = vadd.f32 %v3127, %v3129
    %v3132 = vadd.f32 %v3128, %v3130
    %v3133 = vtanh.pop %v3131
    %v3134 = vtanh.pop %v3132
    %v3135 = vmul.f32 %v3125, %v3133
    %v3136 = vmul.f32 %v3126, %v3134
    %s3137 = smul.u32 7, 8
    %s3138 = smul.addr %s3137, 8
    %s3139 = scalar_lea.vmem [#allocation2], %s3138
    %v3140 = vld [vmem:[%s3139] sm:$0xff]
    %v3141 = vld [vmem:[%s3139 + $0x8] sm:$0xff]
    %v3142 = vld [vmem:[%s3139 + $0x10] sm:$0xff]
    %v3143 = vld [vmem:[%s3139 + $0x18] sm:$0xff]
    %v3144 = vld [vmem:[%s3139 + $0x20] sm:$0xff]
    %v3145 = vld [vmem:[%s3139 + $0x28] sm:$0xff]
    %v3146 = vld [vmem:[%s3139 + $0x30] sm:$0xff]
    %v3147 = vld [vmem:[%s3139 + $0x38] sm:$0xff]
    %v3148 = vpack.c.bf16 %v3135, %v3135
    %v3149 = vpack.c.bf16 %v3136, %v3136
    %3150 = vmatpush.bf16.msra.mxu0 %v1095
    %3151 = vmatpush.bf16.msra.mxu0 %v1087
    %3152 = vmatpush.bf16.msra.mxu0 %v1079
    %3153 = vmatpush.bf16.msra.mxu0 %v1071
    %3154 = vmatpush.bf16.msra.mxu0 %v1063
    %3155 = vmatpush.bf16.msra.mxu0 %v1055
    %3156 = vmatpush.bf16.msra.mxu0 %v1047
    %3157 = vmatpush.bf16.msra.mxu0 %v1039
    %3158 = vmatmul.bf16.gmra.mxu0 %v3148
    %v3159 = vpop.f32.mrf.mxu0
    %v3160 = vadd.f32 0.0, %v3159
    %v3161 = vpop.f32.mrf.mxu0
    %3162 = vdwg.mxu0
    %3163 = vmatpush.bf16.msra.mxu0 %v1159
    %3164 = vmatpush.bf16.msra.mxu0 %v1151
    %3165 = vmatpush.bf16.msra.mxu0 %v1143
    %3166 = vmatpush.bf16.msra.mxu0 %v1135
    %3167 = vmatpush.bf16.msra.mxu0 %v1127
    %3168 = vmatpush.bf16.msra.mxu0 %v1119
    %3169 = vmatpush.bf16.msra.mxu0 %v1111
    %3170 = vmatpush.bf16.msra.mxu0 %v1103
    %3171 = vmatmul.bf16.gmra.mxu0 %v3149
    %v3172 = vpop.f32.mrf.mxu0
    %v3173 = vadd.f32 %v3160, %v3172
    %v3174 = vpop.f32.mrf.mxu0
    %3175 = vdwg.mxu0
    %3176 = vmatpush.bf16.msra.mxu0 %v1096
    %3177 = vmatpush.bf16.msra.mxu0 %v1088
    %3178 = vmatpush.bf16.msra.mxu0 %v1080
    %3179 = vmatpush.bf16.msra.mxu0 %v1072
    %3180 = vmatpush.bf16.msra.mxu0 %v1064
    %3181 = vmatpush.bf16.msra.mxu0 %v1056
    %3182 = vmatpush.bf16.msra.mxu0 %v1048
    %3183 = vmatpush.bf16.msra.mxu0 %v1040
    %3184 = vmatmul.bf16.gmra.mxu0 %v3148
    %v3185 = vpop.f32.mrf.mxu0
    %v3186 = vadd.f32 0.0, %v3185
    %v3187 = vpop.f32.mrf.mxu0
    %3188 = vdwg.mxu0
    %3189 = vmatpush.bf16.msra.mxu0 %v1160
    %3190 = vmatpush.bf16.msra.mxu0 %v1152
    %3191 = vmatpush.bf16.msra.mxu0 %v1144
    %3192 = vmatpush.bf16.msra.mxu0 %v1136
    %3193 = vmatpush.bf16.msra.mxu0 %v1128
    %3194 = vmatpush.bf16.msra.mxu0 %v1120
    %3195 = vmatpush.bf16.msra.mxu0 %v1112
    %3196 = vmatpush.bf16.msra.mxu0 %v1104
    %3197 = vmatmul.bf16.gmra.mxu0 %v3149
    %v3198 = vpop.f32.mrf.mxu0
    %v3199 = vadd.f32 %v3186, %v3198
    %v3200 = vpop.f32.mrf.mxu0
    %3201 = vdwg.mxu0
    %3202 = vmatpush.bf16.msra.mxu0 %v1097
    %3203 = vmatpush.bf16.msra.mxu0 %v1089
    %3204 = vmatpush.bf16.msra.mxu0 %v1081
    %3205 = vmatpush.bf16.msra.mxu0 %v1073
    %3206 = vmatpush.bf16.msra.mxu0 %v1065
    %3207 = vmatpush.bf16.msra.mxu0 %v1057
    %3208 = vmatpush.bf16.msra.mxu0 %v1049
    %3209 = vmatpush.bf16.msra.mxu0 %v1041
    %3210 = vmatmul.bf16.gmra.mxu0 %v3148
    %v3211 = vpop.f32.mrf.mxu0
    %v3212 = vadd.f32 0.0, %v3211
    %v3213 = vpop.f32.mrf.mxu0
    %3214 = vdwg.mxu0
    %3215 = vmatpush.bf16.msra.mxu0 %v1161
    %3216 = vmatpush.bf16.msra.mxu0 %v1153
    %3217 = vmatpush.bf16.msra.mxu0 %v1145
    %3218 = vmatpush.bf16.msra.mxu0 %v1137
    %3219 = vmatpush.bf16.msra.mxu0 %v1129
    %3220 = vmatpush.bf16.msra.mxu0 %v1121
    %3221 = vmatpush.bf16.msra.mxu0 %v1113
    %3222 = vmatpush.bf16.msra.mxu0 %v1105
    %3223 = vmatmul.bf16.gmra.mxu0 %v3149
    %v3224 = vpop.f32.mrf.mxu0
    %v3225 = vadd.f32 %v3212, %v3224
    %v3226 = vpop.f32.mrf.mxu0
    %3227 = vdwg.mxu0
    %3228 = vmatpush.bf16.msra.mxu0 %v1098
    %3229 = vmatpush.bf16.msra.mxu0 %v1090
    %3230 = vmatpush.bf16.msra.mxu0 %v1082
    %3231 = vmatpush.bf16.msra.mxu0 %v1074
    %3232 = vmatpush.bf16.msra.mxu0 %v1066
    %3233 = vmatpush.bf16.msra.mxu0 %v1058
    %3234 = vmatpush.bf16.msra.mxu0 %v1050
    %3235 = vmatpush.bf16.msra.mxu0 %v1042
    %3236 = vmatmul.bf16.gmra.mxu0 %v3148
    %v3237 = vpop.f32.mrf.mxu0
    %v3238 = vadd.f32 0.0, %v3237
    %v3239 = vpop.f32.mrf.mxu0
    %3240 = vdwg.mxu0
    %3241 = vmatpush.bf16.msra.mxu0 %v1162
    %3242 = vmatpush.bf16.msra.mxu0 %v1154
    %3243 = vmatpush.bf16.msra.mxu0 %v1146
    %3244 = vmatpush.bf16.msra.mxu0 %v1138
    %3245 = vmatpush.bf16.msra.mxu0 %v1130
    %3246 = vmatpush.bf16.msra.mxu0 %v1122
    %3247 = vmatpush.bf16.msra.mxu0 %v1114
    %3248 = vmatpush.bf16.msra.mxu0 %v1106
    %3249 = vmatmul.bf16.gmra.mxu0 %v3149
    %v3250 = vpop.f32.mrf.mxu0
    %v3251 = vadd.f32 %v3238, %v3250
    %v3252 = vpop.f32.mrf.mxu0
    %3253 = vdwg.mxu0
    %3254 = vmatpush.bf16.msra.mxu0 %v1099
    %3255 = vmatpush.bf16.msra.mxu0 %v1091
    %3256 = vmatpush.bf16.msra.mxu0 %v1083
    %3257 = vmatpush.bf16.msra.mxu0 %v1075
    %3258 = vmatpush.bf16.msra.mxu0 %v1067
    %3259 = vmatpush.bf16.msra.mxu0 %v1059
    %3260 = vmatpush.bf16.msra.mxu0 %v1051
    %3261 = vmatpush.bf16.msra.mxu0 %v1043
    %3262 = vmatmul.bf16.gmra.mxu0 %v3148
    %v3263 = vpop.f32.mrf.mxu0
    %v3264 = vadd.f32 0.0, %v3263
    %v3265 = vpop.f32.mrf.mxu0
    %3266 = vdwg.mxu0
    %3267 = vmatpush.bf16.msra.mxu0 %v1163
    %3268 = vmatpush.bf16.msra.mxu0 %v1155
    %3269 = vmatpush.bf16.msra.mxu0 %v1147
    %3270 = vmatpush.bf16.msra.mxu0 %v1139
    %3271 = vmatpush.bf16.msra.mxu0 %v1131
    %3272 = vmatpush.bf16.msra.mxu0 %v1123
    %3273 = vmatpush.bf16.msra.mxu0 %v1115
    %3274 = vmatpush.bf16.msra.mxu0 %v1107
    %3275 = vmatmul.bf16.gmra.mxu0 %v3149
    %v3276 = vpop.f32.mrf.mxu0
    %v3277 = vadd.f32 %v3264, %v3276
    %v3278 = vpop.f32.mrf.mxu0
    %3279 = vdwg.mxu0
    %3280 = vmatpush.bf16.msra.mxu0 %v1100
    %3281 = vmatpush.bf16.msra.mxu0 %v1092
    %3282 = vmatpush.bf16.msra.mxu0 %v1084
    %3283 = vmatpush.bf16.msra.mxu0 %v1076
    %3284 = vmatpush.bf16.msra.mxu0 %v1068
    %3285 = vmatpush.bf16.msra.mxu0 %v1060
    %3286 = vmatpush.bf16.msra.mxu0 %v1052
    %3287 = vmatpush.bf16.msra.mxu0 %v1044
    %3288 = vmatmul.bf16.gmra.mxu0 %v3148
    %v3289 = vpop.f32.mrf.mxu0
    %v3290 = vadd.f32 0.0, %v3289
    %v3291 = vpop.f32.mrf.mxu0
    %3292 = vdwg.mxu0
    %3293 = vmatpush.bf16.msra.mxu0 %v1164
    %3294 = vmatpush.bf16.msra.mxu0 %v1156
    %3295 = vmatpush.bf16.msra.mxu0 %v1148
    %3296 = vmatpush.bf16.msra.mxu0 %v1140
    %3297 = vmatpush.bf16.msra.mxu0 %v1132
    %3298 = vmatpush.bf16.msra.mxu0 %v1124
    %3299 = vmatpush.bf16.msra.mxu0 %v1116
    %3300 = vmatpush.bf16.msra.mxu0 %v1108
    %3301 = vmatmul.bf16.gmra.mxu0 %v3149
    %v3302 = vpop.f32.mrf.mxu0
    %v3303 = vadd.f32 %v3290, %v3302
    %v3304 = vpop.f32.mrf.mxu0
    %3305 = vdwg.mxu0
    %3306 = vmatpush.bf16.msra.mxu0 %v1101
    %3307 = vmatpush.bf16.msra.mxu0 %v1093
    %3308 = vmatpush.bf16.msra.mxu0 %v1085
    %3309 = vmatpush.bf16.msra.mxu0 %v1077
    %3310 = vmatpush.bf16.msra.mxu0 %v1069
    %3311 = vmatpush.bf16.msra.mxu0 %v1061
    %3312 = vmatpush.bf16.msra.mxu0 %v1053
    %3313 = vmatpush.bf16.msra.mxu0 %v1045
    %3314 = vmatmul.bf16.gmra.mxu0 %v3148
    %v3315 = vpop.f32.mrf.mxu0
    %v3316 = vadd.f32 0.0, %v3315
    %v3317 = vpop.f32.mrf.mxu0
    %3318 = vdwg.mxu0
    %3319 = vmatpush.bf16.msra.mxu0 %v1165
    %3320 = vmatpush.bf16.msra.mxu0 %v1157
    %3321 = vmatpush.bf16.msra.mxu0 %v1149
    %3322 = vmatpush.bf16.msra.mxu0 %v1141
    %3323 = vmatpush.bf16.msra.mxu0 %v1133
    %3324 = vmatpush.bf16.msra.mxu0 %v1125
    %3325 = vmatpush.bf16.msra.mxu0 %v1117
    %3326 = vmatpush.bf16.msra.mxu0 %v1109
    %3327 = vmatmul.bf16.gmra.mxu0 %v3149
    %v3328 = vpop.f32.mrf.mxu0
    %v3329 = vadd.f32 %v3316, %v3328
    %v3330 = vpop.f32.mrf.mxu0
    %3331 = vdwg.mxu0
    %3332 = vmatpush.bf16.msra.mxu0 %v1102
    %3333 = vmatpush.bf16.msra.mxu0 %v1094
    %3334 = vmatpush.bf16.msra.mxu0 %v1086
    %3335 = vmatpush.bf16.msra.mxu0 %v1078
    %3336 = vmatpush.bf16.msra.mxu0 %v1070
    %3337 = vmatpush.bf16.msra.mxu0 %v1062
    %3338 = vmatpush.bf16.msra.mxu0 %v1054
    %3339 = vmatpush.bf16.msra.mxu0 %v1046
    %3340 = vmatmul.bf16.gmra.mxu0 %v3148
    %v3341 = vpop.f32.mrf.mxu0
    %v3342 = vadd.f32 0.0, %v3341
    %v3343 = vpop.f32.mrf.mxu0
    %3344 = vdwg.mxu0
    %3345 = vmatpush.bf16.msra.mxu0 %v1166
    %3346 = vmatpush.bf16.msra.mxu0 %v1158
    %3347 = vmatpush.bf16.msra.mxu0 %v1150
    %3348 = vmatpush.bf16.msra.mxu0 %v1142
    %3349 = vmatpush.bf16.msra.mxu0 %v1134
    %3350 = vmatpush.bf16.msra.mxu0 %v1126
    %3351 = vmatpush.bf16.msra.mxu0 %v1118
    %3352 = vmatpush.bf16.msra.mxu0 %v1110
    %3353 = vmatmul.bf16.gmra.mxu0 %v3149
    %v3354 = vpop.f32.mrf.mxu0
    %v3355 = vadd.f32 %v3342, %v3354
    %v3356 = vpop.f32.mrf.mxu0
    %3357 = vdwg.mxu0
    %v3358 = vadd.f32 %v3140, %v3173
    %v3359 = vadd.f32 %v3141, %v3199
    %v3360 = vadd.f32 %v3142, %v3225
    %v3361 = vadd.f32 %v3143, %v3251
    %v3362 = vadd.f32 %v3144, %v3277
    %v3363 = vadd.f32 %v3145, %v3303
    %v3364 = vadd.f32 %v3146, %v3329
    %v3365 = vadd.f32 %v3147, %v3355
    %v3366 = vmul.f32 %v3358, 0.5
    %v3367 = vmul.f32 %v3359, 0.5
    %v3368 = vtanh.pop %v3366
    %v3369 = vtanh.pop %v3367
    %v3370 = vmul.f32 %v3368, 0.5
    %v3371 = vmul.f32 %v3369, 0.5
    %v3372 = vadd.f32 %v3370, 0.5
    %v3373 = vadd.f32 %v3371, 0.5
    %v3374 = vmul.f32 %v3360, 0.5
    %v3375 = vmul.f32 %v3361, 0.5
    %v3376 = vtanh.pop %v3374
    %v3377 = vtanh.pop %v3375
    %v3378 = vmul.f32 %v3376, 0.5
    %v3379 = vmul.f32 %v3377, 0.5
    %v3380 = vadd.f32 %v3378, 0.5
    %v3381 = vadd.f32 %v3379, 0.5
    %v3382 = vtanh.pop %v3362
    %v3383 = vtanh.pop %v3363
    %v3384 = vmul.f32 %v3364, 0.5
    %v3385 = vmul.f32 %v3365, 0.5
    %v3386 = vtanh.pop %v3384
    %v3387 = vtanh.pop %v3385
    %v3388 = vmul.f32 %v3386, 0.5
    %v3389 = vmul.f32 %v3387, 0.5
    %v3390 = vadd.f32 %v3388, 0.5
    %v3391 = vadd.f32 %v3389, 0.5
    %v3392 = vmul.f32 %v3380, %v3131
    %v3393 = vmul.f32 %v3381, %v3132
    %v3394 = vmul.f32 %v3372, %v3382
    %v3395 = vmul.f32 %v3373, %v3383
    %v3396 = vadd.f32 %v3392, %v3394
    %v3397 = vadd.f32 %v3393, %v3395
    %v3398 = vtanh.pop %v3396
    %v3399 = vtanh.pop %v3397
    %v3400 = vmul.f32 %v3390, %v3398
    %v3401 = vmul.f32 %v3391, %v3399
    %3402 = vst [vmem:[#allocation3] sm:$0xff] %v3400
    %3403 = vst [vmem:[#allocation3 + $0x8] sm:$0xff] %v3401
    %3404 = vst [vmem:[#allocation4] sm:$0xff] %v3396
    %3405 = vst [vmem:[#allocation4 + $0x8] sm:$0xff] %v3397
    // Predicated region
    $region30: #{tpu_custom_call.1} parent=1 // pred_check
      %p3406 = pneg %p51
    $region31: #{tpu_custom_call.1} parent=1 // pred_check_branch
      %3408 = sbr.rel (%p3406) target = $region33
    $region32: #{tpu_custom_call.1} parent=1 // pred_region
      %v3409 = vld [vmem:[#allocation3] sm:$0xff]
      %v3410 = vld [vmem:[#allocation3 + $0x8] sm:$0xff]
      %3411 = vst [vmem:[#allocation10] sm:$0xff] %v3409
      %3412 = vst [vmem:[#allocation10 + $0x8] sm:$0xff] %v3410
    $region33: #{tpu_custom_call.1} parent=1 // pred_fallthru
      _
    // Predicated region
    $region34: #{tpu_custom_call.1} parent=1 // pred_check
      _
    $region35: #{tpu_custom_call.1} parent=1 // pred_check_branch
      %3414 = sbr.rel (0) target = $region37
    $region36: #{tpu_custom_call.1} parent=1 // pred_region
      %3416 = vsyncadd [#allocation7], 0
      %s3418 = sshll.u32 [#allocation10], 4
      %s3419 = int_to_ptr.vmem [resolvable:$true] %s3418
      %s3420 = sshll.u32 %s4, 4
      %s3421 = int_to_ptr.hbm [resolvable:$true] %s3420
      %3423 = dma.vmem_to_hbm [thread:$0]  %s3419, 256, %s3421, [#allocation7]
    $region37: #{tpu_custom_call.1} parent=1 // pred_fallthru
      _
    // Predicated region
    $region38: #{tpu_custom_call.1} parent=1 // pred_check
      _
    $region39: #{tpu_custom_call.1} parent=1 // pred_check_branch
      %3425 = sbr.rel (0) target = $region41
    $region40: #{tpu_custom_call.1} parent=1 // pred_region
      %3427 = dma.done [#allocation7], 256
    $region41: #{tpu_custom_call.1} parent=1 // pred_fallthru
      _
    %3428 = vsyncpa [#allocation6], 1
    %3429 = vsyncpa [#allocation9], 1
    %3430 = vsyncpa [#allocation7], 1

</llo_original>
